<compile_context>
chip_gen: v6e
topology: v6e:2x2x1
jax: 0.10.0
libtpu: 0.0.40
codegen_flags: <defaults>
</compile_context>

<pallas_src>
import functools
import math

import jax
import jax.numpy as jnp
from jax.experimental import pallas as pl
from jax.experimental.pallas import tpu as pltpu

_VMEM_LIMIT = 48 * 1024 * 1024  # safe on all generations (v7x physical = 64 MiB)


# -----------------------------------------------------------------------------
# Feature probes (never allowed to break compilation)
# -----------------------------------------------------------------------------
def _probe_buffered_single():
    """Return pl.Buffered(1) iff single-buffered BlockSpecs lower & run here."""
    try:
        try:
            buf1 = pl.Buffered(1)
        except TypeError:
            buf1 = pl.Buffered(buffer_count=1)
    except Exception:
        return None

    def _k(x_ref, o_ref):
        o_ref[...] = x_ref[...] + 1.0

    try:
        fn = pl.pallas_call(
            _k,
            out_shape=jax.ShapeDtypeStruct((8, 128), jnp.float32),
            grid=(2,),
            in_specs=[pl.BlockSpec((8, 128), lambda i: (0, 0), pipeline_mode=buf1)],
            out_specs=pl.BlockSpec((8, 128), lambda i: (0, 0)),
        )
        jax.block_until_ready(fn(jnp.zeros((8, 128), jnp.float32)))
        return buf1
    except Exception:
        return None


_BUF1 = _probe_buffered_single()


def _supports_bf16_eup():
    """bf16 EUP exp path exists on v6e / v7x, not on v5e and earlier."""
    try:
        kind = jax.devices()[0].device_kind.lower()
    except Exception:
        return False
    return any(tag in kind for tag in ("v6", "v7", "tpu7"))


_BF16_EXP = _supports_bf16_eup()


# -----------------------------------------------------------------------------
# Helpers
# -----------------------------------------------------------------------------
def _layernorm(x, gamma, beta, eps=1e-5):
    """LayerNorm with statistics kept in float32."""
    mu = jnp.mean(x, axis=-1, keepdims=True)
    var = jnp.mean((x - mu) ** 2, axis=-1, keepdims=True)
    return (x - mu) * jax.lax.rsqrt(var + eps) * gamma + beta


def _block_spec(shape, index_map, *, single_buffer=False):
    """BlockSpec; single-buffered (pl.Buffered(1)) when requested & supported."""
    if single_buffer and _BUF1 is not None:
        return pl.BlockSpec(shape, index_map, pipeline_mode=_BUF1)
    return pl.BlockSpec(shape, index_map)


def _const_spec(shape):
    """Grid-constant (weight) block: constant index map, single-buffered."""
    nd = len(shape)
    return _block_spec(shape, lambda *_, _nd=nd: (0,) * _nd, single_buffer=True)


# -----------------------------------------------------------------------------
# Pallas kernels
# -----------------------------------------------------------------------------
def qkv_proj_kernel(x_ref, g_ref, b_ref, wqkv_ref, bqkv_ref,
                    q_ref, k_ref, v_ref, *, d_model, num_heads):
    """LN1 + QKV projection, computed once per (batch, seq-tile).

    Outputs bf16 q (with 1/sqrt(dh) folded in), k, v — fixes the per-q-tile
    K/V recomputation of the previous version.
    """
    D = d_model
    dh = D // num_heads
    scale = 1.0 / math.sqrt(dh)
    bf16 = jnp.bfloat16

    xn = _layernorm(x_ref[0], g_ref[0], b_ref[0]).astype(bf16)
    qkv = jnp.dot(xn, wqkv_ref[...], preferred_element_type=jnp.float32) + bqkv_ref[0]
    q_ref[0] = (qkv[:, 0:D] * scale).astype(bf16)
    k_ref[0] = qkv[:, D:2 * D].astype(bf16)
    v_ref[0] = qkv[:, 2 * D:3 * D].astype(bf16)


def attention_kernel(x_ref, q_ref, k_ref, v_ref, wo_ref, bo_ref, out_ref,
                     m_scr, l_scr, acc_scr,
                     *, num_heads, d_model, q_tile, bf16_exp):
    """Flash attention (online softmax) + output projection + residual.

    Grid = (batch, q-tile).  K/V are full-sequence bf16 VMEM blocks (DMA'd once
    per batch), fully-masked KV tiles are skipped via pl.loop(0, qi+1), and the
    causal mask is applied only on the diagonal tile.
    """
    H, D, TQ = num_heads, d_model, q_tile
    TKV = TQ
    dh = D // H
    bf16 = jnp.bfloat16

    qi = pl.program_id(1)
    q = q_ref[0].reshape(TQ, H, dh)                     # bf16, already scaled

    m_scr[...] = jnp.full_like(m_scr, -jnp.inf)
    l_scr[...] = jnp.zeros_like(l_scr)
    acc_scr[...] = jnp.zeros_like(acc_scr)

    # Loop-invariant triangular mask for the diagonal tile (q_start == kv_start).
    row = jax.lax.broadcasted_iota(jnp.int32, (TQ, TKV), 0)
    col = jax.lax.broadcasted_iota(jnp.int32, (TQ, TKV), 1)
    tri = row >= col

    @pl.loop(0, qi + 1)                                  # causal skip of later tiles
    def _(kvi):
        kv_start = pl.multiple_of(kvi * TKV, TKV)
        k = k_ref[0, pl.ds(kv_start, TKV), :].reshape(TKV, H, dh)
        v = v_ref[0, pl.ds(kv_start, TKV), :].reshape(TKV, H, dh)

        # batched-over-heads scores: (H, TQ, TKV), f32 accumulation on the MXU
        s = jnp.einsum('qhd,khd->hqk', q, k, preferred_element_type=jnp.float32)
        # Mask only the diagonal tile; off-diagonal tiles are fully visible.
        s = jax.lax.cond(kvi == qi,
                         lambda t: jnp.where(tri[None, :, :], t, -1e30),
                         lambda t: t,
                         s)

        m_prev = m_scr[...]
        m_new = jnp.maximum(m_prev, jnp.max(s, axis=-1, keepdims=True))
        alpha = jnp.exp(m_prev - m_new)
        su = s - m_new
        if bf16_exp:                                     # bf16 EUP path (v6e/v7x)
            p = jnp.exp(su.astype(bf16))
            p_sum = jnp.sum(p.astype(jnp.float32), axis=-1, keepdims=True)
            p_mm = p
        else:                                            # f32 exp (v5e and older)
            p = jnp.exp(su)
            p_sum = jnp.sum(p, axis=-1, keepdims=True)
            p_mm = p.astype(bf16)
        l_scr[...] = alpha * l_scr[...] + p_sum
        acc_scr[...] = alpha * acc_scr[...] + jnp.einsum(
            'hqk,khd->hqd', p_mm, v, preferred_element_type=jnp.float32)
        m_scr[...] = m_new

    attn = acc_scr[...] * pl.reciprocal(l_scr[...], approx=True)   # (H, TQ, dh)
    attn = jnp.transpose(attn, (1, 0, 2)).reshape(TQ, D)
    attn = jnp.dot(attn.astype(bf16), wo_ref[...],
                   preferred_element_type=jnp.float32) + bo_ref[0]
    out_ref[0] = x_ref[0] + attn


def mlp_kernel(x_ref, g_ref, b_ref, w1_ref, b1_ref, w2_ref, b2_ref,
               out_ref, xn_scr, acc_scr):
    """LN2 + GELU MLP + residual, tiled over a d_ff grid axis (accumulator)."""
    f = pl.program_id(2)

    @pl.when(f == 0)
    def _():
        xn_scr[...] = _layernorm(x_ref[0], g_ref[0], b_ref[0]).astype(jnp.bfloat16)
        acc_scr[...] = jnp.zeros_like(acc_scr)

    h = jnp.dot(xn_scr[...], w1_ref[...],
                preferred_element_type=jnp.float32) + b1_ref[0]
    h = jax.nn.gelu(h)
    acc_scr[...] += jnp.dot(h.astype(jnp.bfloat16), w2_ref[...],
                            preferred_element_type=jnp.float32)

    @pl.when(f == pl.num_programs(2) - 1)
    def _():
        out_ref[0] = x_ref[0] + acc_scr[...] + b2_ref[0]


def final_norm_kernel(x_ref, g_ref, b_ref, norm_ref):
    """Final LayerNorm for one (batch, q-tile) block (f32)."""
    norm_ref[0] = _layernorm(x_ref[0], g_ref[0], b_ref[0])


def vocab_proj_kernel(xn_ref, w_ref, out_ref):
    """Vocab projection (no bias) for one (batch, q-tile, vocab-tile) block."""
    out_ref[0] = jnp.dot(xn_ref[0].astype(jnp.bfloat16), w_ref[...],
                         preferred_element_type=jnp.float32).astype(out_ref.dtype)


# -----------------------------------------------------------------------------
# Wrappers calling pallas_call
# -----------------------------------------------------------------------------
def run_block(x, layer, *, num_heads, q_tile, ff_tile):
    """One pre-norm transformer block = QKV kernel + attention kernel + MLP kernel."""
    B, S, D = x.shape
    TQ = min(q_tile, S)
    assert S % TQ == 0, "seq_len must be divisible by the q tile"
    NQ = S // TQ
    d_ff = layer["w1"].shape[1]
    TF = min(ff_tile, d_ff)
    assert d_ff % TF == 0, "d_ff must be divisible by the ff tile"
    NF = d_ff // TF
    dh = D // num_heads
    bf16 = jnp.bfloat16

    # ---- 1) LN1 + QKV projection (once per token) ---------------------------
    qkv_kern = functools.partial(qkv_proj_kernel, d_model=D, num_heads=num_heads)
    q, k, v = pl.pallas_call(
        qkv_kern,
        out_shape=(jax.ShapeDtypeStruct((B, S, D), bf16),
                   jax.ShapeDtypeStruct((B, S, D), bf16),
                   jax.ShapeDtypeStruct((B, S, D), bf16)),
        grid=(B, NQ),
        in_specs=[_block_spec((1, TQ, D), lambda b, i: (b, i, 0)),
                  _const_spec(layer["ln1_g"].shape),
                  _const_spec(layer["ln1_b"].shape),
                  _const_spec(layer["wqkv"].shape),
                  _const_spec(layer["bqkv"].shape)],
        out_specs=[_block_spec((1, TQ, D), lambda b, i: (b, i, 0)) for _ in range(3)],
        compiler_params=pltpu.CompilerParams(
            dimension_semantics=("parallel", "parallel"),
            vmem_limit_bytes=_VMEM_LIMIT),
    )(x, layer["ln1_g"], layer["ln1_b"], layer["wqkv"], layer["bqkv"])

    # ---- 2) flash attention + output projection + residual ------------------
    attn_kern = functools.partial(attention_kernel, num_heads=num_heads,
                                  d_model=D, q_tile=TQ, bf16_exp=_BF16_EXP)
    x1 = pl.pallas_call(
        attn_kern,
        out_shape=jax.ShapeDtypeStruct((B, S, D), jnp.float32),
        grid=(B, NQ),
        in_specs=[_block_spec((1, TQ, D), lambda b, i: (b, i, 0)),   # residual q-tile
                  _block_spec((1, TQ, D), lambda b, i: (b, i, 0)),   # q (bf16, scaled)
                  _block_spec((1, S, D), lambda b, i: (b, 0, 0),     # k (per batch)
                              single_buffer=True),
                  _block_spec((1, S, D), lambda b, i: (b, 0, 0),     # v (per batch)
                              single_buffer=True),
                  _const_spec(layer["wo"].shape),
                  _const_spec(layer["bo"].shape)],
        out_specs=_block_spec((1, TQ, D), lambda b, i: (b, i, 0)),
        scratch_shapes=[
            pltpu.VMEM((num_heads, TQ, 1), jnp.float32),   # running max
            pltpu.VMEM((num_heads, TQ, 1), jnp.float32),   # running denom
            pltpu.VMEM((num_heads, TQ, dh), jnp.float32),  # output accumulator
        ],
        compiler_params=pltpu.CompilerParams(
            # qi work is ragged (causal skip) -> keep it "arbitrary" so megacore
            # generations shard only the batch axis (review item 10).
            dimension_semantics=("parallel", "arbitrary"),
            vmem_limit_bytes=_VMEM_LIMIT),
    )(x, q, k, v, layer["wo"], layer["bo"])

    # ---- 3) LN2 + MLP + residual, d_ff-tiled weights -------------------------
    x2 = pl.pallas_call(
        mlp_kernel,
        out_shape=jax.ShapeDtypeStruct((B, S, D), jnp.float32),
        grid=(B, NQ, NF),
        in_specs=[_block_spec((1, TQ, D), lambda b, i, f: (b, i, 0)),
                  _const_spec(layer["ln2_g"].shape),
                  _const_spec(layer["ln2_b"].shape),
                  _block_spec((D, TF), lambda b, i, f: (0, f)),
                  _block_spec((1, TF), lambda b, i, f: (0, f)),
                  _block_spec((TF, D), lambda b, i, f: (f, 0)),
                  _const_spec(layer["b2"].shape)],
        out_specs=_block_spec((1, TQ, D), lambda b, i, f: (b, i, 0)),
        scratch_shapes=[
            pltpu.VMEM((TQ, D), bf16),          # LN2(x1) cached across d_ff tiles
            pltpu.VMEM((TQ, D), jnp.float32),   # MLP output accumulator
        ],
        compiler_params=pltpu.CompilerParams(
            dimension_semantics=("parallel", "parallel", "arbitrary"),
            vmem_limit_bytes=_VMEM_LIMIT),
    )(x1, layer["ln2_g"], layer["ln2_b"], layer["w1"], layer["b1"],
      layer["w2"], layer["b2"])
    return x2


def run_final(x, lnf_g, lnf_b, w_out, *, q_tile, v_tile, logits_dtype):
    B, S, D = x.shape
    V = w_out.shape[1]
    TQ = min(q_tile, S)          # large q tile -> each w_out tile reused more
    TV = min(v_tile, V)
    assert S % TQ == 0 and V % TV == 0
    NQ, NV = S // TQ, V // TV

    # Final LayerNorm (also returned as model_info["final_norm"]).
    norm = pl.pallas_call(
        final_norm_kernel,
        out_shape=jax.ShapeDtypeStruct((B, S, D), jnp.float32),
        grid=(B, NQ),
        in_specs=[_block_spec((1, TQ, D), lambda b, i: (b, i, 0)),
                  _const_spec(lnf_g.shape),
                  _const_spec(lnf_b.shape)],
        out_specs=_block_spec((1, TQ, D), lambda b, i: (b, i, 0)),
        compiler_params=pltpu.CompilerParams(
            dimension_semantics=("parallel", "parallel"),
            vmem_limit_bytes=_VMEM_LIMIT),
    )(x, lnf_g, lnf_b)

    # Vocab projection: big q tile, vocab axis innermost, bf16 logits writeback.
    logits = pl.pallas_call(
        vocab_proj_kernel,
        out_shape=jax.ShapeDtypeStruct((B, S, V), logits_dtype),
        grid=(B, NQ, NV),
        in_specs=[_block_spec((1, TQ, D), lambda b, i, vi: (b, i, 0)),
                  _block_spec((D, TV), lambda b, i, vi: (0, vi))],
        out_specs=_block_spec((1, TQ, TV), lambda b, i, vi: (b, i, vi)),
        compiler_params=pltpu.CompilerParams(
            dimension_semantics=("parallel", "parallel", "parallel"),
            vmem_limit_bytes=_VMEM_LIMIT),
    )(norm, w_out)
    return norm, logits


def transformer_forward(tokens, params, *, num_heads, q_tile=256, ff_tile=512,
                        vocab_q_tile=1024, v_tile=2048,
                        logits_dtype=jnp.bfloat16):
    """Full forward pass. tokens: (B, S) int32 -> (logits, model_info)."""
    B, S = tokens.shape
    tok_emb = params["tok_emb"][tokens]                 # (B, S, D)  gather (glue)
    pos_emb = params["pos_emb"][:S]                     # (S, D)
    x = tok_emb + pos_emb[None, :, :]

    layer_info = []
    for layer in params["layers"]:
        x = run_block(x, layer, num_heads=num_heads, q_tile=q_tile, ff_tile=ff_tile)
        layer_info.append({"block_output": x})

    final_norm, logits = run_final(x, params["lnf_g"], params["lnf_b"],
                                   params["w_out"], q_tile=vocab_q_tile,
                                   v_tile=v_tile, logits_dtype=logits_dtype)
    model_info = {
        "token_embeddings": tok_emb,
        "position_embeddings": pos_emb,
        "layer_info": layer_info,
        "final_norm": final_norm,
    }
    return logits, model_info


# -----------------------------------------------------------------------------
# Deterministic parameter init (mirrors _init_weights: normal(0, 0.02) for
# linear/embedding weights, zeros for biases; LayerNorm = ones/zeros).
# Matmul weights are stored in bfloat16 (mixed precision); everything the
# vector units touch (LN params, biases, embeddings) stays float32.
# -----------------------------------------------------------------------------
def init_params(key, *, vocab_size, d_model, num_layers, d_ff, max_seq_len):
    bf16 = jnp.bfloat16

    def nrm(k, shape, dtype=jnp.float32):
        return (0.02 * jax.random.normal(k, shape, dtype=jnp.float32)).astype(dtype)

    keys = jax.random.split(key, 3 + num_layers)
    params = {
        "tok_emb": nrm(keys[0], (vocab_size, d_model)),
        "pos_emb": nrm(keys[1], (max_seq_len, d_model)),
        "w_out":   nrm(keys[2], (d_model, vocab_size), bf16),
        "lnf_g":   jnp.ones((1, d_model), jnp.float32),
        "lnf_b":   jnp.zeros((1, d_model), jnp.float32),
        "layers":  [],
    }
    for li in range(num_layers):
        lk = jax.random.split(keys[3 + li], 4)
        params["layers"].append({
            "ln1_g": jnp.ones((1, d_model), jnp.float32),
            "ln1_b": jnp.zeros((1, d_model), jnp.float32),
            "wqkv":  nrm(lk[0], (d_model, 3 * d_model), bf16),
            "bqkv":  jnp.zeros((1, 3 * d_model), jnp.float32),
            "wo":    nrm(lk[1], (d_model, d_model), bf16),
            "bo":    jnp.zeros((1, d_model), jnp.float32),
            "ln2_g": jnp.ones((1, d_model), jnp.float32),
            "ln2_b": jnp.zeros((1, d_model), jnp.float32),
            "w1":    nrm(lk[2], (d_model, d_ff), bf16),
            "b1":    jnp.zeros((1, d_ff), jnp.float32),
            "w2":    nrm(lk[3], (d_ff, d_model), bf16),
            "b2":    jnp.zeros((1, d_model), jnp.float32),
        })
    return params


# -----------------------------------------------------------------------------
# Pure-JAX reference (f32 everywhere, same bf16-stored weights) for checking.
# -----------------------------------------------------------------------------
def reference_forward(tokens, params, *, num_heads):
    f32 = jnp.float32
    B, S = tokens.shape
    D = params["tok_emb"].shape[1]
    H = num_heads
    dh = D // H
    x = params["tok_emb"][tokens] + params["pos_emb"][:S][None]
    for layer in params["layers"]:
        wqkv = layer["wqkv"].astype(f32); bqkv = layer["bqkv"][0]
        wo = layer["wo"].astype(f32); bo = layer["bo"][0]
        w1 = layer["w1"].astype(f32); b1 = layer["b1"][0]
        w2 = layer["w2"].astype(f32); b2 = layer["b2"][0]

        xn = _layernorm(x, layer["ln1_g"][0], layer["ln1_b"][0])
        qkv = xn @ wqkv + bqkv
        q = qkv[..., 0 * D:1 * D].reshape(B, S, H, dh)
        k = qkv[..., 1 * D:2 * D].reshape(B, S, H, dh)
        v = qkv[..., 2 * D:3 * D].reshape(B, S, H, dh)
        s = jnp.einsum('bqhd,bkhd->bhqk', q, k) / math.sqrt(dh)
        mask = jnp.tril(jnp.ones((S, S), bool))
        s = jnp.where(mask[None, None], s, -1e30)
        p = jax.nn.softmax(s, axis=-1)
        o = jnp.einsum('bhqk,bkhd->bqhd', p, v).reshape(B, S, D)
        x = x + o @ wo + bo

        xn2 = _layernorm(x, layer["ln2_g"][0], layer["ln2_b"][0])
        x = x + jax.nn.gelu(xn2 @ w1 + b1) @ w2 + b2

    xn = _layernorm(x, params["lnf_g"][0], params["lnf_b"][0])
    return xn @ params["w_out"].astype(f32)


if __name__ == "__main__":
    # Small, forward-consistent shapes.
    VOCAB, D_MODEL, N_HEADS, N_LAYERS, D_FF = 128, 32, 4, 2, 64
    MAX_SEQ, BATCH, SEQ = 16, 2, 8

    key = jax.random.PRNGKey(0)
    pkey, tkey = jax.random.split(key)
    params = init_params(pkey, vocab_size=VOCAB, d_model=D_MODEL,
                         num_layers=N_LAYERS, d_ff=D_FF, max_seq_len=MAX_SEQ)
    tokens = jax.random.randint(tkey, (BATCH, SEQ), 0, VOCAB, dtype=jnp.int32)

    fwd = jax.jit(functools.partial(transformer_forward, num_heads=N_HEADS))
    logits, model_info = fwd(tokens, params)
    logits = jax.block_until_ready(logits)
    jax.block_until_ready(model_info["final_norm"])

    assert logits.shape == (BATCH, SEQ, VOCAB)
    assert bool(jnp.all(jnp.isfinite(logits.astype(jnp.float32))))

    ref_logits = jax.block_until_ready(
        reference_forward(tokens, params, num_heads=N_HEADS))
    max_err = float(jnp.max(jnp.abs(logits.astype(jnp.float32) - ref_logits)))
    assert max_err < 2e-2, f"kernel/reference mismatch, max |err| = {max_err}"

    print("KERNEL_OK")
</pallas_src>

<mosaic_0001>
module attributes {stable_mosaic.version = 11 : i64} {
  func.func @_k(%arg0: i32, %arg1: memref<8x128xf32, #tpu.memory_space<vmem>>, %arg2: memref<8x128xf32, #tpu.memory_space<vmem>>) attributes {dimension_semantics = [#tpu.dimension_semantics<arbitrary>], iteration_bounds = array<i64: 2>, scalar_prefetch = 0 : i64, scratch_operands = 0 : i64, tpu.core_type = #tpu.core_type<tc>, window_params = [{pipeline_mode = #tpu.pipeline_mode<synchronous>, transform_indices = @transform_0, window_bounds = array<i64: 8, 128>}, {pipeline_mode = #tpu.pipeline_mode<synchronous>, transform_indices = @transform_1, window_bounds = array<i64: 8, 128>}]} {
    %c0 = arith.constant 0 : index
    %c0_0 = arith.constant 0 : index
    %0 = vector.load %arg1[%c0, %c0_0] : memref<8x128xf32, #tpu.memory_space<vmem>>, vector<8x128xf32>
    %cst = arith.constant 1.000000e+00 : f32
    %1 = vector.broadcast %cst : f32 to vector<8x128xf32>
    %2 = arith.addf %0, %1 : vector<8x128xf32>
    %c0_1 = arith.constant 0 : index
    %c0_2 = arith.constant 0 : index
    %3 = vector.load %arg2[%c0_1, %c0_2] : memref<8x128xf32, #tpu.memory_space<vmem>>, vector<8x128xf32>
    tpu.vector_store %arg2[%c0_1, %c0_2], %2 {strides = array<i32>} : memref<8x128xf32, #tpu.memory_space<vmem>>, vector<8x128xf32>,
    return
  }
  func.func @transform_0(%arg0: i32) -> (i32, i32) {
    %c0_i32 = arith.constant 0 : i32
    %c0_i32_0 = arith.constant 0 : i32
    %c0_i32_1 = arith.constant 0 : i32
    return %c0_i32, %c0_i32_0 : i32, i32
  }
  func.func @transform_1(%arg0: i32) -> (i32, i32) {
    %c0_i32 = arith.constant 0 : i32
    %c0_i32_0 = arith.constant 0 : i32
    %c0_i32_1 = arith.constant 0 : i32
    return %c0_i32, %c0_i32_0 : i32, i32
  }
}

module attributes {stable_mosaic.version = 11 : i64} {
  func.func @mlp_kernel(%arg0: i32, %arg1: i32, %arg2: i32, %arg3: memref<1x8x32xf32, #tpu.memory_space<vmem>>, %arg4: memref<1x32xf32, #tpu.memory_space<vmem>>, %arg5: memref<1x32xf32, #tpu.memory_space<vmem>>, %arg6: memref<32x64xbf16, #tpu.memory_space<vmem>>, %arg7: memref<1x64xf32, #tpu.memory_space<vmem>>, %arg8: memref<64x32xbf16, #tpu.memory_space<vmem>>, %arg9: memref<1x32xf32, #tpu.memory_space<vmem>>, %arg10: memref<1x8x32xf32, #tpu.memory_space<vmem>>, %arg11: memref<8x32xbf16, #tpu.memory_space<vmem>>, %arg12: memref<8x32xf32, #tpu.memory_space<vmem>>) attributes {dimension_semantics = [#tpu.dimension_semantics<parallel>, #tpu.dimension_semantics<parallel>, #tpu.dimension_semantics<arbitrary>], iteration_bounds = array<i64: 2, 1, 1>, scalar_prefetch = 0 : i64, scratch_operands = 2 : i64, tpu.core_type = #tpu.core_type<tc>, window_params = [{transform_indices = @transform_0, window_bounds = array<i64: 1, 8, 32>}, {pipeline_mode = #tpu.pipeline_mode<synchronous>, transform_indices = @transform_1, window_bounds = array<i64: 1, 32>}, {pipeline_mode = #tpu.pipeline_mode<synchronous>, transform_indices = @transform_2, window_bounds = array<i64: 1, 32>}, {transform_indices = @transform_3, window_bounds = array<i64: 32, 64>}, {transform_indices = @transform_4, window_bounds = array<i64: 1, 64>}, {transform_indices = @transform_5, window_bounds = array<i64: 64, 32>}, {pipeline_mode = #tpu.pipeline_mode<synchronous>, transform_indices = @transform_6, window_bounds = array<i64: 1, 32>}, {transform_indices = @transform_7, window_bounds = array<i64: 1, 8, 32>}]} {
    %c0_i32 = arith.constant 0 : i32
    %0 = arith.cmpi eq, %arg2, %c0_i32 : i32
    %1 = arith.extui %0 : i1 to i32
    %c0_i32_0 = arith.constant 0 : i32
    %2 = arith.cmpi ne, %1, %c0_i32_0 : i32
    scf.if %2 {
      %c0_19 = arith.constant 0 : index
      %c0_20 = arith.constant 0 : index
      %c0_21 = arith.constant 0 : index
      %33 = vector.load %arg3[%c0_19, %c0_20, %c0_21] : memref<1x8x32xf32, #tpu.memory_space<vmem>>, vector<1x8x32xf32>
      %34 = vector.shape_cast %33 : vector<1x8x32xf32> to vector<8x32xf32>
      %c0_22 = arith.constant 0 : index
      %c0_23 = arith.constant 0 : index
      %35 = vector.load %arg4[%c0_22, %c0_23] : memref<1x32xf32, #tpu.memory_space<vmem>>, vector<1x32xf32>
      %36 = vector.shape_cast %35 : vector<1x32xf32> to vector<32xf32>
      %c0_24 = arith.constant 0 : index
      %c0_25 = arith.constant 0 : index
      %37 = vector.load %arg5[%c0_24, %c0_25] : memref<1x32xf32, #tpu.memory_space<vmem>>, vector<1x32xf32>
      %38 = vector.shape_cast %37 : vector<1x32xf32> to vector<32xf32>
      %cst_26 = arith.constant dense<0.000000e+00> : vector<8xf32>
      %39 = vector.multi_reduction <add>, %34, %cst_26 [1] : vector<8x32xf32> to vector<8xf32>
      %40 = vector.shape_cast %39 : vector<8xf32> to vector<8x1xf32>
      %cst_27 = arith.constant 3.200000e+01 : f32
      %41 = vector.broadcast %cst_27 : f32 to vector<8x1xf32>
      %42 = arith.divf %40, %41 : vector<8x1xf32>
      %43 = vector.broadcast %42 : vector<8x1xf32> to vector<8x32xf32>
      %44 = arith.subf %34, %43 : vector<8x32xf32>
      %45 = arith.mulf %44, %44 : vector<8x32xf32>
      %cst_28 = arith.constant dense<0.000000e+00> : vector<8xf32>
      %46 = vector.multi_reduction <add>, %45, %cst_28 [1] : vector<8x32xf32> to vector<8xf32>
      %47 = vector.shape_cast %46 : vector<8xf32> to vector<8x1xf32>
      %cst_29 = arith.constant 3.200000e+01 : f32
      %48 = vector.broadcast %cst_29 : f32 to vector<8x1xf32>
      %49 = arith.divf %47, %48 : vector<8x1xf32>
      %50 = vector.broadcast %42 : vector<8x1xf32> to vector<8x32xf32>
      %51 = arith.subf %34, %50 : vector<8x32xf32>
      %cst_30 = arith.constant 9.99999974E-6 : f32
      %52 = vector.broadcast %cst_30 : f32 to vector<8x1xf32>
      %53 = arith.addf %49, %52 : vector<8x1xf32>
      %54 = math.rsqrt %53 : vector<8x1xf32>
      %55 = vector.broadcast %54 : vector<8x1xf32> to vector<8x32xf32>
      %56 = arith.mulf %51, %55 : vector<8x32xf32>
      %57 = vector.shape_cast %36 : vector<32xf32> to vector<1x32xf32>
      %58 = vector.broadcast %57 : vector<1x32xf32> to vector<8x32xf32>
      %59 = arith.mulf %56, %58 : vector<8x32xf32>
      %60 = vector.shape_cast %38 : vector<32xf32> to vector<1x32xf32>
      %61 = vector.broadcast %60 : vector<1x32xf32> to vector<8x32xf32>
      %62 = arith.addf %59, %61 : vector<8x32xf32>
      %63 = arith.truncf %62 : vector<8x32xf32> to vector<8x32xbf16>
      %c0_31 = arith.constant 0 : index
      %c0_32 = arith.constant 0 : index
      %64 = vector.load %arg11[%c0_31, %c0_32] : memref<8x32xbf16, #tpu.memory_space<vmem>>, vector<8x32xbf16>
      tpu.vector_store %arg11[%c0_31, %c0_32], %63 {strides = array<i32>} : memref<8x32xbf16, #tpu.memory_space<vmem>>, vector<8x32xbf16>,
      %cst_33 = arith.constant 0.000000e+00 : f32
      %65 = vector.broadcast %cst_33 : f32 to vector<8x32xf32>
      %c0_34 = arith.constant 0 : index
      %c0_35 = arith.constant 0 : index
      %66 = vector.load %arg12[%c0_34, %c0_35] : memref<8x32xf32, #tpu.memory_space<vmem>>, vector<8x32xf32>
      tpu.vector_store %arg12[%c0_34, %c0_35], %65 {strides = array<i32>} : memref<8x32xf32, #tpu.memory_space<vmem>>, vector<8x32xf32>,
    } else {
    }
    %c0 = arith.constant 0 : index
    %c0_1 = arith.constant 0 : index
    %3 = vector.load %arg11[%c0, %c0_1] : memref<8x32xbf16, #tpu.memory_space<vmem>>, vector<8x32xbf16>
    %c0_2 = arith.constant 0 : index
    %c0_3 = arith.constant 0 : index
    %4 = vector.load %arg6[%c0_2, %c0_3] : memref<32x64xbf16, #tpu.memory_space<vmem>>, vector<32x64xbf16>
    %cst = arith.constant dense<0.000000e+00> : vector<8x64xf32>
    %5 = tpu.matmul %3, %4, %cst {dimension_numbers = #tpu.dot_dimension_numbers<[1], [0], [0], [1], [0, 0, 1, 1], [], []>} : vector<8x32xbf16>, vector<32x64xbf16>, vector<8x64xf32> -> vector<8x64xf32>
    %c0_4 = arith.constant 0 : index
    %c0_5 = arith.constant 0 : index
    %6 = vector.load %arg7[%c0_4, %c0_5] : memref<1x64xf32, #tpu.memory_space<vmem>>, vector<1x64xf32>
    %7 = vector.shape_cast %6 : vector<1x64xf32> to vector<64xf32>
    %8 = vector.shape_cast %7 : vector<64xf32> to vector<1x64xf32>
    %9 = vector.broadcast %8 : vector<1x64xf32> to vector<8x64xf32>
    %10 = arith.addf %5, %9 : vector<8x64xf32>
    %11 = arith.mulf %10, %10 : vector<8x64xf32>
    %12 = arith.mulf %10, %11 : vector<8x64xf32>
    %cst_6 = arith.constant 4.471500e-02 : f32
    %13 = vector.broadcast %cst_6 : f32 to vector<8x64xf32>
    %14 = arith.mulf %13, %12 : vector<8x64xf32>
    %15 = arith.addf %10, %14 : vector<8x64xf32>
    %cst_7 = arith.constant 0.797884583 : f32
    %16 = vector.broadcast %cst_7 : f32 to vector<8x64xf32>
    %17 = arith.mulf %16, %15 : vector<8x64xf32>
    %18 = math.tanh %17 : vector<8x64xf32>
    %cst_8 = arith.constant 1.000000e+00 : f32
    %19 = vector.broadcast %cst_8 : f32 to vector<8x64xf32>
    %20 = arith.addf %19, %18 : vector<8x64xf32>
    %cst_9 = arith.constant 5.000000e-01 : f32
    %21 = vector.broadcast %cst_9 : f32 to vector<8x64xf32>
    %22 = arith.mulf %21, %20 : vector<8x64xf32>
    %23 = arith.mulf %10, %22 : vector<8x64xf32>
    %c0_10 = arith.constant 0 : index
    %c0_11 = arith.constant 0 : index
    %24 = vector.load %arg12[%c0_10, %c0_11] : memref<8x32xf32, #tpu.memory_space<vmem>>, vector<8x32xf32>
    %25 = arith.truncf %23 : vector<8x64xf32> to vector<8x64xbf16>
    %c0_12 = arith.constant 0 : index
    %c0_13 = arith.constant 0 : index
    %26 = vector.load %arg8[%c0_12, %c0_13] : memref<64x32xbf16, #tpu.memory_space<vmem>>, vector<64x32xbf16>
    %cst_14 = arith.constant dense<0.000000e+00> : vector<8x32xf32>
    %27 = tpu.matmul %25, %26, %cst_14 {dimension_numbers = #tpu.dot_dimension_numbers<[1], [0], [0], [1], [0, 0, 1, 1], [], []>} : vector<8x64xbf16>, vector<64x32xbf16>, vector<8x32xf32> -> vector<8x32xf32>
    %28 = arith.addf %24, %27 : vector<8x32xf32>
    %c0_15 = arith.constant 0 : index
    %c0_16 = arith.constant 0 : index
    %29 = vector.load %arg12[%c0_15, %c0_16] : memref<8x32xf32, #tpu.memory_space<vmem>>, vector<8x32xf32>
    tpu.vector_store %arg12[%c0_15, %c0_16], %28 {strides = array<i32>} : memref<8x32xf32, #tpu.memory_space<vmem>>, vector<8x32xf32>,
    %c0_i32_17 = arith.constant 0 : i32
    %30 = arith.cmpi eq, %arg2, %c0_i32_17 : i32
    %31 = arith.extui %30 : i1 to i32
    %c0_i32_18 = arith.constant 0 : i32
    %32 = arith.cmpi ne, %31, %c0_i32_18 : i32
    scf.if %32 {
      %c0_19 = arith.constant 0 : index
      %c0_20 = arith.constant 0 : index
      %c0_21 = arith.constant 0 : index
      %33 = vector.load %arg3[%c0_19, %c0_20, %c0_21] : memref<1x8x32xf32, #tpu.memory_space<vmem>>, vector<1x8x32xf32>
      %34 = vector.shape_cast %33 : vector<1x8x32xf32> to vector<8x32xf32>
      %c0_22 = arith.constant 0 : index
      %c0_23 = arith.constant 0 : index
      %35 = vector.load %arg12[%c0_22, %c0_23] : memref<8x32xf32, #tpu.memory_space<vmem>>, vector<8x32xf32>
      %36 = arith.addf %34, %35 : vector<8x32xf32>
      %c0_24 = arith.constant 0 : index
      %c0_25 = arith.constant 0 : index
      %37 = vector.load %arg9[%c0_24, %c0_25] : memref<1x32xf32, #tpu.memory_space<vmem>>, vector<1x32xf32>
      %38 = vector.shape_cast %37 : vector<1x32xf32> to vector<32xf32>
      %39 = vector.shape_cast %38 : vector<32xf32> to vector<1x32xf32>
      %40 = vector.broadcast %39 : vector<1x32xf32> to vector<8x32xf32>
      %41 = arith.addf %36, %40 : vector<8x32xf32>
      %c0_26 = arith.constant 0 : index
      %c0_27 = arith.constant 0 : index
      %c0_28 = arith.constant 0 : index
      %42 = vector.load %arg10[%c0_26, %c0_27, %c0_28] : memref<1x8x32xf32, #tpu.memory_space<vmem>>, vector<1x8x32xf32>
      %43 = vector.shape_cast %42 : vector<1x8x32xf32> to vector<8x32xf32>
      %44 = vector.shape_cast %41 : vector<8x32xf32> to vector<1x8x32xf32>
      tpu.vector_store %arg10[%c0_26, %c0_27, %c0_28], %44 {strides = array<i32>} : memref<1x8x32xf32, #tpu.memory_space<vmem>>, vector<1x8x32xf32>,
    } else {
    }
    return
  }
  func.func @transform_0(%arg0: i32, %arg1: i32, %arg2: i32) -> (i32, i32, i32) {
    %c0_i32 = arith.constant 0 : i32
    %c0_i32_0 = arith.constant 0 : i32
    return %arg0, %arg1, %c0_i32 : i32, i32, i32
  }
  func.func @transform_1(%arg0: i32, %arg1: i32, %arg2: i32) -> (i32, i32) {
    %c0_i32 = arith.constant 0 : i32
    %c0_i32_0 = arith.constant 0 : i32
    %c0_i32_1 = arith.constant 0 : i32
    return %c0_i32, %c0_i32_0 : i32, i32
  }
  func.func @transform_2(%arg0: i32, %arg1: i32, %arg2: i32) -> (i32, i32) {
    %c0_i32 = arith.constant 0 : i32
    %c0_i32_0 = arith.constant 0 : i32
    %c0_i32_1 = arith.constant 0 : i32
    return %c0_i32, %c0_i32_0 : i32, i32
  }
  func.func @transform_3(%arg0: i32, %arg1: i32, %arg2: i32) -> (i32, i32) {
    %c0_i32 = arith.constant 0 : i32
    %c0_i32_0 = arith.constant 0 : i32
    return %c0_i32, %arg2 : i32, i32
  }
  func.func @transform_4(%arg0: i32, %arg1: i32, %arg2: i32) -> (i32, i32) {
    %c0_i32 = arith.constant 0 : i32
    %c0_i32_0 = arith.constant 0 : i32
    return %c0_i32, %arg2 : i32, i32
  }
  func.func @transform_5(%arg0: i32, %arg1: i32, %arg2: i32) -> (i32, i32) {
    %c0_i32 = arith.constant 0 : i32
    %c0_i32_0 = arith.constant 0 : i32
    return %arg2, %c0_i32 : i32, i32
  }
  func.func @transform_6(%arg0: i32, %arg1: i32, %arg2: i32) -> (i32, i32) {
    %c0_i32 = arith.constant 0 : i32
    %c0_i32_0 = arith.constant 0 : i32
    %c0_i32_1 = arith.constant 0 : i32
    return %c0_i32, %c0_i32_0 : i32, i32
  }
  func.func @transform_7(%arg0: i32, %arg1: i32, %arg2: i32) -> (i32, i32, i32) {
    %c0_i32 = arith.constant 0 : i32
    %c0_i32_0 = arith.constant 0 : i32
    return %arg0, %arg1, %c0_i32 : i32, i32, i32
  }
}

module attributes {stable_mosaic.version = 11 : i64} {
  func.func @qkv_proj_kernel(%arg0: i32, %arg1: i32, %arg2: memref<1x8x32xf32, #tpu.memory_space<vmem>>, %arg3: memref<1x32xf32, #tpu.memory_space<vmem>>, %arg4: memref<1x32xf32, #tpu.memory_space<vmem>>, %arg5: memref<32x96xbf16, #tpu.memory_space<vmem>>, %arg6: memref<1x96xf32, #tpu.memory_space<vmem>>, %arg7: memref<1x8x32xbf16, #tpu.memory_space<vmem>>, %arg8: memref<1x8x32xbf16, #tpu.memory_space<vmem>>, %arg9: memref<1x8x32xbf16, #tpu.memory_space<vmem>>) attributes {dimension_semantics = [#tpu.dimension_semantics<parallel>, #tpu.dimension_semantics<parallel>], iteration_bounds = array<i64: 2, 1>, scalar_prefetch = 0 : i64, scratch_operands = 0 : i64, tpu.core_type = #tpu.core_type<tc>, window_params = [{transform_indices = @transform_0, window_bounds = array<i64: 1, 8, 32>}, {pipeline_mode = #tpu.pipeline_mode<synchronous>, transform_indices = @transform_1, window_bounds = array<i64: 1, 32>}, {pipeline_mode = #tpu.pipeline_mode<synchronous>, transform_indices = @transform_2, window_bounds = array<i64: 1, 32>}, {pipeline_mode = #tpu.pipeline_mode<synchronous>, transform_indices = @transform_3, window_bounds = array<i64: 32, 96>}, {pipeline_mode = #tpu.pipeline_mode<synchronous>, transform_indices = @transform_4, window_bounds = array<i64: 1, 96>}, {transform_indices = @transform_5, window_bounds = array<i64: 1, 8, 32>}, {transform_indices = @transform_6, window_bounds = array<i64: 1, 8, 32>}, {transform_indices = @transform_7, window_bounds = array<i64: 1, 8, 32>}]} {
    %c0 = arith.constant 0 : index
    %c0_0 = arith.constant 0 : index
    %c0_1 = arith.constant 0 : index
    %0 = vector.load %arg2[%c0, %c0_0, %c0_1] : memref<1x8x32xf32, #tpu.memory_space<vmem>>, vector<1x8x32xf32>
    %1 = vector.shape_cast %0 : vector<1x8x32xf32> to vector<8x32xf32>
    %c0_2 = arith.constant 0 : index
    %c0_3 = arith.constant 0 : index
    %2 = vector.load %arg3[%c0_2, %c0_3] : memref<1x32xf32, #tpu.memory_space<vmem>>, vector<1x32xf32>
    %3 = vector.shape_cast %2 : vector<1x32xf32> to vector<32xf32>
    %c0_4 = arith.constant 0 : index
    %c0_5 = arith.constant 0 : index
    %4 = vector.load %arg4[%c0_4, %c0_5] : memref<1x32xf32, #tpu.memory_space<vmem>>, vector<1x32xf32>
    %5 = vector.shape_cast %4 : vector<1x32xf32> to vector<32xf32>
    %cst = arith.constant dense<0.000000e+00> : vector<8xf32>
    %6 = vector.multi_reduction <add>, %1, %cst [1] : vector<8x32xf32> to vector<8xf32>
    %7 = vector.shape_cast %6 : vector<8xf32> to vector<8x1xf32>
    %cst_6 = arith.constant 3.200000e+01 : f32
    %8 = vector.broadcast %cst_6 : f32 to vector<8x1xf32>
    %9 = arith.divf %7, %8 : vector<8x1xf32>
    %10 = vector.broadcast %9 : vector<8x1xf32> to vector<8x32xf32>
    %11 = arith.subf %1, %10 : vector<8x32xf32>
    %12 = arith.mulf %11, %11 : vector<8x32xf32>
    %cst_7 = arith.constant dense<0.000000e+00> : vector<8xf32>
    %13 = vector.multi_reduction <add>, %12, %cst_7 [1] : vector<8x32xf32> to vector<8xf32>
    %14 = vector.shape_cast %13 : vector<8xf32> to vector<8x1xf32>
    %cst_8 = arith.constant 3.200000e+01 : f32
    %15 = vector.broadcast %cst_8 : f32 to vector<8x1xf32>
    %16 = arith.divf %14, %15 : vector<8x1xf32>
    %17 = vector.broadcast %9 : vector<8x1xf32> to vector<8x32xf32>
    %18 = arith.subf %1, %17 : vector<8x32xf32>
    %cst_9 = arith.constant 9.99999974E-6 : f32
    %19 = vector.broadcast %cst_9 : f32 to vector<8x1xf32>
    %20 = arith.addf %16, %19 : vector<8x1xf32>
    %21 = math.rsqrt %20 : vector<8x1xf32>
    %22 = vector.broadcast %21 : vector<8x1xf32> to vector<8x32xf32>
    %23 = arith.mulf %18, %22 : vector<8x32xf32>
    %24 = vector.shape_cast %3 : vector<32xf32> to vector<1x32xf32>
    %25 = vector.broadcast %24 : vector<1x32xf32> to vector<8x32xf32>
    %26 = arith.mulf %23, %25 : vector<8x32xf32>
    %27 = vector.shape_cast %5 : vector<32xf32> to vector<1x32xf32>
    %28 = vector.broadcast %27 : vector<1x32xf32> to vector<8x32xf32>
    %29 = arith.addf %26, %28 : vector<8x32xf32>
    %30 = arith.truncf %29 : vector<8x32xf32> to vector<8x32xbf16>
    %c0_10 = arith.constant 0 : index
    %c0_11 = arith.constant 0 : index
    %31 = vector.load %arg5[%c0_10, %c0_11] : memref<32x96xbf16, #tpu.memory_space<vmem>>, vector<32x96xbf16>
    %cst_12 = arith.constant dense<0.000000e+00> : vector<8x96xf32>
    %32 = tpu.matmul %30, %31, %cst_12 {dimension_numbers = #tpu.dot_dimension_numbers<[1], [0], [0], [1], [0, 0, 1, 1], [], []>} : vector<8x32xbf16>, vector<32x96xbf16>, vector<8x96xf32> -> vector<8x96xf32>
    %c0_13 = arith.constant 0 : index
    %c0_14 = arith.constant 0 : index
    %33 = vector.load %arg6[%c0_13, %c0_14] : memref<1x96xf32, #tpu.memory_space<vmem>>, vector<1x96xf32>
    %34 = vector.shape_cast %33 : vector<1x96xf32> to vector<96xf32>
    %35 = vector.shape_cast %34 : vector<96xf32> to vector<1x96xf32>
    %36 = vector.broadcast %35 : vector<1x96xf32> to vector<8x96xf32>
    %37 = arith.addf %32, %36 : vector<8x96xf32>
    %38 = vector.extract_strided_slice %37 {offsets = [0, 0], sizes = [8, 32], strides = [1, 1]} : vector<8x96xf32> to vector<8x32xf32>
    %cst_15 = arith.constant 0.353553385 : f32
    %39 = vector.broadcast %cst_15 : f32 to vector<8x32xf32>
    %40 = arith.mulf %38, %39 : vector<8x32xf32>
    %41 = arith.truncf %40 : vector<8x32xf32> to vector<8x32xbf16>
    %c0_16 = arith.constant 0 : index
    %c0_17 = arith.constant 0 : index
    %c0_18 = arith.constant 0 : index
    %42 = vector.load %arg7[%c0_16, %c0_17, %c0_18] : memref<1x8x32xbf16, #tpu.memory_space<vmem>>, vector<1x8x32xbf16>
    %43 = vector.shape_cast %42 : vector<1x8x32xbf16> to vector<8x32xbf16>
    %44 = vector.shape_cast %41 : vector<8x32xbf16> to vector<1x8x32xbf16>
    tpu.vector_store %arg7[%c0_16, %c0_17, %c0_18], %44 {strides = array<i32>} : memref<1x8x32xbf16, #tpu.memory_space<vmem>>, vector<1x8x32xbf16>,
    %45 = vector.extract_strided_slice %37 {offsets = [0, 32], sizes = [8, 32], strides = [1, 1]} : vector<8x96xf32> to vector<8x32xf32>
    %46 = arith.truncf %45 : vector<8x32xf32> to vector<8x32xbf16>
    %c0_19 = arith.constant 0 : index
    %c0_20 = arith.constant 0 : index
    %c0_21 = arith.constant 0 : index
    %47 = vector.load %arg8[%c0_19, %c0_20, %c0_21] : memref<1x8x32xbf16, #tpu.memory_space<vmem>>, vector<1x8x32xbf16>
    %48 = vector.shape_cast %47 : vector<1x8x32xbf16> to vector<8x32xbf16>
    %49 = vector.shape_cast %46 : vector<8x32xbf16> to vector<1x8x32xbf16>
    tpu.vector_store %arg8[%c0_19, %c0_20, %c0_21], %49 {strides = array<i32>} : memref<1x8x32xbf16, #tpu.memory_space<vmem>>, vector<1x8x32xbf16>,
    %50 = vector.extract_strided_slice %37 {offsets = [0, 64], sizes = [8, 32], strides = [1, 1]} : vector<8x96xf32> to vector<8x32xf32>
    %51 = arith.truncf %50 : vector<8x32xf32> to vector<8x32xbf16>
    %c0_22 = arith.constant 0 : index
    %c0_23 = arith.constant 0 : index
    %c0_24 = arith.constant 0 : index
    %52 = vector.load %arg9[%c0_22, %c0_23, %c0_24] : memref<1x8x32xbf16, #tpu.memory_space<vmem>>, vector<1x8x32xbf16>
    %53 = vector.shape_cast %52 : vector<1x8x32xbf16> to vector<8x32xbf16>
    %54 = vector.shape_cast %51 : vector<8x32xbf16> to vector<1x8x32xbf16>
    tpu.vector_store %arg9[%c0_22, %c0_23, %c0_24], %54 {strides = array<i32>} : memref<1x8x32xbf16, #tpu.memory_space<vmem>>, vector<1x8x32xbf16>,
    return
  }
  func.func @transform_0(%arg0: i32, %arg1: i32) -> (i32, i32, i32) {
    %c0_i32 = arith.constant 0 : i32
    %c0_i32_0 = arith.constant 0 : i32
    return %arg0, %arg1, %c0_i32 : i32, i32, i32
  }
  func.func @transform_1(%arg0: i32, %arg1: i32) -> (i32, i32) {
    %c0_i32 = arith.constant 0 : i32
    %c0_i32_0 = arith.constant 0 : i32
    %c0_i32_1 = arith.constant 0 : i32
    return %c0_i32, %c0_i32_0 : i32, i32
  }
  func.func @transform_2(%arg0: i32, %arg1: i32) -> (i32, i32) {
    %c0_i32 = arith.constant 0 : i32
    %c0_i32_0 = arith.constant 0 : i32
    %c0_i32_1 = arith.constant 0 : i32
    return %c0_i32, %c0_i32_0 : i32, i32
  }
  func.func @transform_3(%arg0: i32, %arg1: i32) -> (i32, i32) {
    %c0_i32 = arith.constant 0 : i32
    %c0_i32_0 = arith.constant 0 : i32
    %c0_i32_1 = arith.constant 0 : i32
    return %c0_i32, %c0_i32_0 : i32, i32
  }
  func.func @transform_4(%arg0: i32, %arg1: i32) -> (i32, i32) {
    %c0_i32 = arith.constant 0 : i32
    %c0_i32_0 = arith.constant 0 : i32
    %c0_i32_1 = arith.constant 0 : i32
    return %c0_i32, %c0_i32_0 : i32, i32
  }
  func.func @transform_5(%arg0: i32, %arg1: i32) -> (i32, i32, i32) {
    %c0_i32 = arith.constant 0 : i32
    %c0_i32_0 = arith.constant 0 : i32
    return %arg0, %arg1, %c0_i32 : i32, i32, i32
  }
  func.func @transform_6(%arg0: i32, %arg1: i32) -> (i32, i32, i32) {
    %c0_i32 = arith.constant 0 : i32
    %c0_i32_0 = arith.constant 0 : i32
    return %arg0, %arg1, %c0_i32 : i32, i32, i32
  }
  func.func @transform_7(%arg0: i32, %arg1: i32) -> (i32, i32, i32) {
    %c0_i32 = arith.constant 0 : i32
    %c0_i32_0 = arith.constant 0 : i32
    return %arg0, %arg1, %c0_i32 : i32, i32, i32
  }
}

module attributes {stable_mosaic.version = 11 : i64} {
  func.func @attention_kernel(%arg0: i32, %arg1: i32, %arg2: memref<1x8x32xf32, #tpu.memory_space<vmem>>, %arg3: memref<1x8x32xbf16, #tpu.memory_space<vmem>>, %arg4: memref<1x8x32xbf16, #tpu.memory_space<vmem>>, %arg5: memref<1x8x32xbf16, #tpu.memory_space<vmem>>, %arg6: memref<32x32xbf16, #tpu.memory_space<vmem>>, %arg7: memref<1x32xf32, #tpu.memory_space<vmem>>, %arg8: memref<1x8x32xf32, #tpu.memory_space<vmem>>, %arg9: memref<4x8x1xf32, #tpu.memory_space<vmem>>, %arg10: memref<4x8x1xf32, #tpu.memory_space<vmem>>, %arg11: memref<4x8x8xf32, #tpu.memory_space<vmem>>) attributes {dimension_semantics = [#tpu.dimension_semantics<parallel>, #tpu.dimension_semantics<arbitrary>], iteration_bounds = array<i64: 2, 1>, scalar_prefetch = 0 : i64, scratch_operands = 3 : i64, tpu.core_type = #tpu.core_type<tc>, window_params = [{transform_indices = @transform_0, window_bounds = array<i64: 1, 8, 32>}, {transform_indices = @transform_1, window_bounds = array<i64: 1, 8, 32>}, {transform_indices = @transform_2, window_bounds = array<i64: 1, 8, 32>}, {transform_indices = @transform_3, window_bounds = array<i64: 1, 8, 32>}, {pipeline_mode = #tpu.pipeline_mode<synchronous>, transform_indices = @transform_4, window_bounds = array<i64: 32, 32>}, {pipeline_mode = #tpu.pipeline_mode<synchronous>, transform_indices = @transform_5, window_bounds = array<i64: 1, 32>}, {transform_indices = @transform_6, window_bounds = array<i64: 1, 8, 32>}]} {
    %c0 = arith.constant 0 : index
    %c0_0 = arith.constant 0 : index
    %c0_1 = arith.constant 0 : index
    %0 = vector.load %arg3[%c0, %c0_0, %c0_1] : memref<1x8x32xbf16, #tpu.memory_space<vmem>>, vector<1x8x32xbf16>
    %1 = vector.shape_cast %0 : vector<1x8x32xbf16> to vector<8x32xbf16>
    %2 = vector.shape_cast %1 : vector<8x32xbf16> to vector<8x4x8xbf16>
    %cst = arith.constant 0xFF800000 : f32
    %3 = vector.broadcast %cst : f32 to vector<4x8x1xf32>
    %c0_2 = arith.constant 0 : index
    %c0_3 = arith.constant 0 : index
    %c0_4 = arith.constant 0 : index
    %4 = vector.load %arg9[%c0_2, %c0_3, %c0_4] : memref<4x8x1xf32, #tpu.memory_space<vmem>>, vector<4x8x1xf32>
    tpu.vector_store %arg9[%c0_2, %c0_3, %c0_4], %3 {strides = array<i32>} : memref<4x8x1xf32, #tpu.memory_space<vmem>>, vector<4x8x1xf32>,
    %cst_5 = arith.constant 0.000000e+00 : f32
    %5 = vector.broadcast %cst_5 : f32 to vector<4x8x1xf32>
    %c0_6 = arith.constant 0 : index
    %c0_7 = arith.constant 0 : index
    %c0_8 = arith.constant 0 : index
    %6 = vector.load %arg10[%c0_6, %c0_7, %c0_8] : memref<4x8x1xf32, #tpu.memory_space<vmem>>, vector<4x8x1xf32>
    tpu.vector_store %arg10[%c0_6, %c0_7, %c0_8], %5 {strides = array<i32>} : memref<4x8x1xf32, #tpu.memory_space<vmem>>, vector<4x8x1xf32>,
    %cst_9 = arith.constant 0.000000e+00 : f32
    %7 = vector.broadcast %cst_9 : f32 to vector<4x8x8xf32>
    %c0_10 = arith.constant 0 : index
    %c0_11 = arith.constant 0 : index
    %c0_12 = arith.constant 0 : index
    %8 = vector.load %arg11[%c0_10, %c0_11, %c0_12] : memref<4x8x8xf32, #tpu.memory_space<vmem>>, vector<4x8x8xf32>
    tpu.vector_store %arg11[%c0_10, %c0_11, %c0_12], %7 {strides = array<i32>} : memref<4x8x8xf32, #tpu.memory_space<vmem>>, vector<4x8x8xf32>,
    %9 = tpu.iota {dimensions = array<i32: 0>} : vector<8x8xi32>
    %10 = tpu.iota {dimensions = array<i32: 1>} : vector<8x8xi32>
    %11 = arith.cmpi sge, %9, %10 : vector<8x8xi32>
    %c1_i32 = arith.constant 1 : i32
    %12 = arith.addi %arg1, %c1_i32 : i32
    %c0_i32 = arith.constant 0 : i32
    %13 = arith.subi %12, %c0_i32 : i32
    %c1_i32_13 = arith.constant 1 : i32
    %c1_i32_14 = arith.constant 1 : i32
    %14 = arith.subi %c1_i32_13, %c1_i32_14 : i32
    %15 = arith.addi %13, %14 : i32
    %c1_i32_15 = arith.constant 1 : i32
    %16 = arith.divsi %15, %c1_i32_15 : i32
    %c1_i32_16 = arith.constant 1 : i32
    %c0_i32_17 = arith.constant 0 : i32
    %c0_i32_18 = arith.constant 0 : i32
    %17 = arith.subi %16, %c0_i32_18 : i32
    %18 = arith.addi %c0_i32_18, %17 : i32
    %c1_i32_19 = arith.constant 1 : i32
    scf.for %arg12 = %c0_i32_18 to %18 step %c1_i32_19  : i32 {
      %40 = arith.muli %arg12, %c1_i32_16 : i32
      %41 = arith.addi %c0_i32_17, %40 : i32
      %c8_i32 = arith.constant 8 : i32
      %42 = arith.muli %41, %c8_i32 : i32
      %43 = tpu.assume_multiple %42, 8 : i32
      %c0_37 = arith.constant 0 : index
      %44 = arith.index_cast %43 : i32 to index
      %c0_38 = arith.constant 0 : index
      %45 = vector.load %arg4[%c0_37, %44, %c0_38] : memref<1x8x32xbf16, #tpu.memory_space<vmem>>, vector<1x8x32xbf16>
      %46 = vector.shape_cast %45 : vector<1x8x32xbf16> to vector<8x32xbf16>
      %47 = vector.shape_cast %46 : vector<8x32xbf16> to vector<8x4x8xbf16>
      %c0_39 = arith.constant 0 : index
      %48 = arith.index_cast %43 : i32 to index
      %c0_40 = arith.constant 0 : index
      %49 = vector.load %arg5[%c0_39, %48, %c0_40] : memref<1x8x32xbf16, #tpu.memory_space<vmem>>, vector<1x8x32xbf16>
      %50 = vector.shape_cast %49 : vector<1x8x32xbf16> to vector<8x32xbf16>
      %51 = vector.shape_cast %50 : vector<8x32xbf16> to vector<8x4x8xbf16>
      "tpu.trace_start"() <{level = 10 : i32, message = "qhd,khd->hqk"}> : () -> ()
      %cst_41 = arith.constant dense<0.000000e+00> : vector<4x8x8xf32>
      %52 = tpu.matmul %2, %47, %cst_41 {dimension_numbers = #tpu.dot_dimension_numbers<[2], [2], [0], [0], [0, 1, 0, 0, 1, 0], [1], [1]>} : vector<8x4x8xbf16>, vector<8x4x8xbf16>, vector<4x8x8xf32> -> vector<4x8x8xf32>
      "tpu.trace_stop"() : () -> ()
      %53 = arith.cmpi eq, %41, %arg1 : i32
      %54 = arith.extui %53 : i1 to i32
      %c0_i32_42 = arith.constant 0 : i32
      %55 = arith.cmpi ne, %54, %c0_i32_42 : i32
      %56 = scf.if %55 -> (vector<4x8x8xf32>) {
        %80 = vector.shape_cast %11 : vector<8x8xi1> to vector<1x8x8xi1>
        %cst_64 = arith.constant -1.000000e+30 : f32
        %81 = vector.shape_cast %80 : vector<1x8x8xi1> to vector<1x8x8xi1>
        %82 = vector.broadcast %81 : vector<1x8x8xi1> to vector<4x8x8xi1>
        %83 = vector.broadcast %cst_64 : f32 to vector<4x8x8xf32>
        %84 = arith.select %82, %52, %83 : vector<4x8x8xi1>, vector<4x8x8xf32>
        scf.yield %84 : vector<4x8x8xf32>
      } else {
        scf.yield %52 : vector<4x8x8xf32>
      }
      %c0_43 = arith.constant 0 : index
      %c0_44 = arith.constant 0 : index
      %c0_45 = arith.constant 0 : index
      %57 = vector.load %arg9[%c0_43, %c0_44, %c0_45] : memref<4x8x1xf32, #tpu.memory_space<vmem>>, vector<4x8x1xf32>
      %cst_46 = arith.constant dense<0xFF800000> : vector<4x8xf32>
      %58 = vector.multi_reduction <maximumf>, %56, %cst_46 [2] : vector<4x8x8xf32> to vector<4x8xf32>
      %59 = vector.shape_cast %58 : vector<4x8xf32> to vector<4x8x1xf32>
      %60 = arith.maximumf %57, %59 : vector<4x8x1xf32>
      %61 = arith.subf %57, %60 : vector<4x8x1xf32>
      %62 = math.exp %61 : vector<4x8x1xf32>
      %63 = vector.broadcast %60 : vector<4x8x1xf32> to vector<4x8x8xf32>
      %64 = arith.subf %56, %63 : vector<4x8x8xf32>
      %65 = math.exp %64 : vector<4x8x8xf32>
      %cst_47 = arith.constant dense<0.000000e+00> : vector<4x8xf32>
      %66 = vector.multi_reduction <add>, %65, %cst_47 [2] : vector<4x8x8xf32> to vector<4x8xf32>
      %67 = vector.shape_cast %66 : vector<4x8xf32> to vector<4x8x1xf32>
      %68 = arith.truncf %65 : vector<4x8x8xf32> to vector<4x8x8xbf16>
      %c0_48 = arith.constant 0 : index
      %c0_49 = arith.constant 0 : index
      %c0_50 = arith.constant 0 : index
      %69 = vector.load %arg10[%c0_48, %c0_49, %c0_50] : memref<4x8x1xf32, #tpu.memory_space<vmem>>, vector<4x8x1xf32>
      %70 = arith.mulf %62, %69 : vector<4x8x1xf32>
      %71 = arith.addf %70, %67 : vector<4x8x1xf32>
      %c0_51 = arith.constant 0 : index
      %c0_52 = arith.constant 0 : index
      %c0_53 = arith.constant 0 : index
      %72 = vector.load %arg10[%c0_51, %c0_52, %c0_53] : memref<4x8x1xf32, #tpu.memory_space<vmem>>, vector<4x8x1xf32>
      tpu.vector_store %arg10[%c0_51, %c0_52, %c0_53], %71 {strides = array<i32>} : memref<4x8x1xf32, #tpu.memory_space<vmem>>, vector<4x8x1xf32>,
      %c0_54 = arith.constant 0 : index
      %c0_55 = arith.constant 0 : index
      %c0_56 = arith.constant 0 : index
      %73 = vector.load %arg11[%c0_54, %c0_55, %c0_56] : memref<4x8x8xf32, #tpu.memory_space<vmem>>, vector<4x8x8xf32>
      %74 = vector.broadcast %62 : vector<4x8x1xf32> to vector<4x8x8xf32>
      %75 = arith.mulf %74, %73 : vector<4x8x8xf32>
      "tpu.trace_start"() <{level = 10 : i32, message = "hqk,khd->hqd"}> : () -> ()
      %cst_57 = arith.constant dense<0.000000e+00> : vector<4x8x8xf32>
      %76 = tpu.matmul %68, %51, %cst_57 {dimension_numbers = #tpu.dot_dimension_numbers<[2], [0], [1], [2], [0, 0, 0, 1, 1, 2], [0], [1]>} : vector<4x8x8xbf16>, vector<8x4x8xbf16>, vector<4x8x8xf32> -> vector<4x8x8xf32>
      "tpu.trace_stop"() : () -> ()
      %77 = arith.addf %75, %76 : vector<4x8x8xf32>
      %c0_58 = arith.constant 0 : index
      %c0_59 = arith.constant 0 : index
      %c0_60 = arith.constant 0 : index
      %78 = vector.load %arg11[%c0_58, %c0_59, %c0_60] : memref<4x8x8xf32, #tpu.memory_space<vmem>>, vector<4x8x8xf32>
      tpu.vector_store %arg11[%c0_58, %c0_59, %c0_60], %77 {strides = array<i32>} : memref<4x8x8xf32, #tpu.memory_space<vmem>>, vector<4x8x8xf32>,
      %c0_61 = arith.constant 0 : index
      %c0_62 = arith.constant 0 : index
      %c0_63 = arith.constant 0 : index
      %79 = vector.load %arg9[%c0_61, %c0_62, %c0_63] : memref<4x8x1xf32, #tpu.memory_space<vmem>>, vector<4x8x1xf32>
      tpu.vector_store %arg9[%c0_61, %c0_62, %c0_63], %60 {strides = array<i32>} : memref<4x8x1xf32, #tpu.memory_space<vmem>>, vector<4x8x1xf32>,
    }
    %c0_20 = arith.constant 0 : index
    %c0_21 = arith.constant 0 : index
    %c0_22 = arith.constant 0 : index
    %19 = vector.load %arg11[%c0_20, %c0_21, %c0_22] : memref<4x8x8xf32, #tpu.memory_space<vmem>>, vector<4x8x8xf32>
    %c0_23 = arith.constant 0 : index
    %c0_24 = arith.constant 0 : index
    %c0_25 = arith.constant 0 : index
    %20 = vector.load %arg10[%c0_23, %c0_24, %c0_25] : memref<4x8x1xf32, #tpu.memory_space<vmem>>, vector<4x8x1xf32>
    %21 = tpu.reciprocal %20 {approx = true} : vector<4x8x1xf32> -> vector<4x8x1xf32>
    %22 = vector.broadcast %21 : vector<4x8x1xf32> to vector<4x8x8xf32>
    %23 = arith.mulf %19, %22 : vector<4x8x8xf32>
    %24 = tpu.transpose %23, [1, 0, 2] : vector<4x8x8xf32> -> vector<8x4x8xf32>
    %25 = vector.shape_cast %24 : vector<8x4x8xf32> to vector<8x32xf32>
    %26 = arith.truncf %25 : vector<8x32xf32> to vector<8x32xbf16>
    %c0_26 = arith.constant 0 : index
    %c0_27 = arith.constant 0 : index
    %27 = vector.load %arg6[%c0_26, %c0_27] : memref<32x32xbf16, #tpu.memory_space<vmem>>, vector<32x32xbf16>
    %cst_28 = arith.constant dense<0.000000e+00> : vector<8x32xf32>
    %28 = tpu.matmul %26, %27, %cst_28 {dimension_numbers = #tpu.dot_dimension_numbers<[1], [0], [0], [1], [0, 0, 1, 1], [], []>} : vector<8x32xbf16>, vector<32x32xbf16>, vector<8x32xf32> -> vector<8x32xf32>
    %c0_29 = arith.constant 0 : index
    %c0_30 = arith.constant 0 : index
    %29 = vector.load %arg7[%c0_29, %c0_30] : memref<1x32xf32, #tpu.memory_space<vmem>>, vector<1x32xf32>
    %30 = vector.shape_cast %29 : vector<1x32xf32> to vector<32xf32>
    %31 = vector.shape_cast %30 : vector<32xf32> to vector<1x32xf32>
    %32 = vector.broadcast %31 : vector<1x32xf32> to vector<8x32xf32>
    %33 = arith.addf %28, %32 : vector<8x32xf32>
    %c0_31 = arith.constant 0 : index
    %c0_32 = arith.constant 0 : index
    %c0_33 = arith.constant 0 : index
    %34 = vector.load %arg2[%c0_31, %c0_32, %c0_33] : memref<1x8x32xf32, #tpu.memory_space<vmem>>, vector<1x8x32xf32>
    %35 = vector.shape_cast %34 : vector<1x8x32xf32> to vector<8x32xf32>
    %36 = arith.addf %35, %33 : vector<8x32xf32>
    %c0_34 = arith.constant 0 : index
    %c0_35 = arith.constant 0 : index
    %c0_36 = arith.constant 0 : index
    %37 = vector.load %arg8[%c0_34, %c0_35, %c0_36] : memref<1x8x32xf32, #tpu.memory_space<vmem>>, vector<1x8x32xf32>
    %38 = vector.shape_cast %37 : vector<1x8x32xf32> to vector<8x32xf32>
    %39 = vector.shape_cast %36 : vector<8x32xf32> to vector<1x8x32xf32>
    tpu.vector_store %arg8[%c0_34, %c0_35, %c0_36], %39 {strides = array<i32>} : memref<1x8x32xf32, #tpu.memory_space<vmem>>, vector<1x8x32xf32>,
    return
  }
  func.func @transform_0(%arg0: i32, %arg1: i32) -> (i32, i32, i32) {
    %c0_i32 = arith.constant 0 : i32
    %c0_i32_0 = arith.constant 0 : i32
    return %arg0, %arg1, %c0_i32 : i32, i32, i32
  }
  func.func @transform_1(%arg0: i32, %arg1: i32) -> (i32, i32, i32) {
    %c0_i32 = arith.constant 0 : i32
    %c0_i32_0 = arith.constant 0 : i32
    return %arg0, %arg1, %c0_i32 : i32, i32, i32
  }
  func.func @transform_2(%arg0: i32, %arg1: i32) -> (i32, i32, i32) {
    %c0_i32 = arith.constant 0 : i32
    %c0_i32_0 = arith.constant 0 : i32
    %c0_i32_1 = arith.constant 0 : i32
    return %arg0, %c0_i32, %c0_i32_0 : i32, i32, i32
  }
  func.func @transform_3(%arg0: i32, %arg1: i32) -> (i32, i32, i32) {
    %c0_i32 = arith.constant 0 : i32
    %c0_i32_0 = arith.constant 0 : i32
    %c0_i32_1 = arith.constant 0 : i32
    return %arg0, %c0_i32, %c0_i32_0 : i32, i32, i32
  }
  func.func @transform_4(%arg0: i32, %arg1: i32) -> (i32, i32) {
    %c0_i32 = arith.constant 0 : i32
    %c0_i32_0 = arith.constant 0 : i32
    %c0_i32_1 = arith.constant 0 : i32
    return %c0_i32, %c0_i32_0 : i32, i32
  }
  func.func @transform_5(%arg0: i32, %arg1: i32) -> (i32, i32) {
    %c0_i32 = arith.constant 0 : i32
    %c0_i32_0 = arith.constant 0 : i32
    %c0_i32_1 = arith.constant 0 : i32
    return %c0_i32, %c0_i32_0 : i32, i32
  }
  func.func @transform_6(%arg0: i32, %arg1: i32) -> (i32, i32, i32) {
    %c0_i32 = arith.constant 0 : i32
    %c0_i32_0 = arith.constant 0 : i32
    return %arg0, %arg1, %c0_i32 : i32, i32, i32
  }
}

module attributes {stable_mosaic.version = 11 : i64} {
  func.func @final_norm_kernel(%arg0: i32, %arg1: i32, %arg2: memref<1x8x32xf32, #tpu.memory_space<vmem>>, %arg3: memref<1x32xf32, #tpu.memory_space<vmem>>, %arg4: memref<1x32xf32, #tpu.memory_space<vmem>>, %arg5: memref<1x8x32xf32, #tpu.memory_space<vmem>>) attributes {dimension_semantics = [#tpu.dimension_semantics<parallel>, #tpu.dimension_semantics<parallel>], iteration_bounds = array<i64: 2, 1>, scalar_prefetch = 0 : i64, scratch_operands = 0 : i64, tpu.core_type = #tpu.core_type<tc>, window_params = [{transform_indices = @transform_0, window_bounds = array<i64: 1, 8, 32>}, {pipeline_mode = #tpu.pipeline_mode<synchronous>, transform_indices = @transform_1, window_bounds = array<i64: 1, 32>}, {pipeline_mode = #tpu.pipeline_mode<synchronous>, transform_indices = @transform_2, window_bounds = array<i64: 1, 32>}, {transform_indices = @transform_3, window_bounds = array<i64: 1, 8, 32>}]} {
    %c0 = arith.constant 0 : index
    %c0_0 = arith.constant 0 : index
    %c0_1 = arith.constant 0 : index
    %0 = vector.load %arg2[%c0, %c0_0, %c0_1] : memref<1x8x32xf32, #tpu.memory_space<vmem>>, vector<1x8x32xf32>
    %1 = vector.shape_cast %0 : vector<1x8x32xf32> to vector<8x32xf32>
    %c0_2 = arith.constant 0 : index
    %c0_3 = arith.constant 0 : index
    %2 = vector.load %arg3[%c0_2, %c0_3] : memref<1x32xf32, #tpu.memory_space<vmem>>, vector<1x32xf32>
    %3 = vector.shape_cast %2 : vector<1x32xf32> to vector<32xf32>
    %c0_4 = arith.constant 0 : index
    %c0_5 = arith.constant 0 : index
    %4 = vector.load %arg4[%c0_4, %c0_5] : memref<1x32xf32, #tpu.memory_space<vmem>>, vector<1x32xf32>
    %5 = vector.shape_cast %4 : vector<1x32xf32> to vector<32xf32>
    %cst = arith.constant dense<0.000000e+00> : vector<8xf32>
    %6 = vector.multi_reduction <add>, %1, %cst [1] : vector<8x32xf32> to vector<8xf32>
    %7 = vector.shape_cast %6 : vector<8xf32> to vector<8x1xf32>
    %cst_6 = arith.constant 3.200000e+01 : f32
    %8 = vector.broadcast %cst_6 : f32 to vector<8x1xf32>
    %9 = arith.divf %7, %8 : vector<8x1xf32>
    %10 = vector.broadcast %9 : vector<8x1xf32> to vector<8x32xf32>
    %11 = arith.subf %1, %10 : vector<8x32xf32>
    %12 = arith.mulf %11, %11 : vector<8x32xf32>
    %cst_7 = arith.constant dense<0.000000e+00> : vector<8xf32>
    %13 = vector.multi_reduction <add>, %12, %cst_7 [1] : vector<8x32xf32> to vector<8xf32>
    %14 = vector.shape_cast %13 : vector<8xf32> to vector<8x1xf32>
    %cst_8 = arith.constant 3.200000e+01 : f32
    %15 = vector.broadcast %cst_8 : f32 to vector<8x1xf32>
    %16 = arith.divf %14, %15 : vector<8x1xf32>
    %17 = vector.broadcast %9 : vector<8x1xf32> to vector<8x32xf32>
    %18 = arith.subf %1, %17 : vector<8x32xf32>
    %cst_9 = arith.constant 9.99999974E-6 : f32
    %19 = vector.broadcast %cst_9 : f32 to vector<8x1xf32>
    %20 = arith.addf %16, %19 : vector<8x1xf32>
    %21 = math.rsqrt %20 : vector<8x1xf32>
    %22 = vector.broadcast %21 : vector<8x1xf32> to vector<8x32xf32>
    %23 = arith.mulf %18, %22 : vector<8x32xf32>
    %24 = vector.shape_cast %3 : vector<32xf32> to vector<1x32xf32>
    %25 = vector.broadcast %24 : vector<1x32xf32> to vector<8x32xf32>
    %26 = arith.mulf %23, %25 : vector<8x32xf32>
    %27 = vector.shape_cast %5 : vector<32xf32> to vector<1x32xf32>
    %28 = vector.broadcast %27 : vector<1x32xf32> to vector<8x32xf32>
    %29 = arith.addf %26, %28 : vector<8x32xf32>
    %c0_10 = arith.constant 0 : index
    %c0_11 = arith.constant 0 : index
    %c0_12 = arith.constant 0 : index
    %30 = vector.load %arg5[%c0_10, %c0_11, %c0_12] : memref<1x8x32xf32, #tpu.memory_space<vmem>>, vector<1x8x32xf32>
    %31 = vector.shape_cast %30 : vector<1x8x32xf32> to vector<8x32xf32>
    %32 = vector.shape_cast %29 : vector<8x32xf32> to vector<1x8x32xf32>
    tpu.vector_store %arg5[%c0_10, %c0_11, %c0_12], %32 {strides = array<i32>} : memref<1x8x32xf32, #tpu.memory_space<vmem>>, vector<1x8x32xf32>,
    return
  }
  func.func @transform_0(%arg0: i32, %arg1: i32) -> (i32, i32, i32) {
    %c0_i32 = arith.constant 0 : i32
    %c0_i32_0 = arith.constant 0 : i32
    return %arg0, %arg1, %c0_i32 : i32, i32, i32
  }
  func.func @transform_1(%arg0: i32, %arg1: i32) -> (i32, i32) {
    %c0_i32 = arith.constant 0 : i32
    %c0_i32_0 = arith.constant 0 : i32
    %c0_i32_1 = arith.constant 0 : i32
    return %c0_i32, %c0_i32_0 : i32, i32
  }
  func.func @transform_2(%arg0: i32, %arg1: i32) -> (i32, i32) {
    %c0_i32 = arith.constant 0 : i32
    %c0_i32_0 = arith.constant 0 : i32
    %c0_i32_1 = arith.constant 0 : i32
    return %c0_i32, %c0_i32_0 : i32, i32
  }
  func.func @transform_3(%arg0: i32, %arg1: i32) -> (i32, i32, i32) {
    %c0_i32 = arith.constant 0 : i32
    %c0_i32_0 = arith.constant 0 : i32
    return %arg0, %arg1, %c0_i32 : i32, i32, i32
  }
}

module attributes {stable_mosaic.version = 11 : i64} {
  func.func @vocab_proj_kernel(%arg0: i32, %arg1: i32, %arg2: i32, %arg3: memref<1x8x32xf32, #tpu.memory_space<vmem>>, %arg4: memref<32x128xbf16, #tpu.memory_space<vmem>>, %arg5: memref<1x8x128xbf16, #tpu.memory_space<vmem>>) attributes {dimension_semantics = [#tpu.dimension_semantics<parallel>, #tpu.dimension_semantics<parallel>, #tpu.dimension_semantics<parallel>], iteration_bounds = array<i64: 2, 1, 1>, scalar_prefetch = 0 : i64, scratch_operands = 0 : i64, tpu.core_type = #tpu.core_type<tc>, window_params = [{transform_indices = @transform_0, window_bounds = array<i64: 1, 8, 32>}, {transform_indices = @transform_1, window_bounds = array<i64: 32, 128>}, {transform_indices = @transform_2, window_bounds = array<i64: 1, 8, 128>}]} {
    %c0 = arith.constant 0 : index
    %c0_0 = arith.constant 0 : index
    %c0_1 = arith.constant 0 : index
    %0 = vector.load %arg3[%c0, %c0_0, %c0_1] : memref<1x8x32xf32, #tpu.memory_space<vmem>>, vector<1x8x32xf32>
    %1 = vector.shape_cast %0 : vector<1x8x32xf32> to vector<8x32xf32>
    %2 = arith.truncf %1 : vector<8x32xf32> to vector<8x32xbf16>
    %c0_2 = arith.constant 0 : index
    %c0_3 = arith.constant 0 : index
    %3 = vector.load %arg4[%c0_2, %c0_3] : memref<32x128xbf16, #tpu.memory_space<vmem>>, vector<32x128xbf16>
    %cst = arith.constant dense<0.000000e+00> : vector<8x128xf32>
    %4 = tpu.matmul %2, %3, %cst {dimension_numbers = #tpu.dot_dimension_numbers<[1], [0], [0], [1], [0, 0, 1, 1], [], []>} : vector<8x32xbf16>, vector<32x128xbf16>, vector<8x128xf32> -> vector<8x128xf32>
    %5 = arith.truncf %4 : vector<8x128xf32> to vector<8x128xbf16>
    %c0_4 = arith.constant 0 : index
    %c0_5 = arith.constant 0 : index
    %c0_6 = arith.constant 0 : index
    %6 = vector.load %arg5[%c0_4, %c0_5, %c0_6] : memref<1x8x128xbf16, #tpu.memory_space<vmem>>, vector<1x8x128xbf16>
    %7 = vector.shape_cast %6 : vector<1x8x128xbf16> to vector<8x128xbf16>
    %8 = vector.shape_cast %5 : vector<8x128xbf16> to vector<1x8x128xbf16>
    tpu.vector_store %arg5[%c0_4, %c0_5, %c0_6], %8 {strides = array<i32>} : memref<1x8x128xbf16, #tpu.memory_space<vmem>>, vector<1x8x128xbf16>,
    return
  }
  func.func @transform_0(%arg0: i32, %arg1: i32, %arg2: i32) -> (i32, i32, i32) {
    %c0_i32 = arith.constant 0 : i32
    %c0_i32_0 = arith.constant 0 : i32
    return %arg0, %arg1, %c0_i32 : i32, i32, i32
  }
  func.func @transform_1(%arg0: i32, %arg1: i32, %arg2: i32) -> (i32, i32) {
    %c0_i32 = arith.constant 0 : i32
    %c0_i32_0 = arith.constant 0 : i32
    return %c0_i32, %arg2 : i32, i32
  }
  func.func @transform_2(%arg0: i32, %arg1: i32, %arg2: i32) -> (i32, i32, i32) {
    %c0_i32 = arith.constant 0 : i32
    return %arg0, %arg1, %arg2 : i32, i32, i32
  }
}

</mosaic_0001>

<llo_original>
// kernel: tpu_custom_call.1
$region0: #{tpu_custom_call.1}
  #allocation0 [shape = 'u32[]', space=smem, size = 0x4, offset = 0x4, fixed_abs, tag = 'smem constant byte address 0x4 - core index']
  #allocation1 [shape = 'u32[144,128]{1,0:T(1,128)}', space=vmem, size = 0x12000, scoped, tag = 'internal scratch']
  %s0 = inlined_call_operand.hbm [shape: f32[8,128], index: 0, kind: input, shape index: {}]
  %s1 = inlined_call_operand.hbm [shape: f32[8,128], index: 1, kind: output, shape index: {}]
  %s2 = sld [smem:[#allocation0]]
  $region41: #{tpu_custom_call.1} parent=0
    _
  %s4 = ssub.s32 1, %s2
  %s5 = scalar_select 0, %s4, %s2
  $region1: #{tpu_custom_call.1} parent=0
    #allocation2 [shape = 'u8[4096]{0}', space=vmem, size = 0x1000, scoped, tag = 'input window, operand 0, single buffered']
    #allocation3 [shape = 's32[2]{0}', space=sflag, size = 0x8, scoped, tag = 'scoped memory for tpu_custom_call.1']
    #allocation4 [shape = 's32[2]{0}', space=sflag, size = 0x8, scoped, tag = 'scoped memory for tpu_custom_call.1']
    #allocation5 [shape = 'u8[4096]{0}', space=vmem, size = 0x1000, scoped, tag = 'output window, operand 0, single buffered']
    %6 = vsyncpa [#allocation3], 0
    %7 = vsyncpa [#allocation4], 0
    loop: start=0, step=1, limit=4
    $region2: #{tpu_custom_call.1} parent=1 // loop_pre_header
      _
    $region3: #{tpu_custom_call.1} parent=1 // loop_header
      %s9 = sphi 0, %s13
      %p10 = scmp.ge.s32.totalorder %s9, 4
      %s17 = sphi 0, %s17
      %s19 = sphi 0, %s17
      %s20 = sphi 0, %s19
      %s34 = sphi 0, %s20
      %s38 = sphi 0, %s38
      %s40 = sphi 0, %s38
      %s41 = sphi 0, %s40
      %s55 = sphi 0, %s41
    $region4: #{tpu_custom_call.1} parent=1 // loop_header_branch
      %12 = sbr.rel (%p10) target = $region8
    $region5: #{tpu_custom_call.1} parent=1 // loop_body
      %s14 = ssub.s32 %s9, 1
      %s15 = ssub.s32 %s9, 2
      %s16 = sadd.s32 %s9, 1
      %s18 = sadd.s32 %s17, 1
      %p21 = scmp.eq.s32.totalorder %s9, 1
      %p22 = scmp.ne.s32.totalorder %s17, %s19
      %p23 = scmp.eq.s32.totalorder %s9, 0
      %p24 = por %p22, %p23
      %p25 = scmp.ne.s32.totalorder %s17, %s19
      %p26 = scmp.eq.s32.totalorder %s14, 1
      %p27 = por %p25, %p26
      %p28 = scmp.ne.s32.totalorder %s19, %s20
      %p29 = scmp.eq.s32.totalorder %s14, 0
      %p30 = por %p28, %p29
      %p31 = scmp.ne.s32.totalorder %s19, %s20
      %p32 = scmp.eq.s32.totalorder %s15, 1
      %p33 = por %p31, %p32
      %p35 = scmp.ne.s32.totalorder %s20, %s34
      %p36 = scmp.eq.s32.totalorder %s15, 0
      %p37 = por %p35, %p36
      %s39 = sadd.s32 %s38, 1
      %p42 = scmp.eq.s32.totalorder %s9, 1
      %p43 = scmp.ne.s32.totalorder %s38, %s40
      %p44 = scmp.eq.s32.totalorder %s9, 0
      %p45 = por %p43, %p44
      %p46 = scmp.ne.s32.totalorder %s38, %s40
      %p47 = scmp.eq.s32.totalorder %s14, 1
      %p48 = por %p46, %p47
      %p49 = scmp.ne.s32.totalorder %s40, %s41
      %p50 = scmp.eq.s32.totalorder %s14, 0
      %p51 = por %p49, %p50
      %p52 = scmp.ne.s32.totalorder %s40, %s41
      %p53 = scmp.eq.s32.totalorder %s15, 1
      %p54 = por %p52, %p53
      %p56 = scmp.ne.s32.totalorder %s41, %s55
      %p57 = scmp.eq.s32.totalorder %s15, 0
      %p58 = por %p56, %p57
      %p59 = scmp.le.s32.totalorder 1, %s9
      %p60 = scmp.lt.s32.totalorder %s9, 3
      %p61 = pnand %p59, %p60
      %p62 = pneg %p61
      // Predicated region
      $region9: #{tpu_custom_call.1} parent=5 // pred_check
        _
      $region10: #{tpu_custom_call.1} parent=5 // pred_check_branch
        %64 = sbr.rel (%p61) target = $region12
      $region11: #{tpu_custom_call.1} parent=5 // pred_region
        %s65 = ssub.s32 %s9, 1
        // Predicated region
        $region13: #{tpu_custom_call.1} parent=11 // pred_check
          %p66 = pneg %p30
        $region14: #{tpu_custom_call.1} parent=11 // pred_check_branch
          %68 = sbr.rel (%p66) target = $region16
        $region15: #{tpu_custom_call.1} parent=11 // pred_region
          %s70 = ssub.s32 128, 128
          %71 = vsyncadd [#allocation3], %s70
          %s73 = sshll.u32 [#allocation2], 4
          %s74 = int_to_ptr.vmem [resolvable:$true] %s73
          %76 = dma.hbm_to_vmem [thread:$0]  %s0, 128, %s74, [#allocation3]
        $region16: #{tpu_custom_call.1} parent=11 // pred_fallthru
          _
      $region12: #{tpu_custom_call.1} parent=5 // pred_fallthru
        _
      %p77 = scmp.lt.s32.totalorder %s9, 2
      // Predicated region
      $region17: #{tpu_custom_call.1} parent=5 // pred_check
        %p78 = pneg %p77
      $region18: #{tpu_custom_call.1} parent=5 // pred_check_branch
        %80 = sbr.rel (%p78) target = $region20
      $region19: #{tpu_custom_call.1} parent=5 // pred_region
        _
      $region20: #{tpu_custom_call.1} parent=5 // pred_fallthru
        _
      %p81 = scmp.le.s32.totalorder 1, %s9
      %p82 = scmp.lt.s32.totalorder %s9, 3
      %p83 = pnand %p81, %p82
      %p84 = pneg %p83
      // Predicated region
      $region21: #{tpu_custom_call.1} parent=5 // pred_check
        _
      $region22: #{tpu_custom_call.1} parent=5 // pred_check_branch
        %86 = sbr.rel (%p83) target = $region24
      $region23: #{tpu_custom_call.1} parent=5 // pred_region
        %s87 = ssub.s32 %s9, 1
        // Predicated region
        $region25: #{tpu_custom_call.1} parent=23 // pred_check
          %p88 = pneg %p30
        $region26: #{tpu_custom_call.1} parent=23 // pred_check_branch
          %90 = sbr.rel (%p88) target = $region28
        $region27: #{tpu_custom_call.1} parent=23 // pred_region
          %91 = dma.done [#allocation3], 128
        $region28: #{tpu_custom_call.1} parent=23 // pred_fallthru
          _
        %p92 = pneg %p30
        %p93 = pneg %p27
        %p94 = pneg %p51
        %p95 = pneg %p48
        %v96 = vld [vmem:[#allocation2] sm:$0xff]
        %v97 = vadd.f32 %v96, 1.0
        %98 = vst [vmem:[#allocation5] sm:$0xff] %v97
        // Predicated region
        $region29: #{tpu_custom_call.1} parent=23 // pred_check
          %p99 = pneg %p48
        $region30: #{tpu_custom_call.1} parent=23 // pred_check_branch
          %101 = sbr.rel (%p99) target = $region32
        $region31: #{tpu_custom_call.1} parent=23 // pred_region
          %s103 = ssub.s32 128, 128
          %104 = vsyncadd [#allocation4], %s103
          %s106 = sshll.u32 [#allocation5], 4
          %s107 = int_to_ptr.vmem [resolvable:$true] %s106
          %109 = dma.vmem_to_hbm [thread:$0]  %s107, 128, %s1, [#allocation4]
        $region32: #{tpu_custom_call.1} parent=23 // pred_fallthru
          _
        // Predicated region
        $region33: #{tpu_custom_call.1} parent=23 // pred_check
          %p110 = pneg %p48
        $region34: #{tpu_custom_call.1} parent=23 // pred_check_branch
          %112 = sbr.rel (%p110) target = $region36
        $region35: #{tpu_custom_call.1} parent=23 // pred_region
          %113 = dma.done [#allocation4], 128
        $region36: #{tpu_custom_call.1} parent=23 // pred_fallthru
          _
      $region24: #{tpu_custom_call.1} parent=5 // pred_fallthru
        _
      %p114 = scmp.le.s32.totalorder 2, %s9
      // Predicated region
      $region37: #{tpu_custom_call.1} parent=5 // pred_check
        %p115 = pneg %p114
      $region38: #{tpu_custom_call.1} parent=5 // pred_check_branch
        %117 = sbr.rel (%p115) target = $region40
      $region39: #{tpu_custom_call.1} parent=5 // pred_region
        %s118 = ssub.s32 %s9, 2
      $region40: #{tpu_custom_call.1} parent=5 // pred_fallthru
        _
    $region6: #{tpu_custom_call.1} parent=1 // loop_footer
      %s13 = sadd.s32 1, %s9
    $region7: #{tpu_custom_call.1} parent=1 // loop_footer_branch
      %8 = sbr.rel target = $region3
    $region8: #{tpu_custom_call.1} parent=1 // loop_exit
      _
    %119 = vsyncpa [#allocation3], 1
    %s120 = scalar_lea.sflag [#allocation3], 1
    %121 = vsyncpa %s120, 1
    %122 = vsyncpa [#allocation4], 1
    %s123 = scalar_lea.sflag [#allocation4], 1
    %124 = vsyncpa %s123, 1

// kernel: transformer_forward.10
$region0: #{transformer_forward.10}
  #allocation0 [shape = 'u32[]', space=smem, size = 0x4, offset = 0x4, fixed_abs, tag = 'smem constant byte address 0x4 - core index']
  #allocation1 [shape = 'u32[144,128]{1,0:T(1,128)}', space=vmem, size = 0x12000, scoped, tag = 'internal scratch']
  #allocation2 [shape = 'bf16[8,32]{1,0:T(8,128)(2,1)}', space=vmem, size = 0x800, scoped, tag = 'scratch operand']
  #allocation3 [shape = 'f32[8,32]{1,0:T(8,128)}', space=vmem, size = 0x1000, scoped, tag = 'scratch operand']
  %s0 = inlined_call_operand.vmem [shape: f32[2,8,32], index: 0, kind: input, shape index: {}]
  %s1 = inlined_call_operand.vmem [shape: f32[1,32], index: 1, kind: input, shape index: {}]
  %s2 = inlined_call_operand.vmem [shape: f32[1,32], index: 2, kind: input, shape index: {}]
  %s3 = inlined_call_operand.vmem [shape: bf16[32,64], index: 3, kind: input, shape index: {}]
  %s4 = inlined_call_operand.vmem [shape: f32[1,64], index: 4, kind: input, shape index: {}]
  %s5 = inlined_call_operand.vmem [shape: bf16[64,32], index: 5, kind: input, shape index: {}]
  %s6 = inlined_call_operand.vmem [shape: f32[1,32], index: 6, kind: input, shape index: {}]
  %s7 = inlined_call_operand.vmem [shape: f32[2,8,32], index: 7, kind: output, shape index: {}]
  %s8 = sld [smem:[#allocation0]]
  $region69: #{transformer_forward.10} parent=0
    _
  %s10 = ssub.s32 1, %s8
  %s11 = scalar_select 0, %s10, %s8
  loop: start=0, step=1, limit=4
  $region2: #{transformer_forward.10} parent=0 // loop_pre_header
    _
  $region3: #{transformer_forward.10} parent=0 // loop_header
    %s13 = sphi 0, %s17
    %p14 = scmp.ge.s32.totalorder %s13, 4
    %s20 = sphi 0, %s39
    %s21 = sphi 0, %s35
    %s22 = sphi 0, %s31
    %s23 = sphi 0, %s20
    %s24 = sphi 0, %s21
    %s25 = sphi 0, %s22
    %s26 = sphi 0, %s23
    %s27 = sphi 0, %s24
    %s28 = sphi 0, %s25
    %s44 = sphi 0, %s46
    %s47 = sphi 0, %s44
    %s48 = sphi 0, %s47
    %s64 = sphi 0, %s48
    %s68 = sphi 0, %s68
    %s70 = sphi 0, %s68
    %s71 = sphi 0, %s70
    %s85 = sphi 0, %s71
    %s89 = sphi 0, %s89
    %s91 = sphi 0, %s89
    %s92 = sphi 0, %s91
    %s106 = sphi 0, %s92
    %s112 = sphi 0, %s114
    %s115 = sphi 0, %s112
    %s116 = sphi 0, %s115
    %s132 = sphi 0, %s116
    %s138 = sphi 0, %s140
    %s141 = sphi 0, %s138
    %s142 = sphi 0, %s141
    %s158 = sphi 0, %s142
    %s164 = sphi 0, %s166
    %s167 = sphi 0, %s164
    %s168 = sphi 0, %s167
    %s184 = sphi 0, %s168
    %s188 = sphi 0, %s188
    %s190 = sphi 0, %s188
    %s191 = sphi 0, %s190
    %s205 = sphi 0, %s191
    %s213 = sphi 0, %s215
    %s216 = sphi 0, %s213
    %s217 = sphi 0, %s216
    %s233 = sphi 0, %s217
  $region4: #{transformer_forward.10} parent=0 // loop_header_branch
    %16 = sbr.rel (%p14) target = $region8
  $region5: #{transformer_forward.10} parent=0 // loop_body
    %s18 = ssub.s32 %s13, 1
    %s19 = ssub.s32 %s13, 2
    %s29 = sadd.s32 1, %s22
    %p30 = scmp.ge.s32.totalorder %s29, 1
    %s31 = scalar_select %p30, 0, %s29
    %s32 = sadd.s32 1, %s21
    %s33 = scalar_select %p30, %s32, %s21
    %p34 = scmp.ge.s32.totalorder %s33, 1
    %s35 = scalar_select %p34, 0, %s33
    %s36 = sadd.s32 1, %s20
    %s37 = scalar_select %p34, %s36, %s20
    %p38 = scmp.ge.s32.totalorder %s37, 2
    %s39 = scalar_select %p38, 0, %s37
    %s40 = ssub.s32 %s20, %s39
    %s41 = ssub.s32 %s21, %s35
    %s42 = sor.u32 %s40, %s41
    %p43 = scmp.eq.s32.totalorder %s42, 0
    %s45 = sadd.s32 %s44, 1
    %s46 = scalar_select %p43, %s44, %s45
    %p49 = pneg %p43
    %p50 = scmp.eq.s32.totalorder %s13, 1
    %p51 = por %p49, %p50
    %p52 = scmp.ne.s32.totalorder %s44, %s47
    %p53 = scmp.eq.s32.totalorder %s13, 0
    %p54 = por %p52, %p53
    %p55 = scmp.ne.s32.totalorder %s44, %s47
    %p56 = scmp.eq.s32.totalorder %s18, 1
    %p57 = por %p55, %p56
    %p58 = scmp.ne.s32.totalorder %s47, %s48
    %p59 = scmp.eq.s32.totalorder %s18, 0
    %p60 = por %p58, %p59
    %p61 = scmp.ne.s32.totalorder %s47, %s48
    %p62 = scmp.eq.s32.totalorder %s19, 1
    %p63 = por %p61, %p62
    %p65 = scmp.ne.s32.totalorder %s48, %s64
    %p66 = scmp.eq.s32.totalorder %s19, 0
    %p67 = por %p65, %p66
    %s69 = sadd.s32 %s68, 1
    %p72 = scmp.eq.s32.totalorder %s13, 1
    %p73 = scmp.ne.s32.totalorder %s68, %s70
    %p74 = scmp.eq.s32.totalorder %s13, 0
    %p75 = por %p73, %p74
    %p76 = scmp.ne.s32.totalorder %s68, %s70
    %p77 = scmp.eq.s32.totalorder %s18, 1
    %p78 = por %p76, %p77
    %p79 = scmp.ne.s32.totalorder %s70, %s71
    %p80 = scmp.eq.s32.totalorder %s18, 0
    %p81 = por %p79, %p80
    %p82 = scmp.ne.s32.totalorder %s70, %s71
    %p83 = scmp.eq.s32.totalorder %s19, 1
    %p84 = por %p82, %p83
    %p86 = scmp.ne.s32.totalorder %s71, %s85
    %p87 = scmp.eq.s32.totalorder %s19, 0
    %p88 = por %p86, %p87
    %s90 = sadd.s32 %s89, 1
    %p93 = scmp.eq.s32.totalorder %s13, 1
    %p94 = scmp.ne.s32.totalorder %s89, %s91
    %p95 = scmp.eq.s32.totalorder %s13, 0
    %p96 = por %p94, %p95
    %p97 = scmp.ne.s32.totalorder %s89, %s91
    %p98 = scmp.eq.s32.totalorder %s18, 1
    %p99 = por %p97, %p98
    %p100 = scmp.ne.s32.totalorder %s91, %s92
    %p101 = scmp.eq.s32.totalorder %s18, 0
    %p102 = por %p100, %p101
    %p103 = scmp.ne.s32.totalorder %s91, %s92
    %p104 = scmp.eq.s32.totalorder %s19, 1
    %p105 = por %p103, %p104
    %p107 = scmp.ne.s32.totalorder %s92, %s106
    %p108 = scmp.eq.s32.totalorder %s19, 0
    %p109 = por %p107, %p108
    %s110 = ssub.s32 %s22, %s31
    %p111 = scmp.eq.s32.totalorder %s110, 0
    %s113 = sadd.s32 %s112, 1
    %s114 = scalar_select %p111, %s112, %s113
    %p117 = pneg %p111
    %p118 = scmp.eq.s32.totalorder %s13, 1
    %p119 = por %p117, %p118
    %p120 = scmp.ne.s32.totalorder %s112, %s115
    %p121 = scmp.eq.s32.totalorder %s13, 0
    %p122 = por %p120, %p121
    %p123 = scmp.ne.s32.totalorder %s112, %s115
    %p124 = scmp.eq.s32.totalorder %s18, 1
    %p125 = por %p123, %p124
    %p126 = scmp.ne.s32.totalorder %s115, %s116
    %p127 = scmp.eq.s32.totalorder %s18, 0
    %p128 = por %p126, %p127
    %p129 = scmp.ne.s32.totalorder %s115, %s116
    %p130 = scmp.eq.s32.totalorder %s19, 1
    %p131 = por %p129, %p130
    %p133 = scmp.ne.s32.totalorder %s116, %s132
    %p134 = scmp.eq.s32.totalorder %s19, 0
    %p135 = por %p133, %p134
    %s136 = ssub.s32 %s22, %s31
    %p137 = scmp.eq.s32.totalorder %s136, 0
    %s139 = sadd.s32 %s138, 1
    %s140 = scalar_select %p137, %s138, %s139
    %p143 = pneg %p137
    %p144 = scmp.eq.s32.totalorder %s13, 1
    %p145 = por %p143, %p144
    %p146 = scmp.ne.s32.totalorder %s138, %s141
    %p147 = scmp.eq.s32.totalorder %s13, 0
    %p148 = por %p146, %p147
    %p149 = scmp.ne.s32.totalorder %s138, %s141
    %p150 = scmp.eq.s32.totalorder %s18, 1
    %p151 = por %p149, %p150
    %p152 = scmp.ne.s32.totalorder %s141, %s142
    %p153 = scmp.eq.s32.totalorder %s18, 0
    %p154 = por %p152, %p153
    %p155 = scmp.ne.s32.totalorder %s141, %s142
    %p156 = scmp.eq.s32.totalorder %s19, 1
    %p157 = por %p155, %p156
    %p159 = scmp.ne.s32.totalorder %s142, %s158
    %p160 = scmp.eq.s32.totalorder %s19, 0
    %p161 = por %p159, %p160
    %s162 = ssub.s32 %s22, %s31
    %p163 = scmp.eq.s32.totalorder %s162, 0
    %s165 = sadd.s32 %s164, 1
    %s166 = scalar_select %p163, %s164, %s165
    %p169 = pneg %p163
    %p170 = scmp.eq.s32.totalorder %s13, 1
    %p171 = por %p169, %p170
    %p172 = scmp.ne.s32.totalorder %s164, %s167
    %p173 = scmp.eq.s32.totalorder %s13, 0
    %p174 = por %p172, %p173
    %p175 = scmp.ne.s32.totalorder %s164, %s167
    %p176 = scmp.eq.s32.totalorder %s18, 1
    %p177 = por %p175, %p176
    %p178 = scmp.ne.s32.totalorder %s167, %s168
    %p179 = scmp.eq.s32.totalorder %s18, 0
    %p180 = por %p178, %p179
    %p181 = scmp.ne.s32.totalorder %s167, %s168
    %p182 = scmp.eq.s32.totalorder %s19, 1
    %p183 = por %p181, %p182
    %p185 = scmp.ne.s32.totalorder %s168, %s184
    %p186 = scmp.eq.s32.totalorder %s19, 0
    %p187 = por %p185, %p186
    %s189 = sadd.s32 %s188, 1
    %p192 = scmp.eq.s32.totalorder %s13, 1
    %p193 = scmp.ne.s32.totalorder %s188, %s190
    %p194 = scmp.eq.s32.totalorder %s13, 0
    %p195 = por %p193, %p194
    %p196 = scmp.ne.s32.totalorder %s188, %s190
    %p197 = scmp.eq.s32.totalorder %s18, 1
    %p198 = por %p196, %p197
    %p199 = scmp.ne.s32.totalorder %s190, %s191
    %p200 = scmp.eq.s32.totalorder %s18, 0
    %p201 = por %p199, %p200
    %p202 = scmp.ne.s32.totalorder %s190, %s191
    %p203 = scmp.eq.s32.totalorder %s19, 1
    %p204 = por %p202, %p203
    %p206 = scmp.ne.s32.totalorder %s191, %s205
    %p207 = scmp.eq.s32.totalorder %s19, 0
    %p208 = por %p206, %p207
    %s209 = ssub.s32 %s20, %s39
    %s210 = ssub.s32 %s21, %s35
    %s211 = sor.u32 %s209, %s210
    %p212 = scmp.eq.s32.totalorder %s211, 0
    %s214 = sadd.s32 %s213, 1
    %s215 = scalar_select %p212, %s213, %s214
    %p218 = pneg %p212
    %p219 = scmp.eq.s32.totalorder %s13, 1
    %p220 = por %p218, %p219
    %p221 = scmp.ne.s32.totalorder %s213, %s216
    %p222 = scmp.eq.s32.totalorder %s13, 0
    %p223 = por %p221, %p222
    %p224 = scmp.ne.s32.totalorder %s213, %s216
    %p225 = scmp.eq.s32.totalorder %s18, 1
    %p226 = por %p224, %p225
    %p227 = scmp.ne.s32.totalorder %s216, %s217
    %p228 = scmp.eq.s32.totalorder %s18, 0
    %p229 = por %p227, %p228
    %p230 = scmp.ne.s32.totalorder %s216, %s217
    %p231 = scmp.eq.s32.totalorder %s19, 1
    %p232 = por %p230, %p231
    %p234 = scmp.ne.s32.totalorder %s217, %s233
    %p235 = scmp.eq.s32.totalorder %s19, 0
    %p236 = por %p234, %p235
    %p237 = scmp.le.s32.totalorder 1, %s13
    %p238 = scmp.lt.s32.totalorder %s13, 3
    %p239 = pnand %p237, %p238
    %p240 = pneg %p239
    // Predicated region
    $region9: #{transformer_forward.10} parent=5 // pred_check
      _
    $region10: #{transformer_forward.10} parent=5 // pred_check_branch
      %242 = sbr.rel (%p239) target = $region12
    $region11: #{transformer_forward.10} parent=5 // pred_region
      %s243 = ssub.s32 %s13, 1
      // Predicated region
      $region13: #{transformer_forward.10} parent=11 // pred_check
        %p244 = pneg %p81
      $region14: #{transformer_forward.10} parent=11 // pred_check_branch
        %246 = sbr.rel (%p244) target = $region16
      $region15: #{transformer_forward.10} parent=11 // pred_region
        _
      $region16: #{transformer_forward.10} parent=11 // pred_fallthru
        _
      // Predicated region
      $region17: #{transformer_forward.10} parent=11 // pred_check
        %p247 = pneg %p102
      $region18: #{transformer_forward.10} parent=11 // pred_check_branch
        %249 = sbr.rel (%p247) target = $region20
      $region19: #{transformer_forward.10} parent=11 // pred_region
        _
      $region20: #{transformer_forward.10} parent=11 // pred_fallthru
        _
      // Predicated region
      $region21: #{transformer_forward.10} parent=11 // pred_check
        %p250 = pneg %p128
      $region22: #{transformer_forward.10} parent=11 // pred_check_branch
        %252 = sbr.rel (%p250) target = $region24
      $region23: #{transformer_forward.10} parent=11 // pred_region
        %p253 = scmp.lt.s32.totalorder %s25, 0
        %s254 = scalar_select %p253, %s25, 0
        %s255 = smul.addr %s254, 4
        %s256 = scalar_lea.vmem %s3, %s255
      $region24: #{transformer_forward.10} parent=11 // pred_fallthru
        _
      // Predicated region
      $region25: #{transformer_forward.10} parent=11 // pred_check
        %p257 = pneg %p154
      $region26: #{transformer_forward.10} parent=11 // pred_check_branch
        %259 = sbr.rel (%p257) target = $region28
      $region27: #{transformer_forward.10} parent=11 // pred_region
        %p260 = scmp.lt.s32.totalorder %s25, 0
        %s261 = scalar_select %p260, %s25, 0
        %s262 = scalar_lea.vmem %s4, %s261
      $region28: #{transformer_forward.10} parent=11 // pred_fallthru
        _
      // Predicated region
      $region29: #{transformer_forward.10} parent=11 // pred_check
        %p263 = pneg %p180
      $region30: #{transformer_forward.10} parent=11 // pred_check_branch
        %265 = sbr.rel (%p263) target = $region32
      $region31: #{transformer_forward.10} parent=11 // pred_region
        %s266 = smul.u32 8, %s25
        %p267 = scmp.lt.s32.totalorder %s266, 7
        %s268 = scalar_select %p267, %s266, 7
        %s269 = smul.addr %s268, 4
        %s270 = scalar_lea.vmem %s5, %s269
        %s271 = smul.u32 8, %s25
      $region32: #{transformer_forward.10} parent=11 // pred_fallthru
        _
      // Predicated region
      $region33: #{transformer_forward.10} parent=11 // pred_check
        %p272 = pneg %p201
      $region34: #{transformer_forward.10} parent=11 // pred_check_branch
        %274 = sbr.rel (%p272) target = $region36
      $region35: #{transformer_forward.10} parent=11 // pred_region
        _
      $region36: #{transformer_forward.10} parent=11 // pred_fallthru
        _
    $region12: #{transformer_forward.10} parent=5 // pred_fallthru
      _
    %p275 = scmp.lt.s32.totalorder %s13, 2
    // Predicated region
    $region37: #{transformer_forward.10} parent=5 // pred_check
      %p276 = pneg %p275
    $region38: #{transformer_forward.10} parent=5 // pred_check_branch
      %278 = sbr.rel (%p276) target = $region40
    $region39: #{transformer_forward.10} parent=5 // pred_region
      // Predicated region
      $region41: #{transformer_forward.10} parent=39 // pred_check
        %p279 = pneg %p54
      $region42: #{transformer_forward.10} parent=39 // pred_check_branch
        %281 = sbr.rel (%p279) target = $region44
      $region43: #{transformer_forward.10} parent=39 // pred_region
        %p282 = scmp.lt.s32.totalorder %s20, 1
        %s283 = scalar_select %p282, %s20, 1
        %p284 = scmp.lt.s32.totalorder %s21, 0
        %s285 = scalar_select %p284, %s21, 0
        %s286 = sadd.s32 %s285, %s283
        %s287 = smul.addr %s286, 8
        %s288 = scalar_lea.vmem %s0, %s287
      $region44: #{transformer_forward.10} parent=39 // pred_fallthru
        _
    $region40: #{transformer_forward.10} parent=5 // pred_fallthru
      _
    %p289 = scmp.le.s32.totalorder 1, %s13
    %p290 = scmp.lt.s32.totalorder %s13, 3
    %p291 = pnand %p289, %p290
    %p292 = pneg %p291
    // Predicated region
    $region45: #{transformer_forward.10} parent=5 // pred_check
      _
    $region46: #{transformer_forward.10} parent=5 // pred_check_branch
      %294 = sbr.rel (%p291) target = $region48
    $region47: #{transformer_forward.10} parent=5 // pred_region
      %s295 = ssub.s32 %s13, 1
      %p296 = scmp.lt.s32.totalorder %s23, 1
      %s297 = scalar_select %p296, %s23, 1
      %p298 = scmp.lt.s32.totalorder %s24, 0
      %s299 = scalar_select %p298, %s24, 0
      %s300 = sadd.s32 %s299, %s297
      %s301 = smul.addr %s300, 8
      %s302 = scalar_lea.vmem %s0, %s301
      %p303 = pneg %p60
      %p304 = pneg %p57
      %p305 = pneg %p81
      %p306 = pneg %p78
      %p307 = pneg %p102
      %p308 = pneg %p99
      %p309 = scmp.lt.s32.totalorder %s25, 0
      %s310 = scalar_select %p309, %s25, 0
      %s311 = smul.addr %s310, 4
      %s312 = scalar_lea.vmem %s3, %s311
      %p313 = pneg %p128
      %p314 = pneg %p125
      %p315 = scmp.lt.s32.totalorder %s25, 0
      %s316 = scalar_select %p315, %s25, 0
      %s317 = scalar_lea.vmem %s4, %s316
      %p318 = pneg %p154
      %p319 = pneg %p151
      %s320 = smul.u32 8, %s25
      %p321 = scmp.lt.s32.totalorder %s320, 7
      %s322 = scalar_select %p321, %s320, 7
      %s323 = smul.addr %s322, 4
      %s324 = scalar_lea.vmem %s5, %s323
      %p325 = pneg %p180
      %p326 = pneg %p177
      %p327 = pneg %p201
      %p328 = pneg %p198
      %p329 = pneg %p229
      %p330 = pneg %p226
      %p331 = scmp.lt.s32.totalorder %s23, 1
      %s332 = scalar_select %p331, %s23, 1
      %p333 = scmp.lt.s32.totalorder %s24, 0
      %s334 = scalar_select %p333, %s24, 0
      %s335 = sadd.s32 %s334, %s332
      %s336 = smul.addr %s335, 8
      %s337 = scalar_lea.vmem %s7, %s336
      %p338 = scmp.lt.s32.totalorder %s23, 1
      %s339 = scalar_select %p338, %s23, 1
      %p340 = scmp.lt.s32.totalorder %s24, 0
      %s341 = scalar_select %p340, %s24, 0
      %s342 = sadd.s32 %s341, %s339
      %s343 = smul.addr %s342, 8
      %s344 = scalar_lea.vmem %s0, %s343
      %p345 = scmp.lt.s32.totalorder %s25, 0
      %s346 = scalar_select %p345, %s25, 0
      %s347 = smul.addr %s346, 4
      %s348 = scalar_lea.vmem %s3, %s347
      %p349 = scmp.lt.s32.totalorder %s25, 0
      %s350 = scalar_select %p349, %s25, 0
      %s351 = scalar_lea.vmem %s4, %s350
      %s352 = smul.u32 8, %s25
      %p353 = scmp.lt.s32.totalorder %s352, 7
      %s354 = scalar_select %p353, %s352, 7
      %s355 = smul.addr %s354, 4
      %s356 = scalar_lea.vmem %s5, %s355
      %s357 = smul.u32 8, %s25
      %p358 = scmp.lt.s32.totalorder %s23, 1
      %s359 = scalar_select %p358, %s23, 1
      %p360 = scmp.lt.s32.totalorder %s24, 0
      %s361 = scalar_select %p360, %s24, 0
      %s362 = sadd.s32 %s361, %s359
      %s363 = smul.addr %s362, 8
      %s364 = scalar_lea.vmem %s7, %s363
      %p366 = scmp.eq.s32.totalorder %s25, 0
      // Predicated region
      $region49: #{transformer_forward.10} parent=47 // pred_check
        %p367 = pneg %p366
      $region50: #{transformer_forward.10} parent=47 // pred_check_branch
        %369 = sbr.rel (%p367) target = $region52
      $region51: #{transformer_forward.10} parent=47 // pred_region
        %v370 = vld [vmem:[%s344] sm:$0xff]
        %v371 = vld [vmem:[%s1] sm:$0x1]
        %v372 = vld [vmem:[%s2] sm:$0x1]
        %vm373 = vcmask 261120
        %v374 = vsel %vm373, %v370, 0.0
        %375 = vadd.xlane.f32.xlu0 %v374
        %v376 = vpop.xlane.xlu0 %375
        %v377 = vrcp.pop 32.0
        %v378 = vmul.f32 %v376, %v377
        %v379 = vsub.f32 %v370, %v378
        %v380 = vmul.f32 %v379, %v379
        %v381 = vsel %vm373, %v380, 0.0
        %382 = vadd.xlane.f32.xlu0 %v381
        %v383 = vpop.xlane.xlu0 %382
        %v384 = vmul.f32 %v383, %v377
        %v385 = vadd.f32 %v384, 1e-05
        %v386 = vrsqrt.pop %v385
        %v387 = vmul.f32 %v379, %v386
        %v389 = vlaneseq
        %v390 = vshrl.u32 %v389, 7
        %v391 = vsub.s32 0, %v390
        %v392 = vrot.slane %v371, %v391
        %v394 = vmul.f32 %v387, %v392
        %v396 = vlaneseq
        %v397 = vshrl.u32 %v396, 7
        %v398 = vsub.s32 0, %v397
        %v399 = vrot.slane %v372, %v398
        %v401 = vadd.f32 %v394, %v399
        %v402 = vpack.c.bf16 %v401, %v401
        %vm403 = vcmask 257024
        %404 = vst.msk [vmem:[#allocation2] sm:$0xf] %vm403, %v402
        %405 = vst.msk [vmem:[#allocation3] sm:$0xff] %vm373, 0.0
      $region52: #{transformer_forward.10} parent=47 // pred_fallthru
        _
      %v406 = vld [vmem:[#allocation2] sm:$0xf]
      %v407 = vld [vmem:[%s348] sm:$0xf]
      %v408 = vld [vmem:[%s348 + $0x4] sm:$0xf]
      %v409 = vld [vmem:[%s348 + $0x8] sm:$0xf]
      %v410 = vld [vmem:[%s348 + $0xc] sm:$0xf]
      %v411 = vld [vmem:[%s351] sm:$0x1]
      %v413 = vlaneseq
      %v414 = vshrl.u32 %v413, 7
      %v415 = vsub.s32 0, %v414
      %v416 = vrot.slane %v411, %v415
      %v422 = vunpack.c.l.b16 %v407
      %v423 = vunpack.c.l.b16 %v408
      %v424 = vunpack.c.l.b16 %v409
      %v425 = vunpack.c.l.b16 %v410
      %v426 = vpack.c.b16 %v423, %v422
      %v427 = vpack.c.b16 %v425, %v424
      %vm430 = vcmask 261120
      %v432 = vsel %vm430, %v406, 0
      %434 = vmatprep.subr.bf16.mxu0 0
      %435 = vmatpush1.bf16.msra.mxu0 0
      %436 = vmatprep.subr.bf16.mxu0 0
      %437 = vmatpush1.bf16.msra.mxu0 0
      %438 = vmatprep.subr.bf16.mxu0 0
      %439 = vmatpush1.bf16.msra.mxu0 0
      %440 = vmatprep.subr.bf16.mxu0 0
      %441 = vmatpush1.bf16.msra.mxu0 0
      %442 = vmatprep.subr.bf16.mxu0 0
      %443 = vmatpush1.bf16.msra.mxu0 0
      %444 = vmatprep.subr.bf16.mxu0 0
      %445 = vmatpush1.bf16.msra.mxu0 0
      %446 = vmatprep.subr.bf16.mxu0 0
      %447 = vmatpush1.bf16.msra.mxu0 %v427
      %448 = vmatprep.subr.bf16.mxu0 0
      %449 = vmatpush1.bf16.msra.mxu0 %v426
      %450 = vmatprep.subr.bf16.mxu0 0
      %451 = vmatpush2.bf16.msra.mxu0 0
      %452 = vmatprep.subr.bf16.mxu0 0
      %453 = vmatpush2.bf16.msra.mxu0 0
      %454 = vmatprep.subr.bf16.mxu0 0
      %455 = vmatpush2.bf16.msra.mxu0 0
      %456 = vmatprep.subr.bf16.mxu0 0
      %457 = vmatpush2.bf16.msra.mxu0 0
      %458 = vmatprep.subr.bf16.mxu0 0
      %459 = vmatpush2.bf16.msra.mxu0 0
      %460 = vmatprep.subr.bf16.mxu0 0
      %461 = vmatpush2.bf16.msra.mxu0 0
      %462 = vmatprep.subr.bf16.mxu0 0
      %463 = vmatpush2.bf16.msra.mxu0 0
      %464 = vmatprep.subr.bf16.mxu0 0
      %465 = vmatpush2.bf16.msra.mxu0 0
      %466 = vmatprep.mubr.bf16.mxu0 0
      %467 = vmatmul.mubr.bf16.gmra.mxu0 %v432
      %v468 = vpop.f32.mrf.mxu0
      %v469 = vadd.f32 %v416, %v468
      %v470 = vpop.f32.mrf.mxu0
      %v471 = vpop.f32.mrf.mxu0
      %v472 = vpop.f32.mrf.mxu0
      %473 = vdwg.mxu0
      %v474 = vmul.f32 %v469, %v469
      %v475 = vmul.f32 %v469, %v474
      %v476 = vmul.f32 %v475, 0.044715
      %v477 = vadd.f32 %v469, %v476
      %v478 = vmul.f32 %v477, 0.7978846
      %v479 = vtanh.pop %v478
      %v480 = vadd.f32 %v479, 1.0
      %v481 = vmul.f32 %v480, 0.5
      %v482 = vmul.f32 %v469, %v481
      %v483 = vld [vmem:[#allocation3] sm:$0xff]
      %v484 = vpack.c.bf16 %v482, %v482
      %v485 = vld [vmem:[%s356] sm:$0xf]
      %v486 = vld [vmem:[%s356 + $0x4] sm:$0xf]
      %v487 = vld [vmem:[%s356 + $0x8] sm:$0xf]
      %v488 = vld [vmem:[%s356 + $0xc] sm:$0xf]
      %v489 = vld [vmem:[%s356 + $0x10] sm:$0xf]
      %v490 = vld [vmem:[%s356 + $0x14] sm:$0xf]
      %v491 = vld [vmem:[%s356 + $0x18] sm:$0xf]
      %v492 = vld [vmem:[%s356 + $0x1c] sm:$0xf]
      %v501 = vunpack.c.l.b16 %v485
      %v502 = vunpack.c.l.b16 %v486
      %v503 = vunpack.c.l.b16 %v487
      %v504 = vunpack.c.l.b16 %v488
      %v505 = vunpack.c.l.b16 %v489
      %v506 = vunpack.c.l.b16 %v490
      %v507 = vunpack.c.l.b16 %v491
      %v508 = vunpack.c.l.b16 %v492
      %v509 = vpack.c.b16 %v502, %v501
      %v510 = vpack.c.b16 %v504, %v503
      %v511 = vpack.c.b16 %v506, %v505
      %v512 = vpack.c.b16 %v508, %v507
      %vm517 = vcmask 523264
      %v519 = vsel %vm517, %v484, 0
      %521 = vmatprep.subr.bf16.mxu0 0
      %522 = vmatpush1.bf16.msra.mxu0 0
      %523 = vmatprep.subr.bf16.mxu0 0
      %524 = vmatpush1.bf16.msra.mxu0 0
      %525 = vmatprep.subr.bf16.mxu0 0
      %526 = vmatpush1.bf16.msra.mxu0 0
      %527 = vmatprep.subr.bf16.mxu0 0
      %528 = vmatpush1.bf16.msra.mxu0 0
      %529 = vmatprep.subr.bf16.mxu0 0
      %530 = vmatpush1.bf16.msra.mxu0 %v512
      %531 = vmatprep.subr.bf16.mxu0 0
      %532 = vmatpush1.bf16.msra.mxu0 %v511
      %533 = vmatprep.subr.bf16.mxu0 0
      %534 = vmatpush1.bf16.msra.mxu0 %v510
      %535 = vmatprep.subr.bf16.mxu0 0
      %536 = vmatpush1.bf16.msra.mxu0 %v509
      %537 = vmatprep.subr.bf16.mxu0 0
      %538 = vmatpush2.bf16.msra.mxu0 0
      %539 = vmatprep.subr.bf16.mxu0 0
      %540 = vmatpush2.bf16.msra.mxu0 0
      %541 = vmatprep.subr.bf16.mxu0 0
      %542 = vmatpush2.bf16.msra.mxu0 0
      %543 = vmatprep.subr.bf16.mxu0 0
      %544 = vmatpush2.bf16.msra.mxu0 0
      %545 = vmatprep.subr.bf16.mxu0 0
      %546 = vmatpush2.bf16.msra.mxu0 0
      %547 = vmatprep.subr.bf16.mxu0 0
      %548 = vmatpush2.bf16.msra.mxu0 0
      %549 = vmatprep.subr.bf16.mxu0 0
      %550 = vmatpush2.bf16.msra.mxu0 0
      %551 = vmatprep.subr.bf16.mxu0 0
      %552 = vmatpush2.bf16.msra.mxu0 0
      %553 = vmatprep.mubr.bf16.mxu0 0
      %554 = vmatmul.mubr.bf16.gmra.mxu0 %v519
      %v555 = vpop.f32.mrf.mxu0
      %v556 = vadd.f32 0.0, %v555
      %v557 = vpop.f32.mrf.mxu0
      %v558 = vpop.f32.mrf.mxu0
      %v559 = vpop.f32.mrf.mxu0
      %560 = vdwg.mxu0
      %v561 = vadd.f32 %v483, %v556
      %562 = vst.msk [vmem:[#allocation3] sm:$0xff] %vm430, %v561
      // Predicated region
      $region53: #{transformer_forward.10} parent=47 // pred_check
        %p563 = pneg %p366
      $region54: #{transformer_forward.10} parent=47 // pred_check_branch
        %565 = sbr.rel (%p563) target = $region56
      $region55: #{transformer_forward.10} parent=47 // pred_region
        %v566 = vld [vmem:[%s344] sm:$0xff]
        %v567 = vld [vmem:[#allocation3] sm:$0xff]
        %v568 = vadd.f32 %v566, %v567
        %v569 = vld [vmem:[%s6] sm:$0x1]
        %v571 = vlaneseq
        %v572 = vshrl.u32 %v571, 7
        %v573 = vsub.s32 0, %v572
        %v574 = vrot.slane %v569, %v573
        %v576 = vadd.f32 %v568, %v574
        %577 = vst.msk [vmem:[%s364] sm:$0xff] %vm430, %v576
      $region56: #{transformer_forward.10} parent=47 // pred_fallthru
        _
      %p578 = scmp.lt.s32.totalorder %s23, 1
      %s579 = scalar_select %p578, %s23, 1
      %p580 = scmp.lt.s32.totalorder %s24, 0
      %s581 = scalar_select %p580, %s24, 0
      %s582 = sadd.s32 %s581, %s579
      %s583 = smul.addr %s582, 8
      %s584 = scalar_lea.vmem %s7, %s583
      // Predicated region
      $region57: #{transformer_forward.10} parent=47 // pred_check
        %p585 = pneg %p226
      $region58: #{transformer_forward.10} parent=47 // pred_check_branch
        %587 = sbr.rel (%p585) target = $region60
      $region59: #{transformer_forward.10} parent=47 // pred_region
        _
      $region60: #{transformer_forward.10} parent=47 // pred_fallthru
        _
    $region48: #{transformer_forward.10} parent=5 // pred_fallthru
      _
    %p588 = scmp.le.s32.totalorder 2, %s13
    // Predicated region
    $region61: #{transformer_forward.10} parent=5 // pred_check
      %p589 = pneg %p588
    $region62: #{transformer_forward.10} parent=5 // pred_check_branch
      %591 = sbr.rel (%p589) target = $region64
    $region63: #{transformer_forward.10} parent=5 // pred_region
      %s592 = ssub.s32 %s13, 2
      // Predicated region
      $region65: #{transformer_forward.10} parent=63 // pred_check
        %p593 = pneg %p232
      $region66: #{transformer_forward.10} parent=63 // pred_check_branch
        %595 = sbr.rel (%p593) target = $region68
      $region67: #{transformer_forward.10} parent=63 // pred_region
        %p596 = scmp.lt.s32.totalorder %s26, 1
        %s597 = scalar_select %p596, %s26, 1
        %p598 = scmp.lt.s32.totalorder %s27, 0
        %s599 = scalar_select %p598, %s27, 0
        %s600 = sadd.s32 %s599, %s597
        %s601 = smul.addr %s600, 8
        %s602 = scalar_lea.vmem %s7, %s601
      $region68: #{transformer_forward.10} parent=63 // pred_fallthru
        _
    $region64: #{transformer_forward.10} parent=5 // pred_fallthru
      _
  $region6: #{transformer_forward.10} parent=0 // loop_footer
    %s17 = sadd.s32 1, %s13
  $region7: #{transformer_forward.10} parent=0 // loop_footer_branch
    %12 = sbr.rel target = $region3
  $region8: #{transformer_forward.10} parent=0 // loop_exit
    _

// kernel: transformer_forward.14
$region0: #{transformer_forward.14}
  #allocation0 [shape = 'u32[]', space=smem, size = 0x4, offset = 0x4, fixed_abs, tag = 'smem constant byte address 0x4 - core index']
  #allocation1 [shape = 'u32[144,128]{1,0:T(1,128)}', space=vmem, size = 0x12000, scoped, tag = 'internal scratch']
  %s0 = inlined_call_operand.vmem [shape: f32[2,8,32], index: 0, kind: input, shape index: {}]
  %s1 = inlined_call_operand.vmem [shape: f32[1,32], index: 1, kind: input, shape index: {}]
  %s2 = inlined_call_operand.vmem [shape: f32[1,32], index: 2, kind: input, shape index: {}]
  %s3 = inlined_call_operand.vmem [shape: f32[2,8,32], index: 3, kind: output, shape index: {}]
  %s4 = sld [smem:[#allocation0]]
  $region45: #{transformer_forward.14} parent=0
    _
  %s6 = ssub.s32 1, %s4
  %s7 = scalar_select 0, %s6, %s4
  loop: start=0, step=1, limit=4
  $region2: #{transformer_forward.14} parent=0 // loop_pre_header
    _
  $region3: #{transformer_forward.14} parent=0 // loop_header
    %s9 = sphi 0, %s13
    %p10 = scmp.ge.s32.totalorder %s9, 4
    %s16 = sphi 0, %s28
    %s17 = sphi 0, %s24
    %s18 = sphi 0, %s16
    %s19 = sphi 0, %s17
    %s20 = sphi 0, %s18
    %s21 = sphi 0, %s19
    %s33 = sphi 0, %s35
    %s36 = sphi 0, %s33
    %s37 = sphi 0, %s36
    %s53 = sphi 0, %s37
    %s57 = sphi 0, %s57
    %s59 = sphi 0, %s57
    %s60 = sphi 0, %s59
    %s74 = sphi 0, %s60
    %s78 = sphi 0, %s78
    %s80 = sphi 0, %s78
    %s81 = sphi 0, %s80
    %s95 = sphi 0, %s81
    %s103 = sphi 0, %s105
    %s106 = sphi 0, %s103
    %s107 = sphi 0, %s106
    %s123 = sphi 0, %s107
  $region4: #{transformer_forward.14} parent=0 // loop_header_branch
    %12 = sbr.rel (%p10) target = $region8
  $region5: #{transformer_forward.14} parent=0 // loop_body
    %s14 = ssub.s32 %s9, 1
    %s15 = ssub.s32 %s9, 2
    %s22 = sadd.s32 1, %s17
    %p23 = scmp.ge.s32.totalorder %s22, 1
    %s24 = scalar_select %p23, 0, %s22
    %s25 = sadd.s32 1, %s16
    %s26 = scalar_select %p23, %s25, %s16
    %p27 = scmp.ge.s32.totalorder %s26, 2
    %s28 = scalar_select %p27, 0, %s26
    %s29 = ssub.s32 %s16, %s28
    %s30 = ssub.s32 %s17, %s24
    %s31 = sor.u32 %s29, %s30
    %p32 = scmp.eq.s32.totalorder %s31, 0
    %s34 = sadd.s32 %s33, 1
    %s35 = scalar_select %p32, %s33, %s34
    %p38 = pneg %p32
    %p39 = scmp.eq.s32.totalorder %s9, 1
    %p40 = por %p38, %p39
    %p41 = scmp.ne.s32.totalorder %s33, %s36
    %p42 = scmp.eq.s32.totalorder %s9, 0
    %p43 = por %p41, %p42
    %p44 = scmp.ne.s32.totalorder %s33, %s36
    %p45 = scmp.eq.s32.totalorder %s14, 1
    %p46 = por %p44, %p45
    %p47 = scmp.ne.s32.totalorder %s36, %s37
    %p48 = scmp.eq.s32.totalorder %s14, 0
    %p49 = por %p47, %p48
    %p50 = scmp.ne.s32.totalorder %s36, %s37
    %p51 = scmp.eq.s32.totalorder %s15, 1
    %p52 = por %p50, %p51
    %p54 = scmp.ne.s32.totalorder %s37, %s53
    %p55 = scmp.eq.s32.totalorder %s15, 0
    %p56 = por %p54, %p55
    %s58 = sadd.s32 %s57, 1
    %p61 = scmp.eq.s32.totalorder %s9, 1
    %p62 = scmp.ne.s32.totalorder %s57, %s59
    %p63 = scmp.eq.s32.totalorder %s9, 0
    %p64 = por %p62, %p63
    %p65 = scmp.ne.s32.totalorder %s57, %s59
    %p66 = scmp.eq.s32.totalorder %s14, 1
    %p67 = por %p65, %p66
    %p68 = scmp.ne.s32.totalorder %s59, %s60
    %p69 = scmp.eq.s32.totalorder %s14, 0
    %p70 = por %p68, %p69
    %p71 = scmp.ne.s32.totalorder %s59, %s60
    %p72 = scmp.eq.s32.totalorder %s15, 1
    %p73 = por %p71, %p72
    %p75 = scmp.ne.s32.totalorder %s60, %s74
    %p76 = scmp.eq.s32.totalorder %s15, 0
    %p77 = por %p75, %p76
    %s79 = sadd.s32 %s78, 1
    %p82 = scmp.eq.s32.totalorder %s9, 1
    %p83 = scmp.ne.s32.totalorder %s78, %s80
    %p84 = scmp.eq.s32.totalorder %s9, 0
    %p85 = por %p83, %p84
    %p86 = scmp.ne.s32.totalorder %s78, %s80
    %p87 = scmp.eq.s32.totalorder %s14, 1
    %p88 = por %p86, %p87
    %p89 = scmp.ne.s32.totalorder %s80, %s81
    %p90 = scmp.eq.s32.totalorder %s14, 0
    %p91 = por %p89, %p90
    %p92 = scmp.ne.s32.totalorder %s80, %s81
    %p93 = scmp.eq.s32.totalorder %s15, 1
    %p94 = por %p92, %p93
    %p96 = scmp.ne.s32.totalorder %s81, %s95
    %p97 = scmp.eq.s32.totalorder %s15, 0
    %p98 = por %p96, %p97
    %s99 = ssub.s32 %s16, %s28
    %s100 = ssub.s32 %s17, %s24
    %s101 = sor.u32 %s99, %s100
    %p102 = scmp.eq.s32.totalorder %s101, 0
    %s104 = sadd.s32 %s103, 1
    %s105 = scalar_select %p102, %s103, %s104
    %p108 = pneg %p102
    %p109 = scmp.eq.s32.totalorder %s9, 1
    %p110 = por %p108, %p109
    %p111 = scmp.ne.s32.totalorder %s103, %s106
    %p112 = scmp.eq.s32.totalorder %s9, 0
    %p113 = por %p111, %p112
    %p114 = scmp.ne.s32.totalorder %s103, %s106
    %p115 = scmp.eq.s32.totalorder %s14, 1
    %p116 = por %p114, %p115
    %p117 = scmp.ne.s32.totalorder %s106, %s107
    %p118 = scmp.eq.s32.totalorder %s14, 0
    %p119 = por %p117, %p118
    %p120 = scmp.ne.s32.totalorder %s106, %s107
    %p121 = scmp.eq.s32.totalorder %s15, 1
    %p122 = por %p120, %p121
    %p124 = scmp.ne.s32.totalorder %s107, %s123
    %p125 = scmp.eq.s32.totalorder %s15, 0
    %p126 = por %p124, %p125
    %p127 = scmp.le.s32.totalorder 1, %s9
    %p128 = scmp.lt.s32.totalorder %s9, 3
    %p129 = pnand %p127, %p128
    %p130 = pneg %p129
    // Predicated region
    $region9: #{transformer_forward.14} parent=5 // pred_check
      _
    $region10: #{transformer_forward.14} parent=5 // pred_check_branch
      %132 = sbr.rel (%p129) target = $region12
    $region11: #{transformer_forward.14} parent=5 // pred_region
      %s133 = ssub.s32 %s9, 1
      // Predicated region
      $region13: #{transformer_forward.14} parent=11 // pred_check
        %p134 = pneg %p70
      $region14: #{transformer_forward.14} parent=11 // pred_check_branch
        %136 = sbr.rel (%p134) target = $region16
      $region15: #{transformer_forward.14} parent=11 // pred_region
        _
      $region16: #{transformer_forward.14} parent=11 // pred_fallthru
        _
      // Predicated region
      $region17: #{transformer_forward.14} parent=11 // pred_check
        %p137 = pneg %p91
      $region18: #{transformer_forward.14} parent=11 // pred_check_branch
        %139 = sbr.rel (%p137) target = $region20
      $region19: #{transformer_forward.14} parent=11 // pred_region
        _
      $region20: #{transformer_forward.14} parent=11 // pred_fallthru
        _
    $region12: #{transformer_forward.14} parent=5 // pred_fallthru
      _
    %p140 = scmp.lt.s32.totalorder %s9, 2
    // Predicated region
    $region21: #{transformer_forward.14} parent=5 // pred_check
      %p141 = pneg %p140
    $region22: #{transformer_forward.14} parent=5 // pred_check_branch
      %143 = sbr.rel (%p141) target = $region24
    $region23: #{transformer_forward.14} parent=5 // pred_region
      // Predicated region
      $region25: #{transformer_forward.14} parent=23 // pred_check
        %p144 = pneg %p43
      $region26: #{transformer_forward.14} parent=23 // pred_check_branch
        %146 = sbr.rel (%p144) target = $region28
      $region27: #{transformer_forward.14} parent=23 // pred_region
        %p147 = scmp.lt.s32.totalorder %s16, 1
        %s148 = scalar_select %p147, %s16, 1
        %p149 = scmp.lt.s32.totalorder %s17, 0
        %s150 = scalar_select %p149, %s17, 0
        %s151 = sadd.s32 %s150, %s148
        %s152 = smul.addr %s151, 8
        %s153 = scalar_lea.vmem %s0, %s152
      $region28: #{transformer_forward.14} parent=23 // pred_fallthru
        _
    $region24: #{transformer_forward.14} parent=5 // pred_fallthru
      _
    %p154 = scmp.le.s32.totalorder 1, %s9
    %p155 = scmp.lt.s32.totalorder %s9, 3
    %p156 = pnand %p154, %p155
    %p157 = pneg %p156
    // Predicated region
    $region29: #{transformer_forward.14} parent=5 // pred_check
      _
    $region30: #{transformer_forward.14} parent=5 // pred_check_branch
      %159 = sbr.rel (%p156) target = $region32
    $region31: #{transformer_forward.14} parent=5 // pred_region
      %s160 = ssub.s32 %s9, 1
      %p161 = scmp.lt.s32.totalorder %s18, 1
      %s162 = scalar_select %p161, %s18, 1
      %p163 = scmp.lt.s32.totalorder %s19, 0
      %s164 = scalar_select %p163, %s19, 0
      %s165 = sadd.s32 %s164, %s162
      %s166 = smul.addr %s165, 8
      %s167 = scalar_lea.vmem %s0, %s166
      %p168 = pneg %p49
      %p169 = pneg %p46
      %p170 = pneg %p70
      %p171 = pneg %p67
      %p172 = pneg %p91
      %p173 = pneg %p88
      %p174 = pneg %p119
      %p175 = pneg %p116
      %p176 = scmp.lt.s32.totalorder %s18, 1
      %s177 = scalar_select %p176, %s18, 1
      %p178 = scmp.lt.s32.totalorder %s19, 0
      %s179 = scalar_select %p178, %s19, 0
      %s180 = sadd.s32 %s179, %s177
      %s181 = smul.addr %s180, 8
      %s182 = scalar_lea.vmem %s3, %s181
      %p183 = scmp.lt.s32.totalorder %s18, 1
      %s184 = scalar_select %p183, %s18, 1
      %p185 = scmp.lt.s32.totalorder %s19, 0
      %s186 = scalar_select %p185, %s19, 0
      %s187 = sadd.s32 %s186, %s184
      %s188 = smul.addr %s187, 8
      %s189 = scalar_lea.vmem %s0, %s188
      %p190 = scmp.lt.s32.totalorder %s18, 1
      %s191 = scalar_select %p190, %s18, 1
      %p192 = scmp.lt.s32.totalorder %s19, 0
      %s193 = scalar_select %p192, %s19, 0
      %s194 = sadd.s32 %s193, %s191
      %s195 = smul.addr %s194, 8
      %s196 = scalar_lea.vmem %s3, %s195
      %v197 = vld [vmem:[%s189] sm:$0xff]
      %v198 = vld [vmem:[%s1] sm:$0x1]
      %v199 = vld [vmem:[%s2] sm:$0x1]
      %vm200 = vcmask 261120
      %v201 = vsel %vm200, %v197, 0.0
      %202 = vadd.xlane.f32.xlu0 %v201
      %v203 = vpop.xlane.xlu0 %202
      %v204 = vrcp.pop 32.0
      %v205 = vmul.f32 %v203, %v204
      %v206 = vsub.f32 %v197, %v205
      %v207 = vmul.f32 %v206, %v206
      %v208 = vsel %vm200, %v207, 0.0
      %209 = vadd.xlane.f32.xlu0 %v208
      %v210 = vpop.xlane.xlu0 %209
      %v211 = vmul.f32 %v210, %v204
      %v212 = vadd.f32 %v211, 1e-05
      %v213 = vrsqrt.pop %v212
      %v214 = vmul.f32 %v206, %v213
      %v216 = vlaneseq
      %v217 = vshrl.u32 %v216, 7
      %v218 = vsub.s32 0, %v217
      %v219 = vrot.slane %v198, %v218
      %v221 = vmul.f32 %v214, %v219
      %v223 = vlaneseq
      %v224 = vshrl.u32 %v223, 7
      %v225 = vsub.s32 0, %v224
      %v226 = vrot.slane %v199, %v225
      %v228 = vadd.f32 %v221, %v226
      %229 = vst.msk [vmem:[%s196] sm:$0xff] %vm200, %v228
      %p230 = scmp.lt.s32.totalorder %s18, 1
      %s231 = scalar_select %p230, %s18, 1
      %p232 = scmp.lt.s32.totalorder %s19, 0
      %s233 = scalar_select %p232, %s19, 0
      %s234 = sadd.s32 %s233, %s231
      %s235 = smul.addr %s234, 8
      %s236 = scalar_lea.vmem %s3, %s235
      // Predicated region
      $region33: #{transformer_forward.14} parent=31 // pred_check
        %p237 = pneg %p116
      $region34: #{transformer_forward.14} parent=31 // pred_check_branch
        %239 = sbr.rel (%p237) target = $region36
      $region35: #{transformer_forward.14} parent=31 // pred_region
        _
      $region36: #{transformer_forward.14} parent=31 // pred_fallthru
        _
    $region32: #{transformer_forward.14} parent=5 // pred_fallthru
      _
    %p240 = scmp.le.s32.totalorder 2, %s9
    // Predicated region
    $region37: #{transformer_forward.14} parent=5 // pred_check
      %p241 = pneg %p240
    $region38: #{transformer_forward.14} parent=5 // pred_check_branch
      %243 = sbr.rel (%p241) target = $region40
    $region39: #{transformer_forward.14} parent=5 // pred_region
      %s244 = ssub.s32 %s9, 2
      // Predicated region
      $region41: #{transformer_forward.14} parent=39 // pred_check
        %p245 = pneg %p122
      $region42: #{transformer_forward.14} parent=39 // pred_check_branch
        %247 = sbr.rel (%p245) target = $region44
      $region43: #{transformer_forward.14} parent=39 // pred_region
        %p248 = scmp.lt.s32.totalorder %s20, 1
        %s249 = scalar_select %p248, %s20, 1
        %p250 = scmp.lt.s32.totalorder %s21, 0
        %s251 = scalar_select %p250, %s21, 0
        %s252 = sadd.s32 %s251, %s249
        %s253 = smul.addr %s252, 8
        %s254 = scalar_lea.vmem %s3, %s253
      $region44: #{transformer_forward.14} parent=39 // pred_fallthru
        _
    $region40: #{transformer_forward.14} parent=5 // pred_fallthru
      _
  $region6: #{transformer_forward.14} parent=0 // loop_footer
    %s13 = sadd.s32 1, %s9
  $region7: #{transformer_forward.14} parent=0 // loop_footer_branch
    %8 = sbr.rel target = $region3
  $region8: #{transformer_forward.14} parent=0 // loop_exit
    _

// kernel: transformer_forward.8
$region0: #{transformer_forward.8}
  #allocation0 [shape = 'u32[]', space=smem, size = 0x4, offset = 0x4, fixed_abs, tag = 'smem constant byte address 0x4 - core index']
  #allocation1 [shape = 'u32[144,128]{1,0:T(1,128)}', space=vmem, size = 0x12000, scoped, tag = 'internal scratch']
  %s0 = inlined_call_operand.vmem [shape: f32[2,8,32], index: 0, kind: input, shape index: {}]
  %s1 = inlined_call_operand.vmem [shape: f32[1,32], index: 1, kind: input, shape index: {}]
  %s2 = inlined_call_operand.vmem [shape: f32[1,32], index: 2, kind: input, shape index: {}]
  %s3 = inlined_call_operand.vmem [shape: bf16[32,96], index: 3, kind: input, shape index: {}]
  %s4 = inlined_call_operand.vmem [shape: f32[1,96], index: 4, kind: input, shape index: {}]
  %s5 = inlined_call_operand.vmem [shape: bf16[2,8,32], index: 5, kind: output, shape index: {0}]
  %s6 = inlined_call_operand.vmem [shape: bf16[2,8,32], index: 6, kind: output, shape index: {1}]
  %s7 = inlined_call_operand.vmem [shape: bf16[2,8,32], index: 7, kind: output, shape index: {2}]
  %8 = xla_tuple %s5, %s6, %s7
  %s9 = sld [smem:[#allocation0]]
  $region69: #{transformer_forward.8} parent=0
    _
  %s11 = ssub.s32 1, %s9
  %s12 = scalar_select 0, %s11, %s9
  loop: start=0, step=1, limit=4
  $region2: #{transformer_forward.8} parent=0 // loop_pre_header
    _
  $region3: #{transformer_forward.8} parent=0 // loop_header
    %s14 = sphi 0, %s18
    %p15 = scmp.ge.s32.totalorder %s14, 4
    %s21 = sphi 0, %s33
    %s22 = sphi 0, %s29
    %s23 = sphi 0, %s21
    %s24 = sphi 0, %s22
    %s25 = sphi 0, %s23
    %s26 = sphi 0, %s24
    %s38 = sphi 0, %s40
    %s41 = sphi 0, %s38
    %s42 = sphi 0, %s41
    %s58 = sphi 0, %s42
    %s62 = sphi 0, %s62
    %s64 = sphi 0, %s62
    %s65 = sphi 0, %s64
    %s79 = sphi 0, %s65
    %s83 = sphi 0, %s83
    %s85 = sphi 0, %s83
    %s86 = sphi 0, %s85
    %s100 = sphi 0, %s86
    %s104 = sphi 0, %s104
    %s106 = sphi 0, %s104
    %s107 = sphi 0, %s106
    %s121 = sphi 0, %s107
    %s125 = sphi 0, %s125
    %s127 = sphi 0, %s125
    %s128 = sphi 0, %s127
    %s142 = sphi 0, %s128
    %s150 = sphi 0, %s152
    %s153 = sphi 0, %s150
    %s154 = sphi 0, %s153
    %s170 = sphi 0, %s154
    %s178 = sphi 0, %s180
    %s181 = sphi 0, %s178
    %s182 = sphi 0, %s181
    %s198 = sphi 0, %s182
    %s206 = sphi 0, %s208
    %s209 = sphi 0, %s206
    %s210 = sphi 0, %s209
    %s226 = sphi 0, %s210
  $region4: #{transformer_forward.8} parent=0 // loop_header_branch
    %17 = sbr.rel (%p15) target = $region8
  $region5: #{transformer_forward.8} parent=0 // loop_body
    %s19 = ssub.s32 %s14, 1
    %s20 = ssub.s32 %s14, 2
    %s27 = sadd.s32 1, %s22
    %p28 = scmp.ge.s32.totalorder %s27, 1
    %s29 = scalar_select %p28, 0, %s27
    %s30 = sadd.s32 1, %s21
    %s31 = scalar_select %p28, %s30, %s21
    %p32 = scmp.ge.s32.totalorder %s31, 2
    %s33 = scalar_select %p32, 0, %s31
    %s34 = ssub.s32 %s21, %s33
    %s35 = ssub.s32 %s22, %s29
    %s36 = sor.u32 %s34, %s35
    %p37 = scmp.eq.s32.totalorder %s36, 0
    %s39 = sadd.s32 %s38, 1
    %s40 = scalar_select %p37, %s38, %s39
    %p43 = pneg %p37
    %p44 = scmp.eq.s32.totalorder %s14, 1
    %p45 = por %p43, %p44
    %p46 = scmp.ne.s32.totalorder %s38, %s41
    %p47 = scmp.eq.s32.totalorder %s14, 0
    %p48 = por %p46, %p47
    %p49 = scmp.ne.s32.totalorder %s38, %s41
    %p50 = scmp.eq.s32.totalorder %s19, 1
    %p51 = por %p49, %p50
    %p52 = scmp.ne.s32.totalorder %s41, %s42
    %p53 = scmp.eq.s32.totalorder %s19, 0
    %p54 = por %p52, %p53
    %p55 = scmp.ne.s32.totalorder %s41, %s42
    %p56 = scmp.eq.s32.totalorder %s20, 1
    %p57 = por %p55, %p56
    %p59 = scmp.ne.s32.totalorder %s42, %s58
    %p60 = scmp.eq.s32.totalorder %s20, 0
    %p61 = por %p59, %p60
    %s63 = sadd.s32 %s62, 1
    %p66 = scmp.eq.s32.totalorder %s14, 1
    %p67 = scmp.ne.s32.totalorder %s62, %s64
    %p68 = scmp.eq.s32.totalorder %s14, 0
    %p69 = por %p67, %p68
    %p70 = scmp.ne.s32.totalorder %s62, %s64
    %p71 = scmp.eq.s32.totalorder %s19, 1
    %p72 = por %p70, %p71
    %p73 = scmp.ne.s32.totalorder %s64, %s65
    %p74 = scmp.eq.s32.totalorder %s19, 0
    %p75 = por %p73, %p74
    %p76 = scmp.ne.s32.totalorder %s64, %s65
    %p77 = scmp.eq.s32.totalorder %s20, 1
    %p78 = por %p76, %p77
    %p80 = scmp.ne.s32.totalorder %s65, %s79
    %p81 = scmp.eq.s32.totalorder %s20, 0
    %p82 = por %p80, %p81
    %s84 = sadd.s32 %s83, 1
    %p87 = scmp.eq.s32.totalorder %s14, 1
    %p88 = scmp.ne.s32.totalorder %s83, %s85
    %p89 = scmp.eq.s32.totalorder %s14, 0
    %p90 = por %p88, %p89
    %p91 = scmp.ne.s32.totalorder %s83, %s85
    %p92 = scmp.eq.s32.totalorder %s19, 1
    %p93 = por %p91, %p92
    %p94 = scmp.ne.s32.totalorder %s85, %s86
    %p95 = scmp.eq.s32.totalorder %s19, 0
    %p96 = por %p94, %p95
    %p97 = scmp.ne.s32.totalorder %s85, %s86
    %p98 = scmp.eq.s32.totalorder %s20, 1
    %p99 = por %p97, %p98
    %p101 = scmp.ne.s32.totalorder %s86, %s100
    %p102 = scmp.eq.s32.totalorder %s20, 0
    %p103 = por %p101, %p102
    %s105 = sadd.s32 %s104, 1
    %p108 = scmp.eq.s32.totalorder %s14, 1
    %p109 = scmp.ne.s32.totalorder %s104, %s106
    %p110 = scmp.eq.s32.totalorder %s14, 0
    %p111 = por %p109, %p110
    %p112 = scmp.ne.s32.totalorder %s104, %s106
    %p113 = scmp.eq.s32.totalorder %s19, 1
    %p114 = por %p112, %p113
    %p115 = scmp.ne.s32.totalorder %s106, %s107
    %p116 = scmp.eq.s32.totalorder %s19, 0
    %p117 = por %p115, %p116
    %p118 = scmp.ne.s32.totalorder %s106, %s107
    %p119 = scmp.eq.s32.totalorder %s20, 1
    %p120 = por %p118, %p119
    %p122 = scmp.ne.s32.totalorder %s107, %s121
    %p123 = scmp.eq.s32.totalorder %s20, 0
    %p124 = por %p122, %p123
    %s126 = sadd.s32 %s125, 1
    %p129 = scmp.eq.s32.totalorder %s14, 1
    %p130 = scmp.ne.s32.totalorder %s125, %s127
    %p131 = scmp.eq.s32.totalorder %s14, 0
    %p132 = por %p130, %p131
    %p133 = scmp.ne.s32.totalorder %s125, %s127
    %p134 = scmp.eq.s32.totalorder %s19, 1
    %p135 = por %p133, %p134
    %p136 = scmp.ne.s32.totalorder %s127, %s128
    %p137 = scmp.eq.s32.totalorder %s19, 0
    %p138 = por %p136, %p137
    %p139 = scmp.ne.s32.totalorder %s127, %s128
    %p140 = scmp.eq.s32.totalorder %s20, 1
    %p141 = por %p139, %p140
    %p143 = scmp.ne.s32.totalorder %s128, %s142
    %p144 = scmp.eq.s32.totalorder %s20, 0
    %p145 = por %p143, %p144
    %s146 = ssub.s32 %s21, %s33
    %s147 = ssub.s32 %s22, %s29
    %s148 = sor.u32 %s146, %s147
    %p149 = scmp.eq.s32.totalorder %s148, 0
    %s151 = sadd.s32 %s150, 1
    %s152 = scalar_select %p149, %s150, %s151
    %p155 = pneg %p149
    %p156 = scmp.eq.s32.totalorder %s14, 1
    %p157 = por %p155, %p156
    %p158 = scmp.ne.s32.totalorder %s150, %s153
    %p159 = scmp.eq.s32.totalorder %s14, 0
    %p160 = por %p158, %p159
    %p161 = scmp.ne.s32.totalorder %s150, %s153
    %p162 = scmp.eq.s32.totalorder %s19, 1
    %p163 = por %p161, %p162
    %p164 = scmp.ne.s32.totalorder %s153, %s154
    %p165 = scmp.eq.s32.totalorder %s19, 0
    %p166 = por %p164, %p165
    %p167 = scmp.ne.s32.totalorder %s153, %s154
    %p168 = scmp.eq.s32.totalorder %s20, 1
    %p169 = por %p167, %p168
    %p171 = scmp.ne.s32.totalorder %s154, %s170
    %p172 = scmp.eq.s32.totalorder %s20, 0
    %p173 = por %p171, %p172
    %s174 = ssub.s32 %s21, %s33
    %s175 = ssub.s32 %s22, %s29
    %s176 = sor.u32 %s174, %s175
    %p177 = scmp.eq.s32.totalorder %s176, 0
    %s179 = sadd.s32 %s178, 1
    %s180 = scalar_select %p177, %s178, %s179
    %p183 = pneg %p177
    %p184 = scmp.eq.s32.totalorder %s14, 1
    %p185 = por %p183, %p184
    %p186 = scmp.ne.s32.totalorder %s178, %s181
    %p187 = scmp.eq.s32.totalorder %s14, 0
    %p188 = por %p186, %p187
    %p189 = scmp.ne.s32.totalorder %s178, %s181
    %p190 = scmp.eq.s32.totalorder %s19, 1
    %p191 = por %p189, %p190
    %p192 = scmp.ne.s32.totalorder %s181, %s182
    %p193 = scmp.eq.s32.totalorder %s19, 0
    %p194 = por %p192, %p193
    %p195 = scmp.ne.s32.totalorder %s181, %s182
    %p196 = scmp.eq.s32.totalorder %s20, 1
    %p197 = por %p195, %p196
    %p199 = scmp.ne.s32.totalorder %s182, %s198
    %p200 = scmp.eq.s32.totalorder %s20, 0
    %p201 = por %p199, %p200
    %s202 = ssub.s32 %s21, %s33
    %s203 = ssub.s32 %s22, %s29
    %s204 = sor.u32 %s202, %s203
    %p205 = scmp.eq.s32.totalorder %s204, 0
    %s207 = sadd.s32 %s206, 1
    %s208 = scalar_select %p205, %s206, %s207
    %p211 = pneg %p205
    %p212 = scmp.eq.s32.totalorder %s14, 1
    %p213 = por %p211, %p212
    %p214 = scmp.ne.s32.totalorder %s206, %s209
    %p215 = scmp.eq.s32.totalorder %s14, 0
    %p216 = por %p214, %p215
    %p217 = scmp.ne.s32.totalorder %s206, %s209
    %p218 = scmp.eq.s32.totalorder %s19, 1
    %p219 = por %p217, %p218
    %p220 = scmp.ne.s32.totalorder %s209, %s210
    %p221 = scmp.eq.s32.totalorder %s19, 0
    %p222 = por %p220, %p221
    %p223 = scmp.ne.s32.totalorder %s209, %s210
    %p224 = scmp.eq.s32.totalorder %s20, 1
    %p225 = por %p223, %p224
    %p227 = scmp.ne.s32.totalorder %s210, %s226
    %p228 = scmp.eq.s32.totalorder %s20, 0
    %p229 = por %p227, %p228
    %p230 = scmp.le.s32.totalorder 1, %s14
    %p231 = scmp.lt.s32.totalorder %s14, 3
    %p232 = pnand %p230, %p231
    %p233 = pneg %p232
    // Predicated region
    $region9: #{transformer_forward.8} parent=5 // pred_check
      _
    $region10: #{transformer_forward.8} parent=5 // pred_check_branch
      %235 = sbr.rel (%p232) target = $region12
    $region11: #{transformer_forward.8} parent=5 // pred_region
      %s236 = ssub.s32 %s14, 1
      // Predicated region
      $region13: #{transformer_forward.8} parent=11 // pred_check
        %p237 = pneg %p75
      $region14: #{transformer_forward.8} parent=11 // pred_check_branch
        %239 = sbr.rel (%p237) target = $region16
      $region15: #{transformer_forward.8} parent=11 // pred_region
        _
      $region16: #{transformer_forward.8} parent=11 // pred_fallthru
        _
      // Predicated region
      $region17: #{transformer_forward.8} parent=11 // pred_check
        %p240 = pneg %p96
      $region18: #{transformer_forward.8} parent=11 // pred_check_branch
        %242 = sbr.rel (%p240) target = $region20
      $region19: #{transformer_forward.8} parent=11 // pred_region
        _
      $region20: #{transformer_forward.8} parent=11 // pred_fallthru
        _
      // Predicated region
      $region21: #{transformer_forward.8} parent=11 // pred_check
        %p243 = pneg %p117
      $region22: #{transformer_forward.8} parent=11 // pred_check_branch
        %245 = sbr.rel (%p243) target = $region24
      $region23: #{transformer_forward.8} parent=11 // pred_region
        _
      $region24: #{transformer_forward.8} parent=11 // pred_fallthru
        _
      // Predicated region
      $region25: #{transformer_forward.8} parent=11 // pred_check
        %p246 = pneg %p138
      $region26: #{transformer_forward.8} parent=11 // pred_check_branch
        %248 = sbr.rel (%p246) target = $region28
      $region27: #{transformer_forward.8} parent=11 // pred_region
        _
      $region28: #{transformer_forward.8} parent=11 // pred_fallthru
        _
    $region12: #{transformer_forward.8} parent=5 // pred_fallthru
      _
    %p249 = scmp.lt.s32.totalorder %s14, 2
    // Predicated region
    $region29: #{transformer_forward.8} parent=5 // pred_check
      %p250 = pneg %p249
    $region30: #{transformer_forward.8} parent=5 // pred_check_branch
      %252 = sbr.rel (%p250) target = $region32
    $region31: #{transformer_forward.8} parent=5 // pred_region
      // Predicated region
      $region33: #{transformer_forward.8} parent=31 // pred_check
        %p253 = pneg %p48
      $region34: #{transformer_forward.8} parent=31 // pred_check_branch
        %255 = sbr.rel (%p253) target = $region36
      $region35: #{transformer_forward.8} parent=31 // pred_region
        %p256 = scmp.lt.s32.totalorder %s21, 1
        %s257 = scalar_select %p256, %s21, 1
        %p258 = scmp.lt.s32.totalorder %s22, 0
        %s259 = scalar_select %p258, %s22, 0
        %s260 = sadd.s32 %s259, %s257
        %s261 = smul.addr %s260, 8
        %s262 = scalar_lea.vmem %s0, %s261
      $region36: #{transformer_forward.8} parent=31 // pred_fallthru
        _
    $region32: #{transformer_forward.8} parent=5 // pred_fallthru
      _
    %p263 = scmp.le.s32.totalorder 1, %s14
    %p264 = scmp.lt.s32.totalorder %s14, 3
    %p265 = pnand %p263, %p264
    %p266 = pneg %p265
    // Predicated region
    $region37: #{transformer_forward.8} parent=5 // pred_check
      _
    $region38: #{transformer_forward.8} parent=5 // pred_check_branch
      %268 = sbr.rel (%p265) target = $region40
    $region39: #{transformer_forward.8} parent=5 // pred_region
      %s269 = ssub.s32 %s14, 1
      %p270 = scmp.lt.s32.totalorder %s23, 1
      %s271 = scalar_select %p270, %s23, 1
      %p272 = scmp.lt.s32.totalorder %s24, 0
      %s273 = scalar_select %p272, %s24, 0
      %s274 = sadd.s32 %s273, %s271
      %s275 = smul.addr %s274, 8
      %s276 = scalar_lea.vmem %s0, %s275
      %p277 = pneg %p54
      %p278 = pneg %p51
      %p279 = pneg %p75
      %p280 = pneg %p72
      %p281 = pneg %p96
      %p282 = pneg %p93
      %p283 = pneg %p117
      %p284 = pneg %p114
      %p285 = pneg %p138
      %p286 = pneg %p135
      %p287 = pneg %p166
      %p288 = pneg %p163
      %p289 = scmp.lt.s32.totalorder %s23, 1
      %s290 = scalar_select %p289, %s23, 1
      %p291 = scmp.lt.s32.totalorder %s24, 0
      %s292 = scalar_select %p291, %s24, 0
      %s293 = sadd.s32 %s292, %s290
      %s294 = smul.addr %s293, 4
      %s295 = scalar_lea.vmem %s5, %s294
      %p296 = pneg %p194
      %p297 = pneg %p191
      %p298 = scmp.lt.s32.totalorder %s23, 1
      %s299 = scalar_select %p298, %s23, 1
      %p300 = scmp.lt.s32.totalorder %s24, 0
      %s301 = scalar_select %p300, %s24, 0
      %s302 = sadd.s32 %s301, %s299
      %s303 = smul.addr %s302, 4
      %s304 = scalar_lea.vmem %s6, %s303
      %p305 = pneg %p222
      %p306 = pneg %p219
      %p307 = scmp.lt.s32.totalorder %s23, 1
      %s308 = scalar_select %p307, %s23, 1
      %p309 = scmp.lt.s32.totalorder %s24, 0
      %s310 = scalar_select %p309, %s24, 0
      %s311 = sadd.s32 %s310, %s308
      %s312 = smul.addr %s311, 4
      %s313 = scalar_lea.vmem %s7, %s312
      %p314 = scmp.lt.s32.totalorder %s23, 1
      %s315 = scalar_select %p314, %s23, 1
      %p316 = scmp.lt.s32.totalorder %s24, 0
      %s317 = scalar_select %p316, %s24, 0
      %s318 = sadd.s32 %s317, %s315
      %s319 = smul.addr %s318, 8
      %s320 = scalar_lea.vmem %s0, %s319
      %p321 = scmp.lt.s32.totalorder %s23, 1
      %s322 = scalar_select %p321, %s23, 1
      %p323 = scmp.lt.s32.totalorder %s24, 0
      %s324 = scalar_select %p323, %s24, 0
      %s325 = sadd.s32 %s324, %s322
      %s326 = smul.addr %s325, 4
      %s327 = scalar_lea.vmem %s5, %s326
      %p328 = scmp.lt.s32.totalorder %s23, 1
      %s329 = scalar_select %p328, %s23, 1
      %p330 = scmp.lt.s32.totalorder %s24, 0
      %s331 = scalar_select %p330, %s24, 0
      %s332 = sadd.s32 %s331, %s329
      %s333 = smul.addr %s332, 4
      %s334 = scalar_lea.vmem %s6, %s333
      %p335 = scmp.lt.s32.totalorder %s23, 1
      %s336 = scalar_select %p335, %s23, 1
      %p337 = scmp.lt.s32.totalorder %s24, 0
      %s338 = scalar_select %p337, %s24, 0
      %s339 = sadd.s32 %s338, %s336
      %s340 = smul.addr %s339, 4
      %s341 = scalar_lea.vmem %s7, %s340
      %v343 = vld [vmem:[%s320] sm:$0xff]
      %v344 = vld [vmem:[%s1] sm:$0x1]
      %v345 = vld [vmem:[%s2] sm:$0x1]
      %vm346 = vcmask 261120
      %v347 = vsel %vm346, %v343, 0.0
      %348 = vadd.xlane.f32.xlu0 %v347
      %v349 = vpop.xlane.xlu0 %348
      %v350 = vrcp.pop 32.0
      %v351 = vmul.f32 %v349, %v350
      %v352 = vsub.f32 %v343, %v351
      %v353 = vmul.f32 %v352, %v352
      %v354 = vsel %vm346, %v353, 0.0
      %355 = vadd.xlane.f32.xlu0 %v354
      %v356 = vpop.xlane.xlu0 %355
      %v357 = vmul.f32 %v356, %v350
      %v358 = vadd.f32 %v357, 1e-05
      %v359 = vrsqrt.pop %v358
      %v360 = vmul.f32 %v352, %v359
      %v362 = vlaneseq
      %v363 = vshrl.u32 %v362, 7
      %v364 = vsub.s32 0, %v363
      %v365 = vrot.slane %v344, %v364
      %v367 = vmul.f32 %v360, %v365
      %v369 = vlaneseq
      %v370 = vshrl.u32 %v369, 7
      %v371 = vsub.s32 0, %v370
      %v372 = vrot.slane %v345, %v371
      %v374 = vadd.f32 %v367, %v372
      %v375 = vpack.c.bf16 %v374, %v374
      %v376 = vld [vmem:[%s3] sm:$0xf]
      %v377 = vld [vmem:[%s3 + $0x4] sm:$0xf]
      %v378 = vld [vmem:[%s3 + $0x8] sm:$0xf]
      %v379 = vld [vmem:[%s3 + $0xc] sm:$0xf]
      %v380 = vld [vmem:[%s4] sm:$0x1]
      %v382 = vlaneseq
      %v383 = vshrl.u32 %v382, 7
      %v384 = vsub.s32 0, %v383
      %v385 = vrot.slane %v380, %v384
      %v391 = vunpack.c.l.b16 %v376
      %v392 = vunpack.c.l.b16 %v377
      %v393 = vunpack.c.l.b16 %v378
      %v394 = vunpack.c.l.b16 %v379
      %v395 = vpack.c.b16 %v392, %v391
      %v396 = vpack.c.b16 %v394, %v393
      %v400 = vsel %vm346, %v375, 0
      %402 = vmatprep.subr.bf16.mxu0 0
      %403 = vmatpush1.bf16.msra.mxu0 0
      %404 = vmatprep.subr.bf16.mxu0 0
      %405 = vmatpush1.bf16.msra.mxu0 0
      %406 = vmatprep.subr.bf16.mxu0 0
      %407 = vmatpush1.bf16.msra.mxu0 0
      %408 = vmatprep.subr.bf16.mxu0 0
      %409 = vmatpush1.bf16.msra.mxu0 0
      %410 = vmatprep.subr.bf16.mxu0 0
      %411 = vmatpush1.bf16.msra.mxu0 0
      %412 = vmatprep.subr.bf16.mxu0 0
      %413 = vmatpush1.bf16.msra.mxu0 0
      %414 = vmatprep.subr.bf16.mxu0 0
      %415 = vmatpush1.bf16.msra.mxu0 %v396
      %416 = vmatprep.subr.bf16.mxu0 0
      %417 = vmatpush1.bf16.msra.mxu0 %v395
      %418 = vmatprep.subr.bf16.mxu0 0
      %419 = vmatpush2.bf16.msra.mxu0 0
      %420 = vmatprep.subr.bf16.mxu0 0
      %421 = vmatpush2.bf16.msra.mxu0 0
      %422 = vmatprep.subr.bf16.mxu0 0
      %423 = vmatpush2.bf16.msra.mxu0 0
      %424 = vmatprep.subr.bf16.mxu0 0
      %425 = vmatpush2.bf16.msra.mxu0 0
      %426 = vmatprep.subr.bf16.mxu0 0
      %427 = vmatpush2.bf16.msra.mxu0 0
      %428 = vmatprep.subr.bf16.mxu0 0
      %429 = vmatpush2.bf16.msra.mxu0 0
      %430 = vmatprep.subr.bf16.mxu0 0
      %431 = vmatpush2.bf16.msra.mxu0 0
      %432 = vmatprep.subr.bf16.mxu0 0
      %433 = vmatpush2.bf16.msra.mxu0 0
      %434 = vmatprep.mubr.bf16.mxu0 0
      %435 = vmatmul.mubr.bf16.gmra.mxu0 %v400
      %v436 = vpop.f32.mrf.mxu0
      %v437 = vadd.f32 %v385, %v436
      %v438 = vpop.f32.mrf.mxu0
      %v439 = vpop.f32.mrf.mxu0
      %v440 = vpop.f32.mrf.mxu0
      %441 = vdwg.mxu0
      %v442 = vmul.f32 %v437, 0.35355338
      %v443 = vpack.c.bf16 %v442, %v442
      %vm444 = vcmask 257024
      %445 = vst.msk [vmem:[%s327] sm:$0xf] %vm444, %v443
      %v446 = vpack.c.bf16 %v437, %v437
      %v448 = vunpack.c.l.b16 %v446
      %v449 = vpack.c.b16 %v448, %v448
      %450 = vrot.lane.b32.xlu0 %v449, 96
      %v451 = vpop.permute.xlu0 %450
      %453 = vst.msk [vmem:[%s334] sm:$0xf] %vm444, %v451
      %454 = vrot.lane.b32.xlu0 %v449, 64
      %v455 = vpop.permute.xlu0 %454
      %457 = vst.msk [vmem:[%s341] sm:$0xf] %vm444, %v455
      %p458 = scmp.lt.s32.totalorder %s23, 1
      %s459 = scalar_select %p458, %s23, 1
      %p460 = scmp.lt.s32.totalorder %s24, 0
      %s461 = scalar_select %p460, %s24, 0
      %s462 = sadd.s32 %s461, %s459
      %s463 = smul.addr %s462, 4
      %s464 = scalar_lea.vmem %s5, %s463
      %p465 = scmp.lt.s32.totalorder %s23, 1
      %s466 = scalar_select %p465, %s23, 1
      %p467 = scmp.lt.s32.totalorder %s24, 0
      %s468 = scalar_select %p467, %s24, 0
      %s469 = sadd.s32 %s468, %s466
      %s470 = smul.addr %s469, 4
      %s471 = scalar_lea.vmem %s6, %s470
      %p472 = scmp.lt.s32.totalorder %s23, 1
      %s473 = scalar_select %p472, %s23, 1
      %p474 = scmp.lt.s32.totalorder %s24, 0
      %s475 = scalar_select %p474, %s24, 0
      %s476 = sadd.s32 %s475, %s473
      %s477 = smul.addr %s476, 4
      %s478 = scalar_lea.vmem %s7, %s477
      // Predicated region
      $region41: #{transformer_forward.8} parent=39 // pred_check
        %p479 = pneg %p163
      $region42: #{transformer_forward.8} parent=39 // pred_check_branch
        %481 = sbr.rel (%p479) target = $region44
      $region43: #{transformer_forward.8} parent=39 // pred_region
        _
      $region44: #{transformer_forward.8} parent=39 // pred_fallthru
        _
      // Predicated region
      $region45: #{transformer_forward.8} parent=39 // pred_check
        %p482 = pneg %p191
      $region46: #{transformer_forward.8} parent=39 // pred_check_branch
        %484 = sbr.rel (%p482) target = $region48
      $region47: #{transformer_forward.8} parent=39 // pred_region
        _
      $region48: #{transformer_forward.8} parent=39 // pred_fallthru
        _
      // Predicated region
      $region49: #{transformer_forward.8} parent=39 // pred_check
        %p485 = pneg %p219
      $region50: #{transformer_forward.8} parent=39 // pred_check_branch
        %487 = sbr.rel (%p485) target = $region52
      $region51: #{transformer_forward.8} parent=39 // pred_region
        _
      $region52: #{transformer_forward.8} parent=39 // pred_fallthru
        _
    $region40: #{transformer_forward.8} parent=5 // pred_fallthru
      _
    %p488 = scmp.le.s32.totalorder 2, %s14
    // Predicated region
    $region53: #{transformer_forward.8} parent=5 // pred_check
      %p489 = pneg %p488
    $region54: #{transformer_forward.8} parent=5 // pred_check_branch
      %491 = sbr.rel (%p489) target = $region56
    $region55: #{transformer_forward.8} parent=5 // pred_region
      %s492 = ssub.s32 %s14, 2
      // Predicated region
      $region57: #{transformer_forward.8} parent=55 // pred_check
        %p493 = pneg %p169
      $region58: #{transformer_forward.8} parent=55 // pred_check_branch
        %495 = sbr.rel (%p493) target = $region60
      $region59: #{transformer_forward.8} parent=55 // pred_region
        %p496 = scmp.lt.s32.totalorder %s25, 1
        %s497 = scalar_select %p496, %s25, 1
        %p498 = scmp.lt.s32.totalorder %s26, 0
        %s499 = scalar_select %p498, %s26, 0
        %s500 = sadd.s32 %s499, %s497
        %s501 = smul.addr %s500, 4
        %s502 = scalar_lea.vmem %s5, %s501
      $region60: #{transformer_forward.8} parent=55 // pred_fallthru
        _
      // Predicated region
      $region61: #{transformer_forward.8} parent=55 // pred_check
        %p503 = pneg %p197
      $region62: #{transformer_forward.8} parent=55 // pred_check_branch
        %505 = sbr.rel (%p503) target = $region64
      $region63: #{transformer_forward.8} parent=55 // pred_region
        %p506 = scmp.lt.s32.totalorder %s25, 1
        %s507 = scalar_select %p506, %s25, 1
        %p508 = scmp.lt.s32.totalorder %s26, 0
        %s509 = scalar_select %p508, %s26, 0
        %s510 = sadd.s32 %s509, %s507
        %s511 = smul.addr %s510, 4
        %s512 = scalar_lea.vmem %s6, %s511
      $region64: #{transformer_forward.8} parent=55 // pred_fallthru
        _
      // Predicated region
      $region65: #{transformer_forward.8} parent=55 // pred_check
        %p513 = pneg %p225
      $region66: #{transformer_forward.8} parent=55 // pred_check_branch
        %515 = sbr.rel (%p513) target = $region68
      $region67: #{transformer_forward.8} parent=55 // pred_region
        %p516 = scmp.lt.s32.totalorder %s25, 1
        %s517 = scalar_select %p516, %s25, 1
        %p518 = scmp.lt.s32.totalorder %s26, 0
        %s519 = scalar_select %p518, %s26, 0
        %s520 = sadd.s32 %s519, %s517
        %s521 = smul.addr %s520, 4
        %s522 = scalar_lea.vmem %s7, %s521
      $region68: #{transformer_forward.8} parent=55 // pred_fallthru
        _
    $region56: #{transformer_forward.8} parent=5 // pred_fallthru
      _
  $region6: #{transformer_forward.8} parent=0 // loop_footer
    %s18 = sadd.s32 1, %s14
  $region7: #{transformer_forward.8} parent=0 // loop_footer_branch
    %13 = sbr.rel target = $region3
  $region8: #{transformer_forward.8} parent=0 // loop_exit
    _

// kernel: transformer_forward.15
$region0: #{transformer_forward.15}
  #allocation0 [shape = 'u32[]', space=smem, size = 0x4, offset = 0x4, fixed_abs, tag = 'smem constant byte address 0x4 - core index']
  #allocation1 [shape = 'u32[144,128]{1,0:T(1,128)}', space=vmem, size = 0x12000, scoped, tag = 'internal scratch']
  %s0 = inlined_call_operand.vmem [shape: f32[2,8,32], index: 0, kind: input, shape index: {}]
  %s1 = inlined_call_operand.vmem [shape: bf16[32,128], index: 1, kind: input, shape index: {}]
  %s2 = inlined_call_operand.hbm [shape: bf16[2,8,128], index: 2, kind: output, shape index: {}]
  %s3 = sld [smem:[#allocation0]]
  $region41: #{transformer_forward.15} parent=0
    _
  %s5 = ssub.s32 1, %s3
  %s6 = scalar_select 0, %s5, %s3
  $region1: #{transformer_forward.15} parent=0
    #allocation2 [shape = 'u8[4096]{0}', space=vmem, size = 0x1000, scoped, tag = 'output window, operand 0']
    #allocation3 [shape = 's32[2]{0}', space=sflag, size = 0x8, scoped, tag = 'scoped memory for transformer_forward.15']
    %7 = vsyncpa [#allocation3], 0
    %s8 = scalar_lea.sflag [#allocation3], 1
    %9 = vsyncpa %s8, 0
    loop: start=0, step=1, limit=4
    $region2: #{transformer_forward.15} parent=1 // loop_pre_header
      _
    $region3: #{transformer_forward.15} parent=1 // loop_header
      %s11 = sphi 0, %s15
      %p12 = scmp.ge.s32.totalorder %s11, 4
      %s18 = sphi 0, %s37
      %s19 = sphi 0, %s33
      %s20 = sphi 0, %s29
      %s21 = sphi 0, %s18
      %s22 = sphi 0, %s19
      %s23 = sphi 0, %s20
      %s24 = sphi 0, %s21
      %s25 = sphi 0, %s22
      %s26 = sphi 0, %s23
      %s42 = sphi 0, %s44
      %s45 = sphi 0, %s42
      %s46 = sphi 0, %s45
      %s62 = sphi 0, %s46
      %s68 = sphi 0, %s70
      %s71 = sphi 0, %s68
      %s72 = sphi 0, %s71
      %s88 = sphi 0, %s72
      %s98 = sphi 0, %s100
      %s101 = sphi 0, %s98
      %s102 = sphi 0, %s101
      %s118 = sphi 0, %s102
    $region4: #{transformer_forward.15} parent=1 // loop_header_branch
      %14 = sbr.rel (%p12) target = $region8
    $region5: #{transformer_forward.15} parent=1 // loop_body
      %s16 = ssub.s32 %s11, 1
      %s17 = ssub.s32 %s11, 2
      %s27 = sadd.s32 1, %s20
      %p28 = scmp.ge.s32.totalorder %s27, 1
      %s29 = scalar_select %p28, 0, %s27
      %s30 = sadd.s32 1, %s19
      %s31 = scalar_select %p28, %s30, %s19
      %p32 = scmp.ge.s32.totalorder %s31, 1
      %s33 = scalar_select %p32, 0, %s31
      %s34 = sadd.s32 1, %s18
      %s35 = scalar_select %p32, %s34, %s18
      %p36 = scmp.ge.s32.totalorder %s35, 2
      %s37 = scalar_select %p36, 0, %s35
      %s38 = ssub.s32 %s18, %s37
      %s39 = ssub.s32 %s19, %s33
      %s40 = sor.u32 %s38, %s39
      %p41 = scmp.eq.s32.totalorder %s40, 0
      %s43 = sadd.s32 %s42, 1
      %s44 = scalar_select %p41, %s42, %s43
      %p47 = pneg %p41
      %p48 = scmp.eq.s32.totalorder %s11, 1
      %p49 = por %p47, %p48
      %p50 = scmp.ne.s32.totalorder %s42, %s45
      %p51 = scmp.eq.s32.totalorder %s11, 0
      %p52 = por %p50, %p51
      %p53 = scmp.ne.s32.totalorder %s42, %s45
      %p54 = scmp.eq.s32.totalorder %s16, 1
      %p55 = por %p53, %p54
      %p56 = scmp.ne.s32.totalorder %s45, %s46
      %p57 = scmp.eq.s32.totalorder %s16, 0
      %p58 = por %p56, %p57
      %p59 = scmp.ne.s32.totalorder %s45, %s46
      %p60 = scmp.eq.s32.totalorder %s17, 1
      %p61 = por %p59, %p60
      %p63 = scmp.ne.s32.totalorder %s46, %s62
      %p64 = scmp.eq.s32.totalorder %s17, 0
      %p65 = por %p63, %p64
      %s66 = ssub.s32 %s20, %s29
      %p67 = scmp.eq.s32.totalorder %s66, 0
      %s69 = sadd.s32 %s68, 1
      %s70 = scalar_select %p67, %s68, %s69
      %p73 = pneg %p67
      %p74 = scmp.eq.s32.totalorder %s11, 1
      %p75 = por %p73, %p74
      %p76 = scmp.ne.s32.totalorder %s68, %s71
      %p77 = scmp.eq.s32.totalorder %s11, 0
      %p78 = por %p76, %p77
      %p79 = scmp.ne.s32.totalorder %s68, %s71
      %p80 = scmp.eq.s32.totalorder %s16, 1
      %p81 = por %p79, %p80
      %p82 = scmp.ne.s32.totalorder %s71, %s72
      %p83 = scmp.eq.s32.totalorder %s16, 0
      %p84 = por %p82, %p83
      %p85 = scmp.ne.s32.totalorder %s71, %s72
      %p86 = scmp.eq.s32.totalorder %s17, 1
      %p87 = por %p85, %p86
      %p89 = scmp.ne.s32.totalorder %s72, %s88
      %p90 = scmp.eq.s32.totalorder %s17, 0
      %p91 = por %p89, %p90
      %s92 = ssub.s32 %s18, %s37
      %s93 = ssub.s32 %s19, %s33
      %s94 = sor.u32 %s92, %s93
      %s95 = ssub.s32 %s20, %s29
      %s96 = sor.u32 %s94, %s95
      %p97 = scmp.eq.s32.totalorder %s96, 0
      %s99 = sadd.s32 %s98, 1
      %s100 = scalar_select %p97, %s98, %s99
      %p103 = pneg %p97
      %p104 = scmp.eq.s32.totalorder %s11, 1
      %p105 = por %p103, %p104
      %p106 = scmp.ne.s32.totalorder %s98, %s101
      %p107 = scmp.eq.s32.totalorder %s11, 0
      %p108 = por %p106, %p107
      %p109 = scmp.ne.s32.totalorder %s98, %s101
      %p110 = scmp.eq.s32.totalorder %s16, 1
      %p111 = por %p109, %p110
      %p112 = scmp.ne.s32.totalorder %s101, %s102
      %p113 = scmp.eq.s32.totalorder %s16, 0
      %p114 = por %p112, %p113
      %p115 = scmp.ne.s32.totalorder %s101, %s102
      %p116 = scmp.eq.s32.totalorder %s17, 1
      %p117 = por %p115, %p116
      %p119 = scmp.ne.s32.totalorder %s102, %s118
      %p120 = scmp.eq.s32.totalorder %s17, 0
      %p121 = por %p119, %p120
      %p122 = scmp.le.s32.totalorder 1, %s11
      %p123 = scmp.lt.s32.totalorder %s11, 3
      %p124 = pnand %p122, %p123
      %p125 = pneg %p124
      // Predicated region
      $region9: #{transformer_forward.15} parent=5 // pred_check
        _
      $region10: #{transformer_forward.15} parent=5 // pred_check_branch
        %127 = sbr.rel (%p124) target = $region12
      $region11: #{transformer_forward.15} parent=5 // pred_region
        %s128 = ssub.s32 %s11, 1
        // Predicated region
        $region13: #{transformer_forward.15} parent=11 // pred_check
          %p129 = pneg %p84
        $region14: #{transformer_forward.15} parent=11 // pred_check_branch
          %131 = sbr.rel (%p129) target = $region16
        $region15: #{transformer_forward.15} parent=11 // pred_region
          %p132 = scmp.lt.s32.totalorder %s23, 0
          %s133 = scalar_select %p132, %s23, 0
          %s134 = smul.addr %s133, 4
          %s135 = scalar_lea.vmem %s1, %s134
        $region16: #{transformer_forward.15} parent=11 // pred_fallthru
          _
      $region12: #{transformer_forward.15} parent=5 // pred_fallthru
        _
      %p136 = scmp.lt.s32.totalorder %s11, 2
      // Predicated region
      $region17: #{transformer_forward.15} parent=5 // pred_check
        %p137 = pneg %p136
      $region18: #{transformer_forward.15} parent=5 // pred_check_branch
        %139 = sbr.rel (%p137) target = $region20
      $region19: #{transformer_forward.15} parent=5 // pred_region
        // Predicated region
        $region21: #{transformer_forward.15} parent=19 // pred_check
          %p140 = pneg %p52
        $region22: #{transformer_forward.15} parent=19 // pred_check_branch
          %142 = sbr.rel (%p140) target = $region24
        $region23: #{transformer_forward.15} parent=19 // pred_region
          %p143 = scmp.lt.s32.totalorder %s18, 1
          %s144 = scalar_select %p143, %s18, 1
          %p145 = scmp.lt.s32.totalorder %s19, 0
          %s146 = scalar_select %p145, %s19, 0
          %s147 = sadd.s32 %s146, %s144
          %s148 = smul.addr %s147, 8
          %s149 = scalar_lea.vmem %s0, %s148
        $region24: #{transformer_forward.15} parent=19 // pred_fallthru
          _
      $region20: #{transformer_forward.15} parent=5 // pred_fallthru
        _
      %p150 = scmp.le.s32.totalorder 1, %s11
      %p151 = scmp.lt.s32.totalorder %s11, 3
      %p152 = pnand %p150, %p151
      %p153 = pneg %p152
      // Predicated region
      $region25: #{transformer_forward.15} parent=5 // pred_check
        _
      $region26: #{transformer_forward.15} parent=5 // pred_check_branch
        %155 = sbr.rel (%p152) target = $region28
      $region27: #{transformer_forward.15} parent=5 // pred_region
        %s156 = ssub.s32 %s11, 1
        %p157 = scmp.lt.s32.totalorder %s21, 1
        %s158 = scalar_select %p157, %s21, 1
        %p159 = scmp.lt.s32.totalorder %s22, 0
        %s160 = scalar_select %p159, %s22, 0
        %s161 = sadd.s32 %s160, %s158
        %s162 = smul.addr %s161, 8
        %s163 = scalar_lea.vmem %s0, %s162
        %p164 = pneg %p58
        %p165 = pneg %p55
        %p166 = scmp.lt.s32.totalorder %s23, 0
        %s167 = scalar_select %p166, %s23, 0
        %s168 = smul.addr %s167, 4
        %s169 = scalar_lea.vmem %s1, %s168
        %p170 = pneg %p84
        %p171 = pneg %p81
        %p172 = pneg %p114
        %p173 = pneg %p111
        %s174 = sand.u32 %s101, 1
        %s175 = scalar_lea.sflag [#allocation3], %s174
        %s176 = sand.u32 %s101, 1
        %s177 = smul.addr %s176, 4
        %s178 = scalar_lea.vmem [#allocation2], %s177
        %p179 = scmp.lt.s32.totalorder %s21, 1
        %s180 = scalar_select %p179, %s21, 1
        %p181 = scmp.lt.s32.totalorder %s22, 0
        %s182 = scalar_select %p181, %s22, 0
        %s183 = sadd.s32 %s182, %s180
        %s184 = smul.addr %s183, 8
        %s185 = scalar_lea.vmem %s0, %s184
        %p186 = scmp.lt.s32.totalorder %s23, 0
        %s187 = scalar_select %p186, %s23, 0
        %s188 = smul.addr %s187, 4
        %s189 = scalar_lea.vmem %s1, %s188
        %v191 = vld [vmem:[%s185] sm:$0xff]
        %v192 = vpack.c.bf16 %v191, %v191
        %v193 = vld [vmem:[%s189] sm:$0xf]
        %v194 = vld [vmem:[%s189 + $0x4] sm:$0xf]
        %v195 = vld [vmem:[%s189 + $0x8] sm:$0xf]
        %v196 = vld [vmem:[%s189 + $0xc] sm:$0xf]
        %v201 = vunpack.c.l.b16 %v193
        %v202 = vunpack.c.l.b16 %v194
        %v203 = vunpack.c.l.b16 %v195
        %v204 = vunpack.c.l.b16 %v196
        %v205 = vpack.c.b16 %v202, %v201
        %v206 = vpack.c.b16 %v204, %v203
        %vm209 = vcmask 261120
        %v211 = vsel %vm209, %v192, 0
        %213 = vmatprep.subr.bf16.mxu0 0
        %214 = vmatpush1.bf16.msra.mxu0 0
        %215 = vmatprep.subr.bf16.mxu0 0
        %216 = vmatpush1.bf16.msra.mxu0 0
        %217 = vmatprep.subr.bf16.mxu0 0
        %218 = vmatpush1.bf16.msra.mxu0 0
        %219 = vmatprep.subr.bf16.mxu0 0
        %220 = vmatpush1.bf16.msra.mxu0 0
        %221 = vmatprep.subr.bf16.mxu0 0
        %222 = vmatpush1.bf16.msra.mxu0 0
        %223 = vmatprep.subr.bf16.mxu0 0
        %224 = vmatpush1.bf16.msra.mxu0 0
        %225 = vmatprep.subr.bf16.mxu0 0
        %226 = vmatpush1.bf16.msra.mxu0 %v206
        %227 = vmatprep.subr.bf16.mxu0 0
        %228 = vmatpush1.bf16.msra.mxu0 %v205
        %229 = vmatprep.subr.bf16.mxu0 0
        %230 = vmatpush2.bf16.msra.mxu0 0
        %231 = vmatprep.subr.bf16.mxu0 0
        %232 = vmatpush2.bf16.msra.mxu0 0
        %233 = vmatprep.subr.bf16.mxu0 0
        %234 = vmatpush2.bf16.msra.mxu0 0
        %235 = vmatprep.subr.bf16.mxu0 0
        %236 = vmatpush2.bf16.msra.mxu0 0
        %237 = vmatprep.subr.bf16.mxu0 0
        %238 = vmatpush2.bf16.msra.mxu0 0
        %239 = vmatprep.subr.bf16.mxu0 0
        %240 = vmatpush2.bf16.msra.mxu0 0
        %241 = vmatprep.subr.bf16.mxu0 0
        %242 = vmatpush2.bf16.msra.mxu0 0
        %243 = vmatprep.subr.bf16.mxu0 0
        %244 = vmatpush2.bf16.msra.mxu0 0
        %245 = vmatprep.mubr.bf16.mxu0 0
        %246 = vmatmul.mubr.bf16.gmra.mxu0 %v211
        %v247 = vpop.f32.mrf.mxu0
        %v248 = vadd.f32 0.0, %v247
        %v249 = vpop.f32.mrf.mxu0
        %v250 = vpop.f32.mrf.mxu0
        %v251 = vpop.f32.mrf.mxu0
        %252 = vdwg.mxu0
        %v253 = vpack.c.bf16 %v248, %v248
        %254 = vst [vmem:[%s178] sm:$0xf] %v253
        %s255 = sand.u32 %s101, 1
        %s256 = scalar_lea.sflag [#allocation3], %s255
        %s257 = sand.u32 %s101, 1
        %s258 = smul.addr %s257, 4
        %s259 = scalar_lea.vmem [#allocation2], %s258
        // Predicated region
        $region29: #{transformer_forward.15} parent=27 // pred_check
          %p260 = pneg %p111
        $region30: #{transformer_forward.15} parent=27 // pred_check_branch
          %262 = sbr.rel (%p260) target = $region32
        $region31: #{transformer_forward.15} parent=27 // pred_region
          %s264 = ssub.s32 64, 64
          %265 = vsyncadd %s256, %s264
          %s266 = sadd.s32 %s23, %s22
          %s267 = sadd.s32 %s266, %s21
          %s268 = smul.addr %s267, 64
          %s269 = scalar_lea.hbm %s2, %s268
          %s271 = sshll.u32 %s259, 4
          %s272 = int_to_ptr.vmem [resolvable:$true] %s271
          %274 = dma.vmem_to_hbm [thread:$0]  %s272, 64, %s269, %s256
        $region32: #{transformer_forward.15} parent=27 // pred_fallthru
          _
      $region28: #{transformer_forward.15} parent=5 // pred_fallthru
        _
      %p275 = scmp.le.s32.totalorder 2, %s11
      // Predicated region
      $region33: #{transformer_forward.15} parent=5 // pred_check
        %p276 = pneg %p275
      $region34: #{transformer_forward.15} parent=5 // pred_check_branch
        %278 = sbr.rel (%p276) target = $region36
      $region35: #{transformer_forward.15} parent=5 // pred_region
        %s279 = ssub.s32 %s11, 2
        // Predicated region
        $region37: #{transformer_forward.15} parent=35 // pred_check
          %p280 = pneg %p117
        $region38: #{transformer_forward.15} parent=35 // pred_check_branch
          %282 = sbr.rel (%p280) target = $region40
        $region39: #{transformer_forward.15} parent=35 // pred_region
          %s283 = sand.u32 %s102, 1
          %s284 = scalar_lea.sflag [#allocation3], %s283
          %s285 = sand.u32 %s102, 1
          %s286 = smul.addr %s285, 4
          %s287 = scalar_lea.vmem [#allocation2], %s286
          %288 = dma.done %s284, 64
        $region40: #{transformer_forward.15} parent=35 // pred_fallthru
          _
      $region36: #{transformer_forward.15} parent=5 // pred_fallthru
        _
    $region6: #{transformer_forward.15} parent=1 // loop_footer
      %s15 = sadd.s32 1, %s11
    $region7: #{transformer_forward.15} parent=1 // loop_footer_branch
      %10 = sbr.rel target = $region3
    $region8: #{transformer_forward.15} parent=1 // loop_exit
      _
    %289 = vsyncpa [#allocation3], 1
    %s290 = scalar_lea.sflag [#allocation3], 1
    %291 = vsyncpa %s290, 1

// kernel: transformer_forward.9
$region0: #{transformer_forward.9}
  #allocation0 [shape = 'u32[]', space=smem, size = 0x4, offset = 0x4, fixed_abs, tag = 'smem constant byte address 0x4 - core index']
  #allocation1 [shape = 'u32[144,128]{1,0:T(1,128)}', space=vmem, size = 0x12000, scoped, tag = 'internal scratch']
  #allocation2 [shape = 'f32[4,8,1]{2,1,0:T(8,128)}', space=vmem, size = 0x4000, scoped, tag = 'scratch operand']
  #allocation3 [shape = 'f32[4,8,1]{2,1,0:T(8,128)}', space=vmem, size = 0x4000, scoped, tag = 'scratch operand']
  #allocation4 [shape = 'f32[4,8,8]{2,1,0:T(8,128)}', space=vmem, size = 0x4000, scoped, tag = 'scratch operand']
  %s0 = inlined_call_operand.vmem [shape: f32[2,8,32], index: 0, kind: input, shape index: {}]
  %s1 = inlined_call_operand.vmem [shape: bf16[2,8,32], index: 1, kind: input, shape index: {}]
  %s2 = inlined_call_operand.vmem [shape: bf16[2,8,32], index: 2, kind: input, shape index: {}]
  %s3 = inlined_call_operand.vmem [shape: bf16[2,8,32], index: 3, kind: input, shape index: {}]
  %s4 = inlined_call_operand.vmem [shape: bf16[32,32], index: 4, kind: input, shape index: {}]
  %s5 = inlined_call_operand.vmem [shape: f32[1,32], index: 5, kind: input, shape index: {}]
  %s6 = inlined_call_operand.vmem [shape: f32[2,8,32], index: 6, kind: output, shape index: {}]
  %s7 = sld [smem:[#allocation0]]
  $region72: #{transformer_forward.9} parent=0
    _
  %s9 = ssub.s32 1, %s7
  %s10 = scalar_select 0, %s9, %s7
  loop: start=0, step=1, limit=4
  $region2: #{transformer_forward.9} parent=0 // loop_pre_header
    _
  $region3: #{transformer_forward.9} parent=0 // loop_header
    %s12 = sphi 0, %s16
    %p13 = scmp.ge.s32.totalorder %s12, 4
    %s19 = sphi 0, %s31
    %s20 = sphi 0, %s27
    %s21 = sphi 0, %s19
    %s22 = sphi 0, %s20
    %s23 = sphi 0, %s21
    %s24 = sphi 0, %s22
    %s36 = sphi 0, %s38
    %s39 = sphi 0, %s36
    %s40 = sphi 0, %s39
    %s56 = sphi 0, %s40
    %s64 = sphi 0, %s66
    %s67 = sphi 0, %s64
    %s68 = sphi 0, %s67
    %s84 = sphi 0, %s68
    %s90 = sphi 0, %s92
    %s93 = sphi 0, %s90
    %s94 = sphi 0, %s93
    %s110 = sphi 0, %s94
    %s116 = sphi 0, %s118
    %s119 = sphi 0, %s116
    %s120 = sphi 0, %s119
    %s136 = sphi 0, %s120
    %s140 = sphi 0, %s140
    %s142 = sphi 0, %s140
    %s143 = sphi 0, %s142
    %s157 = sphi 0, %s143
    %s161 = sphi 0, %s161
    %s163 = sphi 0, %s161
    %s164 = sphi 0, %s163
    %s178 = sphi 0, %s164
    %s186 = sphi 0, %s188
    %s189 = sphi 0, %s186
    %s190 = sphi 0, %s189
    %s206 = sphi 0, %s190
  $region4: #{transformer_forward.9} parent=0 // loop_header_branch
    %15 = sbr.rel (%p13) target = $region8
  $region5: #{transformer_forward.9} parent=0 // loop_body
    %s17 = ssub.s32 %s12, 1
    %s18 = ssub.s32 %s12, 2
    %s25 = sadd.s32 1, %s20
    %p26 = scmp.ge.s32.totalorder %s25, 1
    %s27 = scalar_select %p26, 0, %s25
    %s28 = sadd.s32 1, %s19
    %s29 = scalar_select %p26, %s28, %s19
    %p30 = scmp.ge.s32.totalorder %s29, 2
    %s31 = scalar_select %p30, 0, %s29
    %s32 = ssub.s32 %s19, %s31
    %s33 = ssub.s32 %s20, %s27
    %s34 = sor.u32 %s32, %s33
    %p35 = scmp.eq.s32.totalorder %s34, 0
    %s37 = sadd.s32 %s36, 1
    %s38 = scalar_select %p35, %s36, %s37
    %p41 = pneg %p35
    %p42 = scmp.eq.s32.totalorder %s12, 1
    %p43 = por %p41, %p42
    %p44 = scmp.ne.s32.totalorder %s36, %s39
    %p45 = scmp.eq.s32.totalorder %s12, 0
    %p46 = por %p44, %p45
    %p47 = scmp.ne.s32.totalorder %s36, %s39
    %p48 = scmp.eq.s32.totalorder %s17, 1
    %p49 = por %p47, %p48
    %p50 = scmp.ne.s32.totalorder %s39, %s40
    %p51 = scmp.eq.s32.totalorder %s17, 0
    %p52 = por %p50, %p51
    %p53 = scmp.ne.s32.totalorder %s39, %s40
    %p54 = scmp.eq.s32.totalorder %s18, 1
    %p55 = por %p53, %p54
    %p57 = scmp.ne.s32.totalorder %s40, %s56
    %p58 = scmp.eq.s32.totalorder %s18, 0
    %p59 = por %p57, %p58
    %s60 = ssub.s32 %s19, %s31
    %s61 = ssub.s32 %s20, %s27
    %s62 = sor.u32 %s60, %s61
    %p63 = scmp.eq.s32.totalorder %s62, 0
    %s65 = sadd.s32 %s64, 1
    %s66 = scalar_select %p63, %s64, %s65
    %p69 = pneg %p63
    %p70 = scmp.eq.s32.totalorder %s12, 1
    %p71 = por %p69, %p70
    %p72 = scmp.ne.s32.totalorder %s64, %s67
    %p73 = scmp.eq.s32.totalorder %s12, 0
    %p74 = por %p72, %p73
    %p75 = scmp.ne.s32.totalorder %s64, %s67
    %p76 = scmp.eq.s32.totalorder %s17, 1
    %p77 = por %p75, %p76
    %p78 = scmp.ne.s32.totalorder %s67, %s68
    %p79 = scmp.eq.s32.totalorder %s17, 0
    %p80 = por %p78, %p79
    %p81 = scmp.ne.s32.totalorder %s67, %s68
    %p82 = scmp.eq.s32.totalorder %s18, 1
    %p83 = por %p81, %p82
    %p85 = scmp.ne.s32.totalorder %s68, %s84
    %p86 = scmp.eq.s32.totalorder %s18, 0
    %p87 = por %p85, %p86
    %s88 = ssub.s32 %s19, %s31
    %p89 = scmp.eq.s32.totalorder %s88, 0
    %s91 = sadd.s32 %s90, 1
    %s92 = scalar_select %p89, %s90, %s91
    %p95 = pneg %p89
    %p96 = scmp.eq.s32.totalorder %s12, 1
    %p97 = por %p95, %p96
    %p98 = scmp.ne.s32.totalorder %s90, %s93
    %p99 = scmp.eq.s32.totalorder %s12, 0
    %p100 = por %p98, %p99
    %p101 = scmp.ne.s32.totalorder %s90, %s93
    %p102 = scmp.eq.s32.totalorder %s17, 1
    %p103 = por %p101, %p102
    %p104 = scmp.ne.s32.totalorder %s93, %s94
    %p105 = scmp.eq.s32.totalorder %s17, 0
    %p106 = por %p104, %p105
    %p107 = scmp.ne.s32.totalorder %s93, %s94
    %p108 = scmp.eq.s32.totalorder %s18, 1
    %p109 = por %p107, %p108
    %p111 = scmp.ne.s32.totalorder %s94, %s110
    %p112 = scmp.eq.s32.totalorder %s18, 0
    %p113 = por %p111, %p112
    %s114 = ssub.s32 %s19, %s31
    %p115 = scmp.eq.s32.totalorder %s114, 0
    %s117 = sadd.s32 %s116, 1
    %s118 = scalar_select %p115, %s116, %s117
    %p121 = pneg %p115
    %p122 = scmp.eq.s32.totalorder %s12, 1
    %p123 = por %p121, %p122
    %p124 = scmp.ne.s32.totalorder %s116, %s119
    %p125 = scmp.eq.s32.totalorder %s12, 0
    %p126 = por %p124, %p125
    %p127 = scmp.ne.s32.totalorder %s116, %s119
    %p128 = scmp.eq.s32.totalorder %s17, 1
    %p129 = por %p127, %p128
    %p130 = scmp.ne.s32.totalorder %s119, %s120
    %p131 = scmp.eq.s32.totalorder %s17, 0
    %p132 = por %p130, %p131
    %p133 = scmp.ne.s32.totalorder %s119, %s120
    %p134 = scmp.eq.s32.totalorder %s18, 1
    %p135 = por %p133, %p134
    %p137 = scmp.ne.s32.totalorder %s120, %s136
    %p138 = scmp.eq.s32.totalorder %s18, 0
    %p139 = por %p137, %p138
    %s141 = sadd.s32 %s140, 1
    %p144 = scmp.eq.s32.totalorder %s12, 1
    %p145 = scmp.ne.s32.totalorder %s140, %s142
    %p146 = scmp.eq.s32.totalorder %s12, 0
    %p147 = por %p145, %p146
    %p148 = scmp.ne.s32.totalorder %s140, %s142
    %p149 = scmp.eq.s32.totalorder %s17, 1
    %p150 = por %p148, %p149
    %p151 = scmp.ne.s32.totalorder %s142, %s143
    %p152 = scmp.eq.s32.totalorder %s17, 0
    %p153 = por %p151, %p152
    %p154 = scmp.ne.s32.totalorder %s142, %s143
    %p155 = scmp.eq.s32.totalorder %s18, 1
    %p156 = por %p154, %p155
    %p158 = scmp.ne.s32.totalorder %s143, %s157
    %p159 = scmp.eq.s32.totalorder %s18, 0
    %p160 = por %p158, %p159
    %s162 = sadd.s32 %s161, 1
    %p165 = scmp.eq.s32.totalorder %s12, 1
    %p166 = scmp.ne.s32.totalorder %s161, %s163
    %p167 = scmp.eq.s32.totalorder %s12, 0
    %p168 = por %p166, %p167
    %p169 = scmp.ne.s32.totalorder %s161, %s163
    %p170 = scmp.eq.s32.totalorder %s17, 1
    %p171 = por %p169, %p170
    %p172 = scmp.ne.s32.totalorder %s163, %s164
    %p173 = scmp.eq.s32.totalorder %s17, 0
    %p174 = por %p172, %p173
    %p175 = scmp.ne.s32.totalorder %s163, %s164
    %p176 = scmp.eq.s32.totalorder %s18, 1
    %p177 = por %p175, %p176
    %p179 = scmp.ne.s32.totalorder %s164, %s178
    %p180 = scmp.eq.s32.totalorder %s18, 0
    %p181 = por %p179, %p180
    %s182 = ssub.s32 %s19, %s31
    %s183 = ssub.s32 %s20, %s27
    %s184 = sor.u32 %s182, %s183
    %p185 = scmp.eq.s32.totalorder %s184, 0
    %s187 = sadd.s32 %s186, 1
    %s188 = scalar_select %p185, %s186, %s187
    %p191 = pneg %p185
    %p192 = scmp.eq.s32.totalorder %s12, 1
    %p193 = por %p191, %p192
    %p194 = scmp.ne.s32.totalorder %s186, %s189
    %p195 = scmp.eq.s32.totalorder %s12, 0
    %p196 = por %p194, %p195
    %p197 = scmp.ne.s32.totalorder %s186, %s189
    %p198 = scmp.eq.s32.totalorder %s17, 1
    %p199 = por %p197, %p198
    %p200 = scmp.ne.s32.totalorder %s189, %s190
    %p201 = scmp.eq.s32.totalorder %s17, 0
    %p202 = por %p200, %p201
    %p203 = scmp.ne.s32.totalorder %s189, %s190
    %p204 = scmp.eq.s32.totalorder %s18, 1
    %p205 = por %p203, %p204
    %p207 = scmp.ne.s32.totalorder %s190, %s206
    %p208 = scmp.eq.s32.totalorder %s18, 0
    %p209 = por %p207, %p208
    %p210 = scmp.le.s32.totalorder 1, %s12
    %p211 = scmp.lt.s32.totalorder %s12, 3
    %p212 = pnand %p210, %p211
    %p213 = pneg %p212
    // Predicated region
    $region9: #{transformer_forward.9} parent=5 // pred_check
      _
    $region10: #{transformer_forward.9} parent=5 // pred_check_branch
      %215 = sbr.rel (%p212) target = $region12
    $region11: #{transformer_forward.9} parent=5 // pred_region
      %s216 = ssub.s32 %s12, 1
      // Predicated region
      $region13: #{transformer_forward.9} parent=11 // pred_check
        %p217 = pneg %p153
      $region14: #{transformer_forward.9} parent=11 // pred_check_branch
        %219 = sbr.rel (%p217) target = $region16
      $region15: #{transformer_forward.9} parent=11 // pred_region
        _
      $region16: #{transformer_forward.9} parent=11 // pred_fallthru
        _
      // Predicated region
      $region17: #{transformer_forward.9} parent=11 // pred_check
        %p220 = pneg %p174
      $region18: #{transformer_forward.9} parent=11 // pred_check_branch
        %222 = sbr.rel (%p220) target = $region20
      $region19: #{transformer_forward.9} parent=11 // pred_region
        _
      $region20: #{transformer_forward.9} parent=11 // pred_fallthru
        _
    $region12: #{transformer_forward.9} parent=5 // pred_fallthru
      _
    %p223 = scmp.lt.s32.totalorder %s12, 2
    // Predicated region
    $region21: #{transformer_forward.9} parent=5 // pred_check
      %p224 = pneg %p223
    $region22: #{transformer_forward.9} parent=5 // pred_check_branch
      %226 = sbr.rel (%p224) target = $region24
    $region23: #{transformer_forward.9} parent=5 // pred_region
      // Predicated region
      $region25: #{transformer_forward.9} parent=23 // pred_check
        %p227 = pneg %p46
      $region26: #{transformer_forward.9} parent=23 // pred_check_branch
        %229 = sbr.rel (%p227) target = $region28
      $region27: #{transformer_forward.9} parent=23 // pred_region
        %p230 = scmp.lt.s32.totalorder %s19, 1
        %s231 = scalar_select %p230, %s19, 1
        %p232 = scmp.lt.s32.totalorder %s20, 0
        %s233 = scalar_select %p232, %s20, 0
        %s234 = sadd.s32 %s233, %s231
        %s235 = smul.addr %s234, 8
        %s236 = scalar_lea.vmem %s0, %s235
      $region28: #{transformer_forward.9} parent=23 // pred_fallthru
        _
      // Predicated region
      $region29: #{transformer_forward.9} parent=23 // pred_check
        %p237 = pneg %p74
      $region30: #{transformer_forward.9} parent=23 // pred_check_branch
        %239 = sbr.rel (%p237) target = $region32
      $region31: #{transformer_forward.9} parent=23 // pred_region
        %p240 = scmp.lt.s32.totalorder %s19, 1
        %s241 = scalar_select %p240, %s19, 1
        %p242 = scmp.lt.s32.totalorder %s20, 0
        %s243 = scalar_select %p242, %s20, 0
        %s244 = sadd.s32 %s243, %s241
        %s245 = smul.addr %s244, 4
        %s246 = scalar_lea.vmem %s1, %s245
      $region32: #{transformer_forward.9} parent=23 // pred_fallthru
        _
      // Predicated region
      $region33: #{transformer_forward.9} parent=23 // pred_check
        %p247 = pneg %p100
      $region34: #{transformer_forward.9} parent=23 // pred_check_branch
        %249 = sbr.rel (%p247) target = $region36
      $region35: #{transformer_forward.9} parent=23 // pred_region
        %p250 = scmp.lt.s32.totalorder %s19, 1
        %s251 = scalar_select %p250, %s19, 1
        %s252 = smul.addr %s251, 4
        %s253 = scalar_lea.vmem %s2, %s252
      $region36: #{transformer_forward.9} parent=23 // pred_fallthru
        _
      // Predicated region
      $region37: #{transformer_forward.9} parent=23 // pred_check
        %p254 = pneg %p126
      $region38: #{transformer_forward.9} parent=23 // pred_check_branch
        %256 = sbr.rel (%p254) target = $region40
      $region39: #{transformer_forward.9} parent=23 // pred_region
        %p257 = scmp.lt.s32.totalorder %s19, 1
        %s258 = scalar_select %p257, %s19, 1
        %s259 = smul.addr %s258, 4
        %s260 = scalar_lea.vmem %s3, %s259
      $region40: #{transformer_forward.9} parent=23 // pred_fallthru
        _
    $region24: #{transformer_forward.9} parent=5 // pred_fallthru
      _
    %p261 = scmp.le.s32.totalorder 1, %s12
    %p262 = scmp.lt.s32.totalorder %s12, 3
    %p263 = pnand %p261, %p262
    %p264 = pneg %p263
    // Predicated region
    $region41: #{transformer_forward.9} parent=5 // pred_check
      _
    $region42: #{transformer_forward.9} parent=5 // pred_check_branch
      %266 = sbr.rel (%p263) target = $region44
    $region43: #{transformer_forward.9} parent=5 // pred_region
      %s267 = ssub.s32 %s12, 1
      %p268 = scmp.lt.s32.totalorder %s21, 1
      %s269 = scalar_select %p268, %s21, 1
      %p270 = scmp.lt.s32.totalorder %s22, 0
      %s271 = scalar_select %p270, %s22, 0
      %s272 = sadd.s32 %s271, %s269
      %s273 = smul.addr %s272, 8
      %s274 = scalar_lea.vmem %s0, %s273
      %p275 = pneg %p52
      %p276 = pneg %p49
      %p277 = scmp.lt.s32.totalorder %s21, 1
      %s278 = scalar_select %p277, %s21, 1
      %p279 = scmp.lt.s32.totalorder %s22, 0
      %s280 = scalar_select %p279, %s22, 0
      %s281 = sadd.s32 %s280, %s278
      %s282 = smul.addr %s281, 4
      %s283 = scalar_lea.vmem %s1, %s282
      %p284 = pneg %p80
      %p285 = pneg %p77
      %p286 = scmp.lt.s32.totalorder %s21, 1
      %s287 = scalar_select %p286, %s21, 1
      %s288 = smul.addr %s287, 4
      %s289 = scalar_lea.vmem %s2, %s288
      %p290 = pneg %p106
      %p291 = pneg %p103
      %p292 = scmp.lt.s32.totalorder %s21, 1
      %s293 = scalar_select %p292, %s21, 1
      %s294 = smul.addr %s293, 4
      %s295 = scalar_lea.vmem %s3, %s294
      %p296 = pneg %p132
      %p297 = pneg %p129
      %p298 = pneg %p153
      %p299 = pneg %p150
      %p300 = pneg %p174
      %p301 = pneg %p171
      %p302 = pneg %p202
      %p303 = pneg %p199
      %p304 = scmp.lt.s32.totalorder %s21, 1
      %s305 = scalar_select %p304, %s21, 1
      %p306 = scmp.lt.s32.totalorder %s22, 0
      %s307 = scalar_select %p306, %s22, 0
      %s308 = sadd.s32 %s307, %s305
      %s309 = smul.addr %s308, 8
      %s310 = scalar_lea.vmem %s6, %s309
      %p311 = scmp.lt.s32.totalorder %s21, 1
      %s312 = scalar_select %p311, %s21, 1
      %p313 = scmp.lt.s32.totalorder %s22, 0
      %s314 = scalar_select %p313, %s22, 0
      %s315 = sadd.s32 %s314, %s312
      %s316 = smul.addr %s315, 8
      %s317 = scalar_lea.vmem %s0, %s316
      %p318 = scmp.lt.s32.totalorder %s21, 1
      %s319 = scalar_select %p318, %s21, 1
      %p320 = scmp.lt.s32.totalorder %s22, 0
      %s321 = scalar_select %p320, %s22, 0
      %s322 = sadd.s32 %s321, %s319
      %s323 = smul.addr %s322, 4
      %s324 = scalar_lea.vmem %s1, %s323
      %p325 = scmp.lt.s32.totalorder %s21, 1
      %s326 = scalar_select %p325, %s21, 1
      %s327 = smul.addr %s326, 4
      %s328 = scalar_lea.vmem %s2, %s327
      %p329 = scmp.lt.s32.totalorder %s21, 1
      %s330 = scalar_select %p329, %s21, 1
      %s331 = smul.addr %s330, 4
      %s332 = scalar_lea.vmem %s3, %s331
      %p333 = scmp.lt.s32.totalorder %s21, 1
      %s334 = scalar_select %p333, %s21, 1
      %p335 = scmp.lt.s32.totalorder %s22, 0
      %s336 = scalar_select %p335, %s22, 0
      %s337 = sadd.s32 %s336, %s334
      %s338 = smul.addr %s337, 8
      %s339 = scalar_lea.vmem %s6, %s338
      %v341 = vld [vmem:[%s324] sm:$0xf]
      %343 = vrot.lane.b32.xlu0 %v341, 120
      %v344 = vpop.permute.xlu0 %343
      %345 = vrot.lane.b32.xlu0 %v341, 112
      %v346 = vpop.permute.xlu0 %345
      %347 = vrot.lane.b32.xlu0 %v341, 104
      %v348 = vpop.permute.xlu0 %347
      %v351 = vpack.i.b16 %v344, %v341
      %v352 = vshrl.u32 %v341, 16
      %v353 = vshrl.u32 %v344, 16
      %v354 = vpack.i.b16 %v353, %v352
      %v357 = vpack.i.b16 %v348, %v346
      %v358 = vshrl.u32 %v346, 16
      %v359 = vshrl.u32 %v348, 16
      %v360 = vpack.i.b16 %v359, %v358
      %v363 = vunpack.c.l.s4 1983009808
      %v364 = vunpack.c.0.s8 %v363
      %v365 = vlaneseq
      %v366 = vshrl.u32 %v365, 7
      %v367 = vsub.s32 %v364, %v366
      %v368 = vrot.slane %v351, %v367
      %v371 = vunpack.c.l.s4 1983009808
      %v372 = vunpack.c.0.s8 %v371
      %v373 = vlaneseq
      %v374 = vshrl.u32 %v373, 7
      %v375 = vsub.s32 %v372, %v374
      %v376 = vrot.slane %v357, %v375
      %v377 = vcombine.low %v368, %v376
      %v378 = vcombine.high %v368, %v376
      %v380 = vunpack.c.l.s4 1934713408
      %v381 = vunpack.c.0.s8 %v380
      %v382 = vlaneseq
      %v383 = vshrl.u32 %v382, 7
      %v384 = vsub.s32 %v381, %v383
      %v385 = vrot.slane %v377, %v384
      %v387 = vunpack.c.l.s4 1934713408
      %v388 = vunpack.c.0.s8 %v387
      %v389 = vlaneseq
      %v390 = vshrl.u32 %v389, 7
      %v391 = vsub.s32 %v388, %v390
      %v392 = vrot.slane %v378, %v391
      %v393 = vcombine.high %v385, 0
      %v394 = vcombine.high %v392, 0
      %v397 = vunpack.c.l.s4 1983009808
      %v398 = vunpack.c.0.s8 %v397
      %v399 = vlaneseq
      %v400 = vshrl.u32 %v399, 7
      %v401 = vsub.s32 %v398, %v400
      %v402 = vrot.slane %v354, %v401
      %v405 = vunpack.c.l.s4 1983009808
      %v406 = vunpack.c.0.s8 %v405
      %v407 = vlaneseq
      %v408 = vshrl.u32 %v407, 7
      %v409 = vsub.s32 %v406, %v408
      %v410 = vrot.slane %v360, %v409
      %v411 = vcombine.low %v402, %v410
      %v412 = vcombine.high %v402, %v410
      %v414 = vunpack.c.l.s4 1934713408
      %v415 = vunpack.c.0.s8 %v414
      %v416 = vlaneseq
      %v417 = vshrl.u32 %v416, 7
      %v418 = vsub.s32 %v415, %v417
      %v419 = vrot.slane %v411, %v418
      %v421 = vunpack.c.l.s4 1934713408
      %v422 = vunpack.c.0.s8 %v421
      %v423 = vlaneseq
      %v424 = vshrl.u32 %v423, 7
      %v425 = vsub.s32 %v422, %v424
      %v426 = vrot.slane %v412, %v425
      %v427 = vcombine.high %v419, 0
      %v428 = vcombine.high %v426, 0
      %vm429 = vcmask 7168
      %430 = vst.msk [vmem:[#allocation2] sm:$0xff] %vm429, -inf
      %431 = vst.msk [vmem:[#allocation2 + $0x8] sm:$0xff] %vm429, -inf
      %432 = vst.msk [vmem:[#allocation2 + $0x10] sm:$0xff] %vm429, -inf
      %433 = vst.msk [vmem:[#allocation2 + $0x18] sm:$0xff] %vm429, -inf
      %434 = vst.msk [vmem:[#allocation3] sm:$0xff] %vm429, 0.0
      %435 = vst.msk [vmem:[#allocation3 + $0x8] sm:$0xff] %vm429, 0.0
      %436 = vst.msk [vmem:[#allocation3 + $0x10] sm:$0xff] %vm429, 0.0
      %437 = vst.msk [vmem:[#allocation3 + $0x18] sm:$0xff] %vm429, 0.0
      %vm438 = vcmask 64512
      %439 = vst.msk [vmem:[#allocation4] sm:$0xff] %vm438, 0.0
      %440 = vst.msk [vmem:[#allocation4 + $0x8] sm:$0xff] %vm438, 0.0
      %441 = vst.msk [vmem:[#allocation4 + $0x10] sm:$0xff] %vm438, 0.0
      %442 = vst.msk [vmem:[#allocation4 + $0x18] sm:$0xff] %vm438, 0.0
      %v443 = vlaneseq
      %v444 = vshrl.u32 %v443, 7
      %v445 = vlaneseq
      %v446 = vand.u32 %v445, 127
      %vm447 = vcmp.ge.s32.totalorder %v444, %v446
      %s448 = sadd.s32 %s22, 1
      // While loop
      $region45: #{transformer_forward.9} parent=43 // loop_pre_header
        _
      $region46: #{transformer_forward.9} parent=43 // loop_header
        %s450 = sphi 0, %s452
        %p451 = scmp.ge.s32.totalorder %s450, %s448
      $region47: #{transformer_forward.9} parent=43 // loop_header_branch
        %454 = sbr.rel (%p451) target = $region51
      $region48: #{transformer_forward.9} parent=43 // loop_body
        %s455 = smul.u32 %s450, 8
        %s456 = sshra.s32 %s455, 3
        %s457 = sand.u32 %s455, 7
        %s458 = smul.addr %s456, 4
        %s459 = scalar_lea.vmem %s328, %s458
        %v460 = vld [vmem:[%s459] sm:$0xf]
        %462 = vrot.lane.b32.xlu0 %v460, 120
        %v463 = vpop.permute.xlu0 %462
        %464 = vrot.lane.b32.xlu0 %v460, 112
        %v465 = vpop.permute.xlu0 %464
        %466 = vrot.lane.b32.xlu0 %v460, 104
        %v467 = vpop.permute.xlu0 %466
        %v470 = vpack.i.b16 %v463, %v460
        %v471 = vshrl.u32 %v460, 16
        %v472 = vshrl.u32 %v463, 16
        %v473 = vpack.i.b16 %v472, %v471
        %v476 = vpack.i.b16 %v467, %v465
        %v477 = vshrl.u32 %v465, 16
        %v478 = vshrl.u32 %v467, 16
        %v479 = vpack.i.b16 %v478, %v477
        %v482 = vunpack.c.l.s4 1983009808
        %v483 = vunpack.c.0.s8 %v482
        %v484 = vlaneseq
        %v485 = vshrl.u32 %v484, 7
        %v486 = vsub.s32 %v483, %v485
        %v487 = vrot.slane %v470, %v486
        %v490 = vunpack.c.l.s4 1983009808
        %v491 = vunpack.c.0.s8 %v490
        %v492 = vlaneseq
        %v493 = vshrl.u32 %v492, 7
        %v494 = vsub.s32 %v491, %v493
        %v495 = vrot.slane %v476, %v494
        %v496 = vcombine.low %v487, %v495
        %v497 = vcombine.high %v487, %v495
        %v499 = vunpack.c.l.s4 1934713408
        %v500 = vunpack.c.0.s8 %v499
        %v501 = vlaneseq
        %v502 = vshrl.u32 %v501, 7
        %v503 = vsub.s32 %v500, %v502
        %v504 = vrot.slane %v496, %v503
        %v506 = vunpack.c.l.s4 1934713408
        %v507 = vunpack.c.0.s8 %v506
        %v508 = vlaneseq
        %v509 = vshrl.u32 %v508, 7
        %v510 = vsub.s32 %v507, %v509
        %v511 = vrot.slane %v497, %v510
        %v512 = vcombine.high %v504, 0
        %v513 = vcombine.high %v511, 0
        %v516 = vunpack.c.l.s4 1983009808
        %v517 = vunpack.c.0.s8 %v516
        %v518 = vlaneseq
        %v519 = vshrl.u32 %v518, 7
        %v520 = vsub.s32 %v517, %v519
        %v521 = vrot.slane %v473, %v520
        %v524 = vunpack.c.l.s4 1983009808
        %v525 = vunpack.c.0.s8 %v524
        %v526 = vlaneseq
        %v527 = vshrl.u32 %v526, 7
        %v528 = vsub.s32 %v525, %v527
        %v529 = vrot.slane %v479, %v528
        %v530 = vcombine.low %v521, %v529
        %v531 = vcombine.high %v521, %v529
        %v533 = vunpack.c.l.s4 1934713408
        %v534 = vunpack.c.0.s8 %v533
        %v535 = vlaneseq
        %v536 = vshrl.u32 %v535, 7
        %v537 = vsub.s32 %v534, %v536
        %v538 = vrot.slane %v530, %v537
        %v540 = vunpack.c.l.s4 1934713408
        %v541 = vunpack.c.0.s8 %v540
        %v542 = vlaneseq
        %v543 = vshrl.u32 %v542, 7
        %v544 = vsub.s32 %v541, %v543
        %v545 = vrot.slane %v531, %v544
        %v546 = vcombine.high %v538, 0
        %v547 = vcombine.high %v545, 0
        %s548 = smul.addr %s456, 4
        %s549 = scalar_lea.vmem %s332, %s548
        %v550 = vld [vmem:[%s549] sm:$0xf]
        %552 = vrot.lane.b32.xlu0 %v550, 120
        %v553 = vpop.permute.xlu0 %552
        %554 = vrot.lane.b32.xlu0 %v550, 112
        %v555 = vpop.permute.xlu0 %554
        %556 = vrot.lane.b32.xlu0 %v550, 104
        %v557 = vpop.permute.xlu0 %556
        %v560 = vpack.i.b16 %v553, %v550
        %v561 = vshrl.u32 %v550, 16
        %v562 = vshrl.u32 %v553, 16
        %v563 = vpack.i.b16 %v562, %v561
        %v566 = vpack.i.b16 %v557, %v555
        %v567 = vshrl.u32 %v555, 16
        %v568 = vshrl.u32 %v557, 16
        %v569 = vpack.i.b16 %v568, %v567
        %v572 = vunpack.c.l.s4 1983009808
        %v573 = vunpack.c.0.s8 %v572
        %v574 = vlaneseq
        %v575 = vshrl.u32 %v574, 7
        %v576 = vsub.s32 %v573, %v575
        %v577 = vrot.slane %v560, %v576
        %v580 = vunpack.c.l.s4 1983009808
        %v581 = vunpack.c.0.s8 %v580
        %v582 = vlaneseq
        %v583 = vshrl.u32 %v582, 7
        %v584 = vsub.s32 %v581, %v583
        %v585 = vrot.slane %v566, %v584
        %v586 = vcombine.low %v577, %v585
        %v587 = vcombine.high %v577, %v585
        %v589 = vunpack.c.l.s4 1934713408
        %v590 = vunpack.c.0.s8 %v589
        %v591 = vlaneseq
        %v592 = vshrl.u32 %v591, 7
        %v593 = vsub.s32 %v590, %v592
        %v594 = vrot.slane %v586, %v593
        %v596 = vunpack.c.l.s4 1934713408
        %v597 = vunpack.c.0.s8 %v596
        %v598 = vlaneseq
        %v599 = vshrl.u32 %v598, 7
        %v600 = vsub.s32 %v597, %v599
        %v601 = vrot.slane %v587, %v600
        %v602 = vcombine.high %v594, 0
        %v603 = vcombine.high %v601, 0
        %v606 = vunpack.c.l.s4 1983009808
        %v607 = vunpack.c.0.s8 %v606
        %v608 = vlaneseq
        %v609 = vshrl.u32 %v608, 7
        %v610 = vsub.s32 %v607, %v609
        %v611 = vrot.slane %v563, %v610
        %v614 = vunpack.c.l.s4 1983009808
        %v615 = vunpack.c.0.s8 %v614
        %v616 = vlaneseq
        %v617 = vshrl.u32 %v616, 7
        %v618 = vsub.s32 %v615, %v617
        %v619 = vrot.slane %v569, %v618
        %v620 = vcombine.low %v611, %v619
        %v621 = vcombine.high %v611, %v619
        %v623 = vunpack.c.l.s4 1934713408
        %v624 = vunpack.c.0.s8 %v623
        %v625 = vlaneseq
        %v626 = vshrl.u32 %v625, 7
        %v627 = vsub.s32 %v624, %v626
        %v628 = vrot.slane %v620, %v627
        %v630 = vunpack.c.l.s4 1934713408
        %v631 = vunpack.c.0.s8 %v630
        %v632 = vlaneseq
        %v633 = vshrl.u32 %v632, 7
        %v634 = vsub.s32 %v631, %v633
        %v635 = vrot.slane %v621, %v634
        %v636 = vcombine.high %v628, 0
        %v637 = vcombine.high %v635, 0
        %v638 = vcombine.low %v385, %v392
        %v640 = vunpack.c.l.s4 1983009808
        %v641 = vunpack.c.0.s8 %v640
        %v642 = vlaneseq
        %v643 = vshrl.u32 %v642, 7
        %v644 = vsub.s32 %v641, %v643
        %v645 = vrot.slane %v638, %v644
        %v646 = vcombine.low %v393, %v394
        %v648 = vunpack.c.l.s4 1983009808
        %v649 = vunpack.c.0.s8 %v648
        %v650 = vlaneseq
        %v651 = vshrl.u32 %v650, 7
        %v652 = vsub.s32 %v649, %v651
        %v653 = vrot.slane %v646, %v652
        %v654 = vcombine.low %v645, %v653
        %v656 = vunpack.c.l.s4 1934713408
        %v657 = vunpack.c.0.s8 %v656
        %v658 = vlaneseq
        %v659 = vshrl.u32 %v658, 7
        %v660 = vsub.s32 %v657, %v659
        %v661 = vrot.slane %v654, %v660
        %v662 = vcombine.high %v661, 0
        %v663 = vcombine.low %v419, %v426
        %v665 = vunpack.c.l.s4 1983009808
        %v666 = vunpack.c.0.s8 %v665
        %v667 = vlaneseq
        %v668 = vshrl.u32 %v667, 7
        %v669 = vsub.s32 %v666, %v668
        %v670 = vrot.slane %v663, %v669
        %v671 = vcombine.low %v427, %v428
        %v673 = vunpack.c.l.s4 1983009808
        %v674 = vunpack.c.0.s8 %v673
        %v675 = vlaneseq
        %v676 = vshrl.u32 %v675, 7
        %v677 = vsub.s32 %v674, %v676
        %v678 = vrot.slane %v671, %v677
        %v679 = vcombine.low %v670, %v678
        %v681 = vunpack.c.l.s4 1934713408
        %v682 = vunpack.c.0.s8 %v681
        %v683 = vlaneseq
        %v684 = vshrl.u32 %v683, 7
        %v685 = vsub.s32 %v682, %v684
        %v686 = vrot.slane %v679, %v685
        %v687 = vcombine.high %v686, 0
        %v690 = vpack.i.b16 %v686, %v661
        %v691 = vshrl.u32 %v661, 16
        %v692 = vshrl.u32 %v686, 16
        %v693 = vpack.i.b16 %v692, %v691
        %v696 = vpack.i.b16 %v687, %v662
        %v697 = vshrl.u32 %v662, 16
        %v698 = vshrl.u32 %v687, 16
        %v699 = vpack.i.b16 %v698, %v697
        %700 = vxpose.xlu0.c.b16.start [1/8] %v504, 128
        %701 = vxpose.xlu0.c.b16.cont [2/8] 0, 128
        %702 = vxpose.xlu0.c.b16.cont [3/8] 0, 128
        %703 = vxpose.xlu0.c.b16.cont [4/8] 0, 128
        %704 = vxpose.xlu0.c.b16.cont [5/8] 0, 128
        %705 = vxpose.xlu0.c.b16.cont [6/8] 0, 128
        %706 = vxpose.xlu0.c.b16.cont [7/8] 0, 128
        %707 = vxpose.xlu0.c.b16.end [8/8] 0, 128
        %v708 = vpop.trf.xlu0
        %v709 = vpop.trf.xlu0
        %v710 = vpop.trf.xlu0
        %v711 = vpop.trf.xlu0
        %v712 = vpop.trf.xlu0
        %v713 = vpop.trf.xlu0
        %v714 = vpop.trf.xlu0
        %v715 = vpop.trf.xlu0
        %716 = vxpose.xlu0.c.b16.start [1/8] %v538, 128
        %717 = vxpose.xlu0.c.b16.cont [2/8] 0, 128
        %718 = vxpose.xlu0.c.b16.cont [3/8] 0, 128
        %719 = vxpose.xlu0.c.b16.cont [4/8] 0, 128
        %720 = vxpose.xlu0.c.b16.cont [5/8] 0, 128
        %721 = vxpose.xlu0.c.b16.cont [6/8] 0, 128
        %722 = vxpose.xlu0.c.b16.cont [7/8] 0, 128
        %723 = vxpose.xlu0.c.b16.end [8/8] 0, 128
        %v724 = vpop.trf.xlu0
        %v725 = vpop.trf.xlu0
        %v726 = vpop.trf.xlu0
        %v727 = vpop.trf.xlu0
        %v728 = vpop.trf.xlu0
        %v729 = vpop.trf.xlu0
        %v730 = vpop.trf.xlu0
        %v731 = vpop.trf.xlu0
        %732 = vxpose.xlu0.c.b16.start [1/8] %v512, 128
        %733 = vxpose.xlu0.c.b16.cont [2/8] 0, 128
        %734 = vxpose.xlu0.c.b16.cont [3/8] 0, 128
        %735 = vxpose.xlu0.c.b16.cont [4/8] 0, 128
        %736 = vxpose.xlu0.c.b16.cont [5/8] 0, 128
        %737 = vxpose.xlu0.c.b16.cont [6/8] 0, 128
        %738 = vxpose.xlu0.c.b16.cont [7/8] 0, 128
        %739 = vxpose.xlu0.c.b16.end [8/8] 0, 128
        %v740 = vpop.trf.xlu0
        %v741 = vpop.trf.xlu0
        %v742 = vpop.trf.xlu0
        %v743 = vpop.trf.xlu0
        %v744 = vpop.trf.xlu0
        %v745 = vpop.trf.xlu0
        %v746 = vpop.trf.xlu0
        %v747 = vpop.trf.xlu0
        %748 = vxpose.xlu0.c.b16.start [1/8] %v546, 128
        %749 = vxpose.xlu0.c.b16.cont [2/8] 0, 128
        %750 = vxpose.xlu0.c.b16.cont [3/8] 0, 128
        %751 = vxpose.xlu0.c.b16.cont [4/8] 0, 128
        %752 = vxpose.xlu0.c.b16.cont [5/8] 0, 128
        %753 = vxpose.xlu0.c.b16.cont [6/8] 0, 128
        %754 = vxpose.xlu0.c.b16.cont [7/8] 0, 128
        %755 = vxpose.xlu0.c.b16.end [8/8] 0, 128
        %v756 = vpop.trf.xlu0
        %v757 = vpop.trf.xlu0
        %v758 = vpop.trf.xlu0
        %v759 = vpop.trf.xlu0
        %v760 = vpop.trf.xlu0
        %v761 = vpop.trf.xlu0
        %v762 = vpop.trf.xlu0
        %v763 = vpop.trf.xlu0
        %764 = vxpose.xlu0.c.b16.start [1/8] %v511, 128
        %765 = vxpose.xlu0.c.b16.cont [2/8] 0, 128
        %766 = vxpose.xlu0.c.b16.cont [3/8] 0, 128
        %767 = vxpose.xlu0.c.b16.cont [4/8] 0, 128
        %768 = vxpose.xlu0.c.b16.cont [5/8] 0, 128
        %769 = vxpose.xlu0.c.b16.cont [6/8] 0, 128
        %770 = vxpose.xlu0.c.b16.cont [7/8] 0, 128
        %771 = vxpose.xlu0.c.b16.end [8/8] 0, 128
        %v772 = vpop.trf.xlu0
        %v773 = vpop.trf.xlu0
        %v774 = vpop.trf.xlu0
        %v775 = vpop.trf.xlu0
        %v776 = vpop.trf.xlu0
        %v777 = vpop.trf.xlu0
        %v778 = vpop.trf.xlu0
        %v779 = vpop.trf.xlu0
        %780 = vxpose.xlu0.c.b16.start [1/8] %v545, 128
        %781 = vxpose.xlu0.c.b16.cont [2/8] 0, 128
        %782 = vxpose.xlu0.c.b16.cont [3/8] 0, 128
        %783 = vxpose.xlu0.c.b16.cont [4/8] 0, 128
        %784 = vxpose.xlu0.c.b16.cont [5/8] 0, 128
        %785 = vxpose.xlu0.c.b16.cont [6/8] 0, 128
        %786 = vxpose.xlu0.c.b16.cont [7/8] 0, 128
        %787 = vxpose.xlu0.c.b16.end [8/8] 0, 128
        %v788 = vpop.trf.xlu0
        %v789 = vpop.trf.xlu0
        %v790 = vpop.trf.xlu0
        %v791 = vpop.trf.xlu0
        %v792 = vpop.trf.xlu0
        %v793 = vpop.trf.xlu0
        %v794 = vpop.trf.xlu0
        %v795 = vpop.trf.xlu0
        %796 = vxpose.xlu0.c.b16.start [1/8] %v513, 128
        %797 = vxpose.xlu0.c.b16.cont [2/8] 0, 128
        %798 = vxpose.xlu0.c.b16.cont [3/8] 0, 128
        %799 = vxpose.xlu0.c.b16.cont [4/8] 0, 128
        %800 = vxpose.xlu0.c.b16.cont [5/8] 0, 128
        %801 = vxpose.xlu0.c.b16.cont [6/8] 0, 128
        %802 = vxpose.xlu0.c.b16.cont [7/8] 0, 128
        %803 = vxpose.xlu0.c.b16.end [8/8] 0, 128
        %v804 = vpop.trf.xlu0
        %v805 = vpop.trf.xlu0
        %v806 = vpop.trf.xlu0
        %v807 = vpop.trf.xlu0
        %v808 = vpop.trf.xlu0
        %v809 = vpop.trf.xlu0
        %v810 = vpop.trf.xlu0
        %v811 = vpop.trf.xlu0
        %812 = vxpose.xlu0.c.b16.start [1/8] %v547, 128
        %813 = vxpose.xlu0.c.b16.cont [2/8] 0, 128
        %814 = vxpose.xlu0.c.b16.cont [3/8] 0, 128
        %815 = vxpose.xlu0.c.b16.cont [4/8] 0, 128
        %816 = vxpose.xlu0.c.b16.cont [5/8] 0, 128
        %817 = vxpose.xlu0.c.b16.cont [6/8] 0, 128
        %818 = vxpose.xlu0.c.b16.cont [7/8] 0, 128
        %819 = vxpose.xlu0.c.b16.end [8/8] 0, 128
        %v820 = vpop.trf.xlu0
        %v821 = vpop.trf.xlu0
        %v822 = vpop.trf.xlu0
        %v823 = vpop.trf.xlu0
        %v824 = vpop.trf.xlu0
        %v825 = vpop.trf.xlu0
        %v826 = vpop.trf.xlu0
        %v827 = vpop.trf.xlu0
        %v828 = vcombine.low %v708, %v772
        %v830 = vunpack.c.l.s4 1983009808
        %v831 = vunpack.c.0.s8 %v830
        %v832 = vlaneseq
        %v833 = vshrl.u32 %v832, 7
        %v834 = vsub.s32 %v831, %v833
        %v835 = vrot.slane %v828, %v834
        %v836 = vcombine.low %v740, %v804
        %v838 = vunpack.c.l.s4 1983009808
        %v839 = vunpack.c.0.s8 %v838
        %v840 = vlaneseq
        %v841 = vshrl.u32 %v840, 7
        %v842 = vsub.s32 %v839, %v841
        %v843 = vrot.slane %v836, %v842
        %v844 = vcombine.low %v835, %v843
        %v845 = vcombine.high %v835, %v843
        %v847 = vunpack.c.l.s4 1934713408
        %v848 = vunpack.c.0.s8 %v847
        %v849 = vlaneseq
        %v850 = vshrl.u32 %v849, 7
        %v851 = vsub.s32 %v848, %v850
        %v852 = vrot.slane %v844, %v851
        %v854 = vunpack.c.l.s4 1934713408
        %v855 = vunpack.c.0.s8 %v854
        %v856 = vlaneseq
        %v857 = vshrl.u32 %v856, 7
        %v858 = vsub.s32 %v855, %v857
        %v859 = vrot.slane %v845, %v858
        %v860 = vcombine.high %v852, 0
        %v861 = vcombine.high %v859, 0
        %v862 = vcombine.low %v724, %v788
        %v864 = vunpack.c.l.s4 1983009808
        %v865 = vunpack.c.0.s8 %v864
        %v866 = vlaneseq
        %v867 = vshrl.u32 %v866, 7
        %v868 = vsub.s32 %v865, %v867
        %v869 = vrot.slane %v862, %v868
        %v870 = vcombine.low %v756, %v820
        %v872 = vunpack.c.l.s4 1983009808
        %v873 = vunpack.c.0.s8 %v872
        %v874 = vlaneseq
        %v875 = vshrl.u32 %v874, 7
        %v876 = vsub.s32 %v873, %v875
        %v877 = vrot.slane %v870, %v876
        %v878 = vcombine.low %v869, %v877
        %v879 = vcombine.high %v869, %v877
        %v881 = vunpack.c.l.s4 1934713408
        %v882 = vunpack.c.0.s8 %v881
        %v883 = vlaneseq
        %v884 = vshrl.u32 %v883, 7
        %v885 = vsub.s32 %v882, %v884
        %v886 = vrot.slane %v878, %v885
        %v888 = vunpack.c.l.s4 1934713408
        %v889 = vunpack.c.0.s8 %v888
        %v890 = vlaneseq
        %v891 = vshrl.u32 %v890, 7
        %v892 = vsub.s32 %v889, %v891
        %v893 = vrot.slane %v879, %v892
        %v894 = vcombine.high %v886, 0
        %v895 = vcombine.high %v893, 0
        %v898 = vpack.i.b16 %v886, %v852
        %v900 = vshrl.u32 %v852, 16
        %v901 = vshrl.u32 %v886, 16
        %v902 = vpack.i.b16 %v901, %v900
        %v906 = vpack.i.b16 %v894, %v860
        %v908 = vshrl.u32 %v860, 16
        %v909 = vshrl.u32 %v894, 16
        %v910 = vpack.i.b16 %v909, %v908
        %v914 = vpack.i.b16 %v893, %v859
        %v916 = vshrl.u32 %v859, 16
        %v917 = vshrl.u32 %v893, 16
        %v918 = vpack.i.b16 %v917, %v916
        %v922 = vpack.i.b16 %v895, %v861
        %v924 = vshrl.u32 %v861, 16
        %v925 = vshrl.u32 %v895, 16
        %v926 = vpack.i.b16 %v925, %v924
        %928 = vxpose.xlu0.c.b16.start [1/8] %v898, 128
        %929 = vxpose.xlu0.c.b16.cont [2/8] 0, 128
        %930 = vxpose.xlu0.c.b16.cont [3/8] 0, 128
        %931 = vxpose.xlu0.c.b16.cont [4/8] 0, 128
        %932 = vxpose.xlu0.c.b16.cont [5/8] 0, 128
        %933 = vxpose.xlu0.c.b16.cont [6/8] 0, 128
        %934 = vxpose.xlu0.c.b16.cont [7/8] 0, 128
        %935 = vxpose.xlu0.c.b16.end [8/8] 0, 128
        %v936 = vpop.trf.xlu0
        %v937 = vpop.trf.xlu0
        %v938 = vpop.trf.xlu0
        %v939 = vpop.trf.xlu0
        %v940 = vpop.trf.xlu0
        %v941 = vpop.trf.xlu0
        %v942 = vpop.trf.xlu0
        %v943 = vpop.trf.xlu0
        %944 = vxpose.xlu0.c.b16.start [1/8] %v902, 128
        %945 = vxpose.xlu0.c.b16.cont [2/8] 0, 128
        %946 = vxpose.xlu0.c.b16.cont [3/8] 0, 128
        %947 = vxpose.xlu0.c.b16.cont [4/8] 0, 128
        %948 = vxpose.xlu0.c.b16.cont [5/8] 0, 128
        %949 = vxpose.xlu0.c.b16.cont [6/8] 0, 128
        %950 = vxpose.xlu0.c.b16.cont [7/8] 0, 128
        %951 = vxpose.xlu0.c.b16.end [8/8] 0, 128
        %v952 = vpop.trf.xlu0
        %v953 = vpop.trf.xlu0
        %v954 = vpop.trf.xlu0
        %v955 = vpop.trf.xlu0
        %v956 = vpop.trf.xlu0
        %v957 = vpop.trf.xlu0
        %v958 = vpop.trf.xlu0
        %v959 = vpop.trf.xlu0
        %960 = vxpose.xlu0.c.b16.start [1/8] %v906, 128
        %961 = vxpose.xlu0.c.b16.cont [2/8] 0, 128
        %962 = vxpose.xlu0.c.b16.cont [3/8] 0, 128
        %963 = vxpose.xlu0.c.b16.cont [4/8] 0, 128
        %964 = vxpose.xlu0.c.b16.cont [5/8] 0, 128
        %965 = vxpose.xlu0.c.b16.cont [6/8] 0, 128
        %966 = vxpose.xlu0.c.b16.cont [7/8] 0, 128
        %967 = vxpose.xlu0.c.b16.end [8/8] 0, 128
        %v968 = vpop.trf.xlu0
        %v969 = vpop.trf.xlu0
        %v970 = vpop.trf.xlu0
        %v971 = vpop.trf.xlu0
        %v972 = vpop.trf.xlu0
        %v973 = vpop.trf.xlu0
        %v974 = vpop.trf.xlu0
        %v975 = vpop.trf.xlu0
        %976 = vxpose.xlu0.c.b16.start [1/8] %v910, 128
        %977 = vxpose.xlu0.c.b16.cont [2/8] 0, 128
        %978 = vxpose.xlu0.c.b16.cont [3/8] 0, 128
        %979 = vxpose.xlu0.c.b16.cont [4/8] 0, 128
        %980 = vxpose.xlu0.c.b16.cont [5/8] 0, 128
        %981 = vxpose.xlu0.c.b16.cont [6/8] 0, 128
        %982 = vxpose.xlu0.c.b16.cont [7/8] 0, 128
        %983 = vxpose.xlu0.c.b16.end [8/8] 0, 128
        %v984 = vpop.trf.xlu0
        %v985 = vpop.trf.xlu0
        %v986 = vpop.trf.xlu0
        %v987 = vpop.trf.xlu0
        %v988 = vpop.trf.xlu0
        %v989 = vpop.trf.xlu0
        %v990 = vpop.trf.xlu0
        %v991 = vpop.trf.xlu0
        %992 = vxpose.xlu0.c.b16.start [1/8] %v914, 128
        %993 = vxpose.xlu0.c.b16.cont [2/8] 0, 128
        %994 = vxpose.xlu0.c.b16.cont [3/8] 0, 128
        %995 = vxpose.xlu0.c.b16.cont [4/8] 0, 128
        %996 = vxpose.xlu0.c.b16.cont [5/8] 0, 128
        %997 = vxpose.xlu0.c.b16.cont [6/8] 0, 128
        %998 = vxpose.xlu0.c.b16.cont [7/8] 0, 128
        %999 = vxpose.xlu0.c.b16.end [8/8] 0, 128
        %v1000 = vpop.trf.xlu0
        %v1001 = vpop.trf.xlu0
        %v1002 = vpop.trf.xlu0
        %v1003 = vpop.trf.xlu0
        %v1004 = vpop.trf.xlu0
        %v1005 = vpop.trf.xlu0
        %v1006 = vpop.trf.xlu0
        %v1007 = vpop.trf.xlu0
        %1008 = vxpose.xlu0.c.b16.start [1/8] %v918, 128
        %1009 = vxpose.xlu0.c.b16.cont [2/8] 0, 128
        %1010 = vxpose.xlu0.c.b16.cont [3/8] 0, 128
        %1011 = vxpose.xlu0.c.b16.cont [4/8] 0, 128
        %1012 = vxpose.xlu0.c.b16.cont [5/8] 0, 128
        %1013 = vxpose.xlu0.c.b16.cont [6/8] 0, 128
        %1014 = vxpose.xlu0.c.b16.cont [7/8] 0, 128
        %1015 = vxpose.xlu0.c.b16.end [8/8] 0, 128
        %v1016 = vpop.trf.xlu0
        %v1017 = vpop.trf.xlu0
        %v1018 = vpop.trf.xlu0
        %v1019 = vpop.trf.xlu0
        %v1020 = vpop.trf.xlu0
        %v1021 = vpop.trf.xlu0
        %v1022 = vpop.trf.xlu0
        %v1023 = vpop.trf.xlu0
        %1024 = vxpose.xlu0.c.b16.start [1/8] %v922, 128
        %1025 = vxpose.xlu0.c.b16.cont [2/8] 0, 128
        %1026 = vxpose.xlu0.c.b16.cont [3/8] 0, 128
        %1027 = vxpose.xlu0.c.b16.cont [4/8] 0, 128
        %1028 = vxpose.xlu0.c.b16.cont [5/8] 0, 128
        %1029 = vxpose.xlu0.c.b16.cont [6/8] 0, 128
        %1030 = vxpose.xlu0.c.b16.cont [7/8] 0, 128
        %1031 = vxpose.xlu0.c.b16.end [8/8] 0, 128
        %v1032 = vpop.trf.xlu0
        %v1033 = vpop.trf.xlu0
        %v1034 = vpop.trf.xlu0
        %v1035 = vpop.trf.xlu0
        %v1036 = vpop.trf.xlu0
        %v1037 = vpop.trf.xlu0
        %v1038 = vpop.trf.xlu0
        %v1039 = vpop.trf.xlu0
        %1040 = vxpose.xlu0.c.b16.start [1/8] %v926, 128
        %1041 = vxpose.xlu0.c.b16.cont [2/8] 0, 128
        %1042 = vxpose.xlu0.c.b16.cont [3/8] 0, 128
        %1043 = vxpose.xlu0.c.b16.cont [4/8] 0, 128
        %1044 = vxpose.xlu0.c.b16.cont [5/8] 0, 128
        %1045 = vxpose.xlu0.c.b16.cont [6/8] 0, 128
        %1046 = vxpose.xlu0.c.b16.cont [7/8] 0, 128
        %1047 = vxpose.xlu0.c.b16.end [8/8] 0, 128
        %v1048 = vpop.trf.xlu0
        %v1049 = vpop.trf.xlu0
        %v1050 = vpop.trf.xlu0
        %v1051 = vpop.trf.xlu0
        %v1052 = vpop.trf.xlu0
        %v1053 = vpop.trf.xlu0
        %v1054 = vpop.trf.xlu0
        %v1055 = vpop.trf.xlu0
        %v1056 = vcombine.low %v936, %v1000
        %v1058 = vunpack.c.l.s4 1983009808
        %v1059 = vunpack.c.0.s8 %v1058
        %v1060 = vlaneseq
        %v1061 = vshrl.u32 %v1060, 7
        %v1062 = vsub.s32 %v1059, %v1061
        %v1063 = vrot.slane %v1056, %v1062
        %v1064 = vcombine.low %v968, %v1032
        %v1066 = vunpack.c.l.s4 1983009808
        %v1067 = vunpack.c.0.s8 %v1066
        %v1068 = vlaneseq
        %v1069 = vshrl.u32 %v1068, 7
        %v1070 = vsub.s32 %v1067, %v1069
        %v1071 = vrot.slane %v1064, %v1070
        %v1072 = vcombine.low %v1063, %v1071
        %v1074 = vunpack.c.l.s4 1934713408
        %v1075 = vunpack.c.0.s8 %v1074
        %v1076 = vlaneseq
        %v1077 = vshrl.u32 %v1076, 7
        %v1078 = vsub.s32 %v1075, %v1077
        %v1079 = vrot.slane %v1072, %v1078
        %v1080 = vcombine.high %v1079, 0
        %v1081 = vcombine.low %v952, %v1016
        %v1083 = vunpack.c.l.s4 1983009808
        %v1084 = vunpack.c.0.s8 %v1083
        %v1085 = vlaneseq
        %v1086 = vshrl.u32 %v1085, 7
        %v1087 = vsub.s32 %v1084, %v1086
        %v1088 = vrot.slane %v1081, %v1087
        %v1089 = vcombine.low %v984, %v1048
        %v1091 = vunpack.c.l.s4 1983009808
        %v1092 = vunpack.c.0.s8 %v1091
        %v1093 = vlaneseq
        %v1094 = vshrl.u32 %v1093, 7
        %v1095 = vsub.s32 %v1092, %v1094
        %v1096 = vrot.slane %v1089, %v1095
        %v1097 = vcombine.low %v1088, %v1096
        %v1099 = vunpack.c.l.s4 1934713408
        %v1100 = vunpack.c.0.s8 %v1099
        %v1101 = vlaneseq
        %v1102 = vshrl.u32 %v1101, 7
        %v1103 = vsub.s32 %v1100, %v1102
        %v1104 = vrot.slane %v1097, %v1103
        %v1105 = vcombine.high %v1104, 0
        %v1108 = vpack.i.b16 %v1104, %v1079
        %v1109 = vshrl.u32 %v1079, 16
        %v1110 = vshrl.u32 %v1104, 16
        %v1111 = vpack.i.b16 %v1110, %v1109
        %v1114 = vpack.i.b16 %v1105, %v1080
        %v1115 = vshrl.u32 %v1080, 16
        %v1116 = vshrl.u32 %v1105, 16
        %v1117 = vpack.i.b16 %v1116, %v1115
        %v1119 = vsel %vm438, %v690, 0
        %vm1121 = vcmask 1043456
        %v1123 = vsel %vm1121, %v1108, 0
        %1125 = vmatprep.subr.bf16.mxu0 0
        %1126 = vmatpush1.bf16.msra.mxu0 0
        %1127 = vmatprep.subr.bf16.mxu0 0
        %1128 = vmatpush1.bf16.msra.mxu0 0
        %1129 = vmatprep.subr.bf16.mxu0 0
        %1130 = vmatpush1.bf16.msra.mxu0 0
        %1131 = vmatprep.subr.bf16.mxu0 0
        %1132 = vmatpush1.bf16.msra.mxu0 0
        %1133 = vmatprep.subr.bf16.mxu0 0
        %1134 = vmatpush1.bf16.msra.mxu0 0
        %1135 = vmatprep.subr.bf16.mxu0 0
        %1136 = vmatpush1.bf16.msra.mxu0 0
        %1137 = vmatprep.subr.bf16.mxu0 0
        %1138 = vmatpush1.bf16.msra.mxu0 0
        %1139 = vmatprep.subr.bf16.mxu0 0
        %1140 = vmatpush1.bf16.msra.mxu0 %v1123
        %1141 = vmatprep.subr.bf16.mxu0 0
        %1142 = vmatpush2.bf16.msra.mxu0 0
        %1143 = vmatprep.subr.bf16.mxu0 0
        %1144 = vmatpush2.bf16.msra.mxu0 0
        %1145 = vmatprep.subr.bf16.mxu0 0
        %1146 = vmatpush2.bf16.msra.mxu0 0
        %1147 = vmatprep.subr.bf16.mxu0 0
        %1148 = vmatpush2.bf16.msra.mxu0 0
        %1149 = vmatprep.subr.bf16.mxu0 0
        %1150 = vmatpush2.bf16.msra.mxu0 0
        %1151 = vmatprep.subr.bf16.mxu0 0
        %1152 = vmatpush2.bf16.msra.mxu0 0
        %1153 = vmatprep.subr.bf16.mxu0 0
        %1154 = vmatpush2.bf16.msra.mxu0 0
        %1155 = vmatprep.subr.bf16.mxu0 0
        %1156 = vmatpush2.bf16.msra.mxu0 0
        %1157 = vmatprep.mubr.bf16.mxu0 0
        %1158 = vmatmul.mubr.bf16.gmra.mxu0 %v1119
        %v1159 = vpop.f32.mrf.mxu0
        %v1160 = vadd.f32 0.0, %v1159
        %v1161 = vpop.f32.mrf.mxu0
        %v1162 = vpop.f32.mrf.mxu0
        %v1163 = vpop.f32.mrf.mxu0
        %1164 = vdwg.mxu0
        %v1166 = vsel %vm438, %v693, 0
        %v1169 = vsel %vm1121, %v1111, 0
        %1171 = vmatprep.subr.bf16.mxu0 0
        %1172 = vmatpush1.bf16.msra.mxu0 0
        %1173 = vmatprep.subr.bf16.mxu0 0
        %1174 = vmatpush1.bf16.msra.mxu0 0
        %1175 = vmatprep.subr.bf16.mxu0 0
        %1176 = vmatpush1.bf16.msra.mxu0 0
        %1177 = vmatprep.subr.bf16.mxu0 0
        %1178 = vmatpush1.bf16.msra.mxu0 0
        %1179 = vmatprep.subr.bf16.mxu0 0
        %1180 = vmatpush1.bf16.msra.mxu0 0
        %1181 = vmatprep.subr.bf16.mxu0 0
        %1182 = vmatpush1.bf16.msra.mxu0 0
        %1183 = vmatprep.subr.bf16.mxu0 0
        %1184 = vmatpush1.bf16.msra.mxu0 0
        %1185 = vmatprep.subr.bf16.mxu0 0
        %1186 = vmatpush1.bf16.msra.mxu0 %v1169
        %1187 = vmatprep.subr.bf16.mxu0 0
        %1188 = vmatpush2.bf16.msra.mxu0 0
        %1189 = vmatprep.subr.bf16.mxu0 0
        %1190 = vmatpush2.bf16.msra.mxu0 0
        %1191 = vmatprep.subr.bf16.mxu0 0
        %1192 = vmatpush2.bf16.msra.mxu0 0
        %1193 = vmatprep.subr.bf16.mxu0 0
        %1194 = vmatpush2.bf16.msra.mxu0 0
        %1195 = vmatprep.subr.bf16.mxu0 0
        %1196 = vmatpush2.bf16.msra.mxu0 0
        %1197 = vmatprep.subr.bf16.mxu0 0
        %1198 = vmatpush2.bf16.msra.mxu0 0
        %1199 = vmatprep.subr.bf16.mxu0 0
        %1200 = vmatpush2.bf16.msra.mxu0 0
        %1201 = vmatprep.subr.bf16.mxu0 0
        %1202 = vmatpush2.bf16.msra.mxu0 0
        %1203 = vmatprep.mubr.bf16.mxu0 0
        %1204 = vmatmul.mubr.bf16.gmra.mxu0 %v1166
        %v1205 = vpop.f32.mrf.mxu0
        %v1206 = vadd.f32 0.0, %v1205
        %v1207 = vpop.f32.mrf.mxu0
        %v1208 = vpop.f32.mrf.mxu0
        %v1209 = vpop.f32.mrf.mxu0
        %1210 = vdwg.mxu0
        %v1212 = vsel %vm438, %v696, 0
        %v1215 = vsel %vm1121, %v1114, 0
        %1217 = vmatprep.subr.bf16.mxu0 0
        %1218 = vmatpush1.bf16.msra.mxu0 0
        %1219 = vmatprep.subr.bf16.mxu0 0
        %1220 = vmatpush1.bf16.msra.mxu0 0
        %1221 = vmatprep.subr.bf16.mxu0 0
        %1222 = vmatpush1.bf16.msra.mxu0 0
        %1223 = vmatprep.subr.bf16.mxu0 0
        %1224 = vmatpush1.bf16.msra.mxu0 0
        %1225 = vmatprep.subr.bf16.mxu0 0
        %1226 = vmatpush1.bf16.msra.mxu0 0
        %1227 = vmatprep.subr.bf16.mxu0 0
        %1228 = vmatpush1.bf16.msra.mxu0 0
        %1229 = vmatprep.subr.bf16.mxu0 0
        %1230 = vmatpush1.bf16.msra.mxu0 0
        %1231 = vmatprep.subr.bf16.mxu0 0
        %1232 = vmatpush1.bf16.msra.mxu0 %v1215
        %1233 = vmatprep.subr.bf16.mxu0 0
        %1234 = vmatpush2.bf16.msra.mxu0 0
        %1235 = vmatprep.subr.bf16.mxu0 0
        %1236 = vmatpush2.bf16.msra.mxu0 0
        %1237 = vmatprep.subr.bf16.mxu0 0
        %1238 = vmatpush2.bf16.msra.mxu0 0
        %1239 = vmatprep.subr.bf16.mxu0 0
        %1240 = vmatpush2.bf16.msra.mxu0 0
        %1241 = vmatprep.subr.bf16.mxu0 0
        %1242 = vmatpush2.bf16.msra.mxu0 0
        %1243 = vmatprep.subr.bf16.mxu0 0
        %1244 = vmatpush2.bf16.msra.mxu0 0
        %1245 = vmatprep.subr.bf16.mxu0 0
        %1246 = vmatpush2.bf16.msra.mxu0 0
        %1247 = vmatprep.subr.bf16.mxu0 0
        %1248 = vmatpush2.bf16.msra.mxu0 0
        %1249 = vmatprep.mubr.bf16.mxu0 0
        %1250 = vmatmul.mubr.bf16.gmra.mxu0 %v1212
        %v1251 = vpop.f32.mrf.mxu0
        %v1252 = vadd.f32 0.0, %v1251
        %v1253 = vpop.f32.mrf.mxu0
        %v1254 = vpop.f32.mrf.mxu0
        %v1255 = vpop.f32.mrf.mxu0
        %1256 = vdwg.mxu0
        %v1258 = vsel %vm438, %v699, 0
        %v1261 = vsel %vm1121, %v1117, 0
        %1263 = vmatprep.subr.bf16.mxu0 0
        %1264 = vmatpush1.bf16.msra.mxu0 0
        %1265 = vmatprep.subr.bf16.mxu0 0
        %1266 = vmatpush1.bf16.msra.mxu0 0
        %1267 = vmatprep.subr.bf16.mxu0 0
        %1268 = vmatpush1.bf16.msra.mxu0 0
        %1269 = vmatprep.subr.bf16.mxu0 0
        %1270 = vmatpush1.bf16.msra.mxu0 0
        %1271 = vmatprep.subr.bf16.mxu0 0
        %1272 = vmatpush1.bf16.msra.mxu0 0
        %1273 = vmatprep.subr.bf16.mxu0 0
        %1274 = vmatpush1.bf16.msra.mxu0 0
        %1275 = vmatprep.subr.bf16.mxu0 0
        %1276 = vmatpush1.bf16.msra.mxu0 0
        %1277 = vmatprep.subr.bf16.mxu0 0
        %1278 = vmatpush1.bf16.msra.mxu0 %v1261
        %1279 = vmatprep.subr.bf16.mxu0 0
        %1280 = vmatpush2.bf16.msra.mxu0 0
        %1281 = vmatprep.subr.bf16.mxu0 0
        %1282 = vmatpush2.bf16.msra.mxu0 0
        %1283 = vmatprep.subr.bf16.mxu0 0
        %1284 = vmatpush2.bf16.msra.mxu0 0
        %1285 = vmatprep.subr.bf16.mxu0 0
        %1286 = vmatpush2.bf16.msra.mxu0 0
        %1287 = vmatprep.subr.bf16.mxu0 0
        %1288 = vmatpush2.bf16.msra.mxu0 0
        %1289 = vmatprep.subr.bf16.mxu0 0
        %1290 = vmatpush2.bf16.msra.mxu0 0
        %1291 = vmatprep.subr.bf16.mxu0 0
        %1292 = vmatpush2.bf16.msra.mxu0 0
        %1293 = vmatprep.subr.bf16.mxu0 0
        %1294 = vmatpush2.bf16.msra.mxu0 0
        %1295 = vmatprep.mubr.bf16.mxu0 0
        %1296 = vmatmul.mubr.bf16.gmra.mxu0 %v1258
        %v1297 = vpop.f32.mrf.mxu0
        %v1298 = vadd.f32 0.0, %v1297
        %v1299 = vpop.f32.mrf.mxu0
        %v1300 = vpop.f32.mrf.mxu0
        %v1301 = vpop.f32.mrf.mxu0
        %1302 = vdwg.mxu0
        %p1303 = scmp.eq.s32.totalorder %s450, %s22
        // Predicated region
        $region52: #{transformer_forward.9} parent=48 // pred_check
          %p1304 = pneg %p1303
        $region53: #{transformer_forward.9} parent=48 // pred_check_branch
          %1306 = sbr.rel (%p1304) target = $region55
        $region54: #{transformer_forward.9} parent=48 // pred_region
          %v1307 = vsel %vm447, 1, 0
          %vm1308 = vcmp.eq.s32.totalorder %v1307, 1
          %v1309 = vsel %vm1308, %v1160, -1e+30
          %v1310 = vsel %vm1308, %v1206, -1e+30
          %v1311 = vsel %vm1308, %v1252, -1e+30
          %v1312 = vsel %vm1308, %v1298, -1e+30
        $region55: #{transformer_forward.9} parent=48 // pred_fallthru
          %v1313 = vphi 0, %v1309
          %v1314 = vphi 0, %v1310
          %v1315 = vphi 0, %v1311
          %v1316 = vphi 0, %v1312
        %p1317 = pneg %p1303
        // Predicated region
        $region56: #{transformer_forward.9} parent=48 // pred_check
          _
        $region57: #{transformer_forward.9} parent=48 // pred_check_branch
          %1319 = sbr.rel (%p1303) target = $region59
        $region58: #{transformer_forward.9} parent=48 // pred_region
          _
        $region59: #{transformer_forward.9} parent=48 // pred_fallthru
          %v1320 = vphi %v1313, %v1160
          %v1321 = vphi %v1314, %v1206
          %v1322 = vphi %v1315, %v1252
          %v1323 = vphi %v1316, %v1298
        %v1324 = vld [vmem:[#allocation2] sm:$0xff]
        %v1325 = vld [vmem:[#allocation2 + $0x8] sm:$0xff]
        %v1326 = vld [vmem:[#allocation2 + $0x10] sm:$0xff]
        %v1327 = vld [vmem:[#allocation2 + $0x18] sm:$0xff]
        %v1328 = vsel %vm438, %v1320, -inf
        %1329 = vmax.xlane.f32.xlu0 %v1328
        %v1330 = vpop.xlane.xlu0 %1329
        %v1331 = vsel %vm438, %v1321, -inf
        %1332 = vmax.xlane.f32.xlu0 %v1331
        %v1333 = vpop.xlane.xlu0 %1332
        %v1334 = vsel %vm438, %v1322, -inf
        %1335 = vmax.xlane.f32.xlu0 %v1334
        %v1336 = vpop.xlane.xlu0 %1335
        %v1337 = vsel %vm438, %v1323, -inf
        %1338 = vmax.xlane.f32.xlu0 %v1337
        %v1339 = vpop.xlane.xlu0 %1338
        %v1340 = vmax.f32 %v1324, %v1330
        %v1341 = vmax.f32 %v1325, %v1333
        %v1342 = vmax.f32 %v1326, %v1336
        %v1343 = vmax.f32 %v1327, %v1339
        %v1344 = vsub.f32 %v1324, %v1340
        %v1345 = vsub.f32 %v1325, %v1341
        %v1346 = vsub.f32 %v1326, %v1342
        %v1347 = vsub.f32 %v1327, %v1343
        %v1348 = vmul.f32 %v1344, 1.442695
        %v1349 = vpow.pop %v1348
        %v1350 = vmul.f32 %v1345, 1.442695
        %v1351 = vpow.pop %v1350
        %v1352 = vmul.f32 %v1346, 1.442695
        %v1353 = vpow.pop %v1352
        %v1354 = vmul.f32 %v1347, 1.442695
        %v1355 = vpow.pop %v1354
        %1357 = vset.pattern.permute.xlu0 0
        %1358 = vperm.xlu0 %1357, %v1340
        %v1359 = vpop.permute.xlu0 %1358
        %1362 = vset.pattern.permute.xlu0 0
        %1363 = vperm.xlu0 %1362, %v1341
        %v1364 = vpop.permute.xlu0 %1363
        %1367 = vset.pattern.permute.xlu0 0
        %1368 = vperm.xlu0 %1367, %v1342
        %v1369 = vpop.permute.xlu0 %1368
        %1372 = vset.pattern.permute.xlu0 0
        %1373 = vperm.xlu0 %1372, %v1343
        %v1374 = vpop.permute.xlu0 %1373
        %v1376 = vsub.f32 %v1320, %v1359
        %v1377 = vsub.f32 %v1321, %v1364
        %v1378 = vsub.f32 %v1322, %v1369
        %v1379 = vsub.f32 %v1323, %v1374
        %v1380 = vmul.f32 %v1376, 1.442695
        %v1381 = vpow.pop %v1380
        %v1382 = vmul.f32 %v1377, 1.442695
        %v1383 = vpow.pop %v1382
        %v1384 = vmul.f32 %v1378, 1.442695
        %v1385 = vpow.pop %v1384
        %v1386 = vmul.f32 %v1379, 1.442695
        %v1387 = vpow.pop %v1386
        %v1388 = vsel %vm438, %v1381, 0.0
        %1389 = vadd.xlane.f32.xlu0 %v1388
        %v1390 = vpop.xlane.xlu0 %1389
        %v1391 = vsel %vm438, %v1383, 0.0
        %1392 = vadd.xlane.f32.xlu0 %v1391
        %v1393 = vpop.xlane.xlu0 %1392
        %v1394 = vsel %vm438, %v1385, 0.0
        %1395 = vadd.xlane.f32.xlu0 %v1394
        %v1396 = vpop.xlane.xlu0 %1395
        %v1397 = vsel %vm438, %v1387, 0.0
        %1398 = vadd.xlane.f32.xlu0 %v1397
        %v1399 = vpop.xlane.xlu0 %1398
        %v1400 = vpack.c.bf16 %v1381, %v1381
        %v1401 = vpack.c.bf16 %v1383, %v1383
        %v1402 = vpack.c.bf16 %v1385, %v1385
        %v1403 = vpack.c.bf16 %v1387, %v1387
        %v1404 = vld [vmem:[#allocation3] sm:$0xff]
        %v1405 = vld [vmem:[#allocation3 + $0x8] sm:$0xff]
        %v1406 = vld [vmem:[#allocation3 + $0x10] sm:$0xff]
        %v1407 = vld [vmem:[#allocation3 + $0x18] sm:$0xff]
        %v1408 = vmul.f32 %v1349, %v1404
        %v1409 = vmul.f32 %v1351, %v1405
        %v1410 = vmul.f32 %v1353, %v1406
        %v1411 = vmul.f32 %v1355, %v1407
        %v1412 = vadd.f32 %v1408, %v1390
        %v1413 = vadd.f32 %v1409, %v1393
        %v1414 = vadd.f32 %v1410, %v1396
        %v1415 = vadd.f32 %v1411, %v1399
        %1416 = vst.msk [vmem:[#allocation3] sm:$0xff] %vm429, %v1412
        %1417 = vst.msk [vmem:[#allocation3 + $0x8] sm:$0xff] %vm429, %v1413
        %1418 = vst.msk [vmem:[#allocation3 + $0x10] sm:$0xff] %vm429, %v1414
        %1419 = vst.msk [vmem:[#allocation3 + $0x18] sm:$0xff] %vm429, %v1415
        %v1420 = vld [vmem:[#allocation4] sm:$0xff]
        %v1421 = vld [vmem:[#allocation4 + $0x8] sm:$0xff]
        %v1422 = vld [vmem:[#allocation4 + $0x10] sm:$0xff]
        %v1423 = vld [vmem:[#allocation4 + $0x18] sm:$0xff]
        %1425 = vset.pattern.permute.xlu0 0
        %1426 = vperm.xlu0 %1425, %v1349
        %v1427 = vpop.permute.xlu0 %1426
        %1430 = vset.pattern.permute.xlu0 0
        %1431 = vperm.xlu0 %1430, %v1351
        %v1432 = vpop.permute.xlu0 %1431
        %1435 = vset.pattern.permute.xlu0 0
        %1436 = vperm.xlu0 %1435, %v1353
        %v1437 = vpop.permute.xlu0 %1436
        %1440 = vset.pattern.permute.xlu0 0
        %1441 = vperm.xlu0 %1440, %v1355
        %v1442 = vpop.permute.xlu0 %1441
        %v1444 = vmul.f32 %v1427, %v1420
        %v1445 = vmul.f32 %v1432, %v1421
        %v1446 = vmul.f32 %v1437, %v1422
        %v1447 = vmul.f32 %v1442, %v1423
        %v1448 = vcombine.low %v594, %v601
        %v1450 = vunpack.c.l.s4 1983009808
        %v1451 = vunpack.c.0.s8 %v1450
        %v1452 = vlaneseq
        %v1453 = vshrl.u32 %v1452, 7
        %v1454 = vsub.s32 %v1451, %v1453
        %v1455 = vrot.slane %v1448, %v1454
        %v1456 = vcombine.low %v602, %v603
        %v1458 = vunpack.c.l.s4 1983009808
        %v1459 = vunpack.c.0.s8 %v1458
        %v1460 = vlaneseq
        %v1461 = vshrl.u32 %v1460, 7
        %v1462 = vsub.s32 %v1459, %v1461
        %v1463 = vrot.slane %v1456, %v1462
        %v1464 = vcombine.low %v1455, %v1463
        %v1466 = vunpack.c.l.s4 1934713408
        %v1467 = vunpack.c.0.s8 %v1466
        %v1468 = vlaneseq
        %v1469 = vshrl.u32 %v1468, 7
        %v1470 = vsub.s32 %v1467, %v1469
        %v1471 = vrot.slane %v1464, %v1470
        %v1472 = vcombine.high %v1471, 0
        %v1473 = vcombine.low %v628, %v635
        %v1475 = vunpack.c.l.s4 1983009808
        %v1476 = vunpack.c.0.s8 %v1475
        %v1477 = vlaneseq
        %v1478 = vshrl.u32 %v1477, 7
        %v1479 = vsub.s32 %v1476, %v1478
        %v1480 = vrot.slane %v1473, %v1479
        %v1481 = vcombine.low %v636, %v637
        %v1483 = vunpack.c.l.s4 1983009808
        %v1484 = vunpack.c.0.s8 %v1483
        %v1485 = vlaneseq
        %v1486 = vshrl.u32 %v1485, 7
        %v1487 = vsub.s32 %v1484, %v1486
        %v1488 = vrot.slane %v1481, %v1487
        %v1489 = vcombine.low %v1480, %v1488
        %v1491 = vunpack.c.l.s4 1934713408
        %v1492 = vunpack.c.0.s8 %v1491
        %v1493 = vlaneseq
        %v1494 = vshrl.u32 %v1493, 7
        %v1495 = vsub.s32 %v1492, %v1494
        %v1496 = vrot.slane %v1489, %v1495
        %v1497 = vcombine.high %v1496, 0
        %v1500 = vpack.i.b16 %v1496, %v1471
        %v1501 = vshrl.u32 %v1471, 16
        %v1502 = vshrl.u32 %v1496, 16
        %v1503 = vpack.i.b16 %v1502, %v1501
        %v1506 = vpack.i.b16 %v1497, %v1472
        %v1507 = vshrl.u32 %v1472, 16
        %v1508 = vshrl.u32 %v1497, 16
        %v1509 = vpack.i.b16 %v1508, %v1507
        %v1511 = vsel %vm438, %v1400, 0
        %v1514 = vsel %vm1121, %v1500, 0
        %1516 = vmatprep.subr.bf16.mxu0 0
        %1517 = vmatpush1.bf16.msra.mxu0 0
        %1518 = vmatprep.subr.bf16.mxu0 0
        %1519 = vmatpush1.bf16.msra.mxu0 0
        %1520 = vmatprep.subr.bf16.mxu0 0
        %1521 = vmatpush1.bf16.msra.mxu0 0
        %1522 = vmatprep.subr.bf16.mxu0 0
        %1523 = vmatpush1.bf16.msra.mxu0 0
        %1524 = vmatprep.subr.bf16.mxu0 0
        %1525 = vmatpush1.bf16.msra.mxu0 0
        %1526 = vmatprep.subr.bf16.mxu0 0
        %1527 = vmatpush1.bf16.msra.mxu0 0
        %1528 = vmatprep.subr.bf16.mxu0 0
        %1529 = vmatpush1.bf16.msra.mxu0 0
        %1530 = vmatprep.subr.bf16.mxu0 0
        %1531 = vmatpush1.bf16.msra.mxu0 %v1514
        %1532 = vmatprep.subr.bf16.mxu0 0
        %1533 = vmatpush2.bf16.msra.mxu0 0
        %1534 = vmatprep.subr.bf16.mxu0 0
        %1535 = vmatpush2.bf16.msra.mxu0 0
        %1536 = vmatprep.subr.bf16.mxu0 0
        %1537 = vmatpush2.bf16.msra.mxu0 0
        %1538 = vmatprep.subr.bf16.mxu0 0
        %1539 = vmatpush2.bf16.msra.mxu0 0
        %1540 = vmatprep.subr.bf16.mxu0 0
        %1541 = vmatpush2.bf16.msra.mxu0 0
        %1542 = vmatprep.subr.bf16.mxu0 0
        %1543 = vmatpush2.bf16.msra.mxu0 0
        %1544 = vmatprep.subr.bf16.mxu0 0
        %1545 = vmatpush2.bf16.msra.mxu0 0
        %1546 = vmatprep.subr.bf16.mxu0 0
        %1547 = vmatpush2.bf16.msra.mxu0 0
        %1548 = vmatprep.mubr.bf16.mxu0 0
        %1549 = vmatmul.mubr.bf16.gmra.mxu0 %v1511
        %v1550 = vpop.f32.mrf.mxu0
        %v1551 = vadd.f32 0.0, %v1550
        %v1552 = vpop.f32.mrf.mxu0
        %v1553 = vpop.f32.mrf.mxu0
        %v1554 = vpop.f32.mrf.mxu0
        %1555 = vdwg.mxu0
        %v1557 = vsel %vm438, %v1401, 0
        %v1560 = vsel %vm1121, %v1503, 0
        %1562 = vmatprep.subr.bf16.mxu0 0
        %1563 = vmatpush1.bf16.msra.mxu0 0
        %1564 = vmatprep.subr.bf16.mxu0 0
        %1565 = vmatpush1.bf16.msra.mxu0 0
        %1566 = vmatprep.subr.bf16.mxu0 0
        %1567 = vmatpush1.bf16.msra.mxu0 0
        %1568 = vmatprep.subr.bf16.mxu0 0
        %1569 = vmatpush1.bf16.msra.mxu0 0
        %1570 = vmatprep.subr.bf16.mxu0 0
        %1571 = vmatpush1.bf16.msra.mxu0 0
        %1572 = vmatprep.subr.bf16.mxu0 0
        %1573 = vmatpush1.bf16.msra.mxu0 0
        %1574 = vmatprep.subr.bf16.mxu0 0
        %1575 = vmatpush1.bf16.msra.mxu0 0
        %1576 = vmatprep.subr.bf16.mxu0 0
        %1577 = vmatpush1.bf16.msra.mxu0 %v1560
        %1578 = vmatprep.subr.bf16.mxu0 0
        %1579 = vmatpush2.bf16.msra.mxu0 0
        %1580 = vmatprep.subr.bf16.mxu0 0
        %1581 = vmatpush2.bf16.msra.mxu0 0
        %1582 = vmatprep.subr.bf16.mxu0 0
        %1583 = vmatpush2.bf16.msra.mxu0 0
        %1584 = vmatprep.subr.bf16.mxu0 0
        %1585 = vmatpush2.bf16.msra.mxu0 0
        %1586 = vmatprep.subr.bf16.mxu0 0
        %1587 = vmatpush2.bf16.msra.mxu0 0
        %1588 = vmatprep.subr.bf16.mxu0 0
        %1589 = vmatpush2.bf16.msra.mxu0 0
        %1590 = vmatprep.subr.bf16.mxu0 0
        %1591 = vmatpush2.bf16.msra.mxu0 0
        %1592 = vmatprep.subr.bf16.mxu0 0
        %1593 = vmatpush2.bf16.msra.mxu0 0
        %1594 = vmatprep.mubr.bf16.mxu0 0
        %1595 = vmatmul.mubr.bf16.gmra.mxu0 %v1557
        %v1596 = vpop.f32.mrf.mxu0
        %v1597 = vadd.f32 0.0, %v1596
        %v1598 = vpop.f32.mrf.mxu0
        %v1599 = vpop.f32.mrf.mxu0
        %v1600 = vpop.f32.mrf.mxu0
        %1601 = vdwg.mxu0
        %v1603 = vsel %vm438, %v1402, 0
        %v1606 = vsel %vm1121, %v1506, 0
        %1608 = vmatprep.subr.bf16.mxu0 0
        %1609 = vmatpush1.bf16.msra.mxu0 0
        %1610 = vmatprep.subr.bf16.mxu0 0
        %1611 = vmatpush1.bf16.msra.mxu0 0
        %1612 = vmatprep.subr.bf16.mxu0 0
        %1613 = vmatpush1.bf16.msra.mxu0 0
        %1614 = vmatprep.subr.bf16.mxu0 0
        %1615 = vmatpush1.bf16.msra.mxu0 0
        %1616 = vmatprep.subr.bf16.mxu0 0
        %1617 = vmatpush1.bf16.msra.mxu0 0
        %1618 = vmatprep.subr.bf16.mxu0 0
        %1619 = vmatpush1.bf16.msra.mxu0 0
        %1620 = vmatprep.subr.bf16.mxu0 0
        %1621 = vmatpush1.bf16.msra.mxu0 0
        %1622 = vmatprep.subr.bf16.mxu0 0
        %1623 = vmatpush1.bf16.msra.mxu0 %v1606
        %1624 = vmatprep.subr.bf16.mxu0 0
        %1625 = vmatpush2.bf16.msra.mxu0 0
        %1626 = vmatprep.subr.bf16.mxu0 0
        %1627 = vmatpush2.bf16.msra.mxu0 0
        %1628 = vmatprep.subr.bf16.mxu0 0
        %1629 = vmatpush2.bf16.msra.mxu0 0
        %1630 = vmatprep.subr.bf16.mxu0 0
        %1631 = vmatpush2.bf16.msra.mxu0 0
        %1632 = vmatprep.subr.bf16.mxu0 0
        %1633 = vmatpush2.bf16.msra.mxu0 0
        %1634 = vmatprep.subr.bf16.mxu0 0
        %1635 = vmatpush2.bf16.msra.mxu0 0
        %1636 = vmatprep.subr.bf16.mxu0 0
        %1637 = vmatpush2.bf16.msra.mxu0 0
        %1638 = vmatprep.subr.bf16.mxu0 0
        %1639 = vmatpush2.bf16.msra.mxu0 0
        %1640 = vmatprep.mubr.bf16.mxu0 0
        %1641 = vmatmul.mubr.bf16.gmra.mxu0 %v1603
        %v1642 = vpop.f32.mrf.mxu0
        %v1643 = vadd.f32 0.0, %v1642
        %v1644 = vpop.f32.mrf.mxu0
        %v1645 = vpop.f32.mrf.mxu0
        %v1646 = vpop.f32.mrf.mxu0
        %1647 = vdwg.mxu0
        %v1649 = vsel %vm438, %v1403, 0
        %v1652 = vsel %vm1121, %v1509, 0
        %1654 = vmatprep.subr.bf16.mxu0 0
        %1655 = vmatpush1.bf16.msra.mxu0 0
        %1656 = vmatprep.subr.bf16.mxu0 0
        %1657 = vmatpush1.bf16.msra.mxu0 0
        %1658 = vmatprep.subr.bf16.mxu0 0
        %1659 = vmatpush1.bf16.msra.mxu0 0
        %1660 = vmatprep.subr.bf16.mxu0 0
        %1661 = vmatpush1.bf16.msra.mxu0 0
        %1662 = vmatprep.subr.bf16.mxu0 0
        %1663 = vmatpush1.bf16.msra.mxu0 0
        %1664 = vmatprep.subr.bf16.mxu0 0
        %1665 = vmatpush1.bf16.msra.mxu0 0
        %1666 = vmatprep.subr.bf16.mxu0 0
        %1667 = vmatpush1.bf16.msra.mxu0 0
        %1668 = vmatprep.subr.bf16.mxu0 0
        %1669 = vmatpush1.bf16.msra.mxu0 %v1652
        %1670 = vmatprep.subr.bf16.mxu0 0
        %1671 = vmatpush2.bf16.msra.mxu0 0
        %1672 = vmatprep.subr.bf16.mxu0 0
        %1673 = vmatpush2.bf16.msra.mxu0 0
        %1674 = vmatprep.subr.bf16.mxu0 0
        %1675 = vmatpush2.bf16.msra.mxu0 0
        %1676 = vmatprep.subr.bf16.mxu0 0
        %1677 = vmatpush2.bf16.msra.mxu0 0
        %1678 = vmatprep.subr.bf16.mxu0 0
        %1679 = vmatpush2.bf16.msra.mxu0 0
        %1680 = vmatprep.subr.bf16.mxu0 0
        %1681 = vmatpush2.bf16.msra.mxu0 0
        %1682 = vmatprep.subr.bf16.mxu0 0
        %1683 = vmatpush2.bf16.msra.mxu0 0
        %1684 = vmatprep.subr.bf16.mxu0 0
        %1685 = vmatpush2.bf16.msra.mxu0 0
        %1686 = vmatprep.mubr.bf16.mxu0 0
        %1687 = vmatmul.mubr.bf16.gmra.mxu0 %v1649
        %v1688 = vpop.f32.mrf.mxu0
        %v1689 = vadd.f32 0.0, %v1688
        %v1690 = vpop.f32.mrf.mxu0
        %v1691 = vpop.f32.mrf.mxu0
        %v1692 = vpop.f32.mrf.mxu0
        %1693 = vdwg.mxu0
        %v1694 = vadd.f32 %v1444, %v1551
        %v1695 = vadd.f32 %v1445, %v1597
        %v1696 = vadd.f32 %v1446, %v1643
        %v1697 = vadd.f32 %v1447, %v1689
        %1698 = vst.msk [vmem:[#allocation4] sm:$0xff] %vm438, %v1694
        %1699 = vst.msk [vmem:[#allocation4 + $0x8] sm:$0xff] %vm438, %v1695
        %1700 = vst.msk [vmem:[#allocation4 + $0x10] sm:$0xff] %vm438, %v1696
        %1701 = vst.msk [vmem:[#allocation4 + $0x18] sm:$0xff] %vm438, %v1697
        %1702 = vst.msk [vmem:[#allocation2] sm:$0xff] %vm429, %v1340
        %1703 = vst.msk [vmem:[#allocation2 + $0x8] sm:$0xff] %vm429, %v1341
        %1704 = vst.msk [vmem:[#allocation2 + $0x10] sm:$0xff] %vm429, %v1342
        %1705 = vst.msk [vmem:[#allocation2 + $0x18] sm:$0xff] %vm429, %v1343
      $region49: #{transformer_forward.9} parent=43 // loop_footer
        %s452 = sadd.s32 %s450, 1
      $region50: #{transformer_forward.9} parent=43 // loop_footer_branch
        %449 = sbr.rel target = $region46
      $region51: #{transformer_forward.9} parent=43 // loop_exit
        _
      %v1706 = vld [vmem:[#allocation4] sm:$0xff]
      %v1707 = vld [vmem:[#allocation4 + $0x8] sm:$0xff]
      %v1708 = vld [vmem:[#allocation4 + $0x10] sm:$0xff]
      %v1709 = vld [vmem:[#allocation4 + $0x18] sm:$0xff]
      %v1710 = vld [vmem:[#allocation3] sm:$0xff]
      %v1711 = vld [vmem:[#allocation3 + $0x8] sm:$0xff]
      %v1712 = vld [vmem:[#allocation3 + $0x10] sm:$0xff]
      %v1713 = vld [vmem:[#allocation3 + $0x18] sm:$0xff]
      %v1714 = vrcp.pop %v1710
      %v1715 = vrcp.pop %v1711
      %v1716 = vrcp.pop %v1712
      %v1717 = vrcp.pop %v1713
      %1719 = vset.pattern.permute.xlu0 0
      %1720 = vperm.xlu0 %1719, %v1714
      %v1721 = vpop.permute.xlu0 %1720
      %1724 = vset.pattern.permute.xlu0 0
      %1725 = vperm.xlu0 %1724, %v1715
      %v1726 = vpop.permute.xlu0 %1725
      %1729 = vset.pattern.permute.xlu0 0
      %1730 = vperm.xlu0 %1729, %v1716
      %v1731 = vpop.permute.xlu0 %1730
      %1734 = vset.pattern.permute.xlu0 0
      %1735 = vperm.xlu0 %1734, %v1717
      %v1736 = vpop.permute.xlu0 %1735
      %v1738 = vmul.f32 %v1706, %v1721
      %v1739 = vmul.f32 %v1707, %v1726
      %v1740 = vmul.f32 %v1708, %v1731
      %v1741 = vmul.f32 %v1709, %v1736
      %v1742 = vcombine.low %v1738, %v1740
      %v1743 = vcombine.high %v1738, %v1740
      %v1745 = vunpack.c.l.s4 1983009808
      %v1746 = vunpack.c.0.s8 %v1745
      %v1747 = vlaneseq
      %v1748 = vshrl.u32 %v1747, 7
      %v1749 = vsub.s32 %v1746, %v1748
      %v1750 = vrot.slane %v1742, %v1749
      %v1752 = vunpack.c.l.s4 1983009808
      %v1753 = vunpack.c.0.s8 %v1752
      %v1754 = vlaneseq
      %v1755 = vshrl.u32 %v1754, 7
      %v1756 = vsub.s32 %v1753, %v1755
      %v1757 = vrot.slane %v1743, %v1756
      %v1758 = vcombine.low %v1739, %v1741
      %v1759 = vcombine.high %v1739, %v1741
      %v1761 = vunpack.c.l.s4 1983009808
      %v1762 = vunpack.c.0.s8 %v1761
      %v1763 = vlaneseq
      %v1764 = vshrl.u32 %v1763, 7
      %v1765 = vsub.s32 %v1762, %v1764
      %v1766 = vrot.slane %v1758, %v1765
      %v1768 = vunpack.c.l.s4 1983009808
      %v1769 = vunpack.c.0.s8 %v1768
      %v1770 = vlaneseq
      %v1771 = vshrl.u32 %v1770, 7
      %v1772 = vsub.s32 %v1769, %v1771
      %v1773 = vrot.slane %v1759, %v1772
      %v1774 = vcombine.low %v1750, %v1766
      %v1775 = vcombine.high %v1750, %v1766
      %v1777 = vunpack.c.l.s4 1934713408
      %v1778 = vunpack.c.0.s8 %v1777
      %v1779 = vlaneseq
      %v1780 = vshrl.u32 %v1779, 7
      %v1781 = vsub.s32 %v1778, %v1780
      %v1782 = vrot.slane %v1774, %v1781
      %v1784 = vunpack.c.l.s4 1934713408
      %v1785 = vunpack.c.0.s8 %v1784
      %v1786 = vlaneseq
      %v1787 = vshrl.u32 %v1786, 7
      %v1788 = vsub.s32 %v1785, %v1787
      %v1789 = vrot.slane %v1775, %v1788
      %v1790 = vcombine.low %v1757, %v1773
      %v1791 = vcombine.high %v1757, %v1773
      %v1793 = vunpack.c.l.s4 1934713408
      %v1794 = vunpack.c.0.s8 %v1793
      %v1795 = vlaneseq
      %v1796 = vshrl.u32 %v1795, 7
      %v1797 = vsub.s32 %v1794, %v1796
      %v1798 = vrot.slane %v1790, %v1797
      %v1800 = vunpack.c.l.s4 1934713408
      %v1801 = vunpack.c.0.s8 %v1800
      %v1802 = vlaneseq
      %v1803 = vshrl.u32 %v1802, 7
      %v1804 = vsub.s32 %v1801, %v1803
      %v1805 = vrot.slane %v1791, %v1804
      %v1806 = vcombine.high %v1782, 0.0
      %v1807 = vcombine.high %v1789, 0.0
      %v1808 = vcombine.high %v1798, 0.0
      %v1809 = vcombine.high %v1805, 0.0
      %v1810 = vcombine.low %v1782, %v1789
      %v1812 = vunpack.c.l.s4 1983009808
      %v1813 = vunpack.c.0.s8 %v1812
      %v1814 = vlaneseq
      %v1815 = vshrl.u32 %v1814, 7
      %v1816 = vsub.s32 %v1813, %v1815
      %v1817 = vrot.slane %v1810, %v1816
      %v1818 = vcombine.low %v1806, %v1807
      %v1820 = vunpack.c.l.s4 1983009808
      %v1821 = vunpack.c.0.s8 %v1820
      %v1822 = vlaneseq
      %v1823 = vshrl.u32 %v1822, 7
      %v1824 = vsub.s32 %v1821, %v1823
      %v1825 = vrot.slane %v1818, %v1824
      %v1826 = vcombine.low %v1798, %v1805
      %v1828 = vunpack.c.l.s4 1983009808
      %v1829 = vunpack.c.0.s8 %v1828
      %v1830 = vlaneseq
      %v1831 = vshrl.u32 %v1830, 7
      %v1832 = vsub.s32 %v1829, %v1831
      %v1833 = vrot.slane %v1826, %v1832
      %v1834 = vcombine.low %v1808, %v1809
      %v1836 = vunpack.c.l.s4 1983009808
      %v1837 = vunpack.c.0.s8 %v1836
      %v1838 = vlaneseq
      %v1839 = vshrl.u32 %v1838, 7
      %v1840 = vsub.s32 %v1837, %v1839
      %v1841 = vrot.slane %v1834, %v1840
      %v1842 = vcombine.low %v1817, %v1825
      %v1843 = vcombine.high %v1817, %v1825
      %v1845 = vunpack.c.l.s4 1934713408
      %v1846 = vunpack.c.0.s8 %v1845
      %v1847 = vlaneseq
      %v1848 = vshrl.u32 %v1847, 7
      %v1849 = vsub.s32 %v1846, %v1848
      %v1850 = vrot.slane %v1842, %v1849
      %v1852 = vunpack.c.l.s4 1934713408
      %v1853 = vunpack.c.0.s8 %v1852
      %v1854 = vlaneseq
      %v1855 = vshrl.u32 %v1854, 7
      %v1856 = vsub.s32 %v1853, %v1855
      %v1857 = vrot.slane %v1843, %v1856
      %v1858 = vcombine.low %v1833, %v1841
      %v1859 = vcombine.high %v1833, %v1841
      %v1861 = vunpack.c.l.s4 1934713408
      %v1862 = vunpack.c.0.s8 %v1861
      %v1863 = vlaneseq
      %v1864 = vshrl.u32 %v1863, 7
      %v1865 = vsub.s32 %v1862, %v1864
      %v1866 = vrot.slane %v1858, %v1865
      %v1868 = vunpack.c.l.s4 1934713408
      %v1869 = vunpack.c.0.s8 %v1868
      %v1870 = vlaneseq
      %v1871 = vshrl.u32 %v1870, 7
      %v1872 = vsub.s32 %v1869, %v1871
      %v1873 = vrot.slane %v1859, %v1872
      %v1874 = vcombine.low %v1850, %v1866
      %v1875 = vcombine.high %v1850, %v1866
      %v1876 = vcombine.low %v1857, %v1873
      %v1877 = vcombine.high %v1857, %v1873
      %1879 = vrot.lane.b32.xlu0 %v1875, 8
      %v1880 = vpop.permute.xlu0 %1879
      %1883 = vrot.lane.b32.xlu0 %v1876, 16
      %v1884 = vpop.permute.xlu0 %1883
      %1887 = vrot.lane.b32.xlu0 %v1877, 24
      %v1888 = vpop.permute.xlu0 %1887
      %v1890 = vsel %vm438, %v1874, %v1880
      %vm1891 = vcmask 130048
      %v1892 = vsel %vm1891, %v1890, %v1884
      %vm1893 = vcmask 195584
      %v1894 = vsel %vm1893, %v1892, %v1888
      %v1895 = vpack.c.bf16 %v1894, %v1894
      %v1896 = vld [vmem:[%s4] sm:$0xf]
      %v1897 = vld [vmem:[%s4 + $0x4] sm:$0xf]
      %v1898 = vld [vmem:[%s4 + $0x8] sm:$0xf]
      %v1899 = vld [vmem:[%s4 + $0xc] sm:$0xf]
      %v1900 = vld [vmem:[%s5] sm:$0x1]
      %v1902 = vlaneseq
      %v1903 = vshrl.u32 %v1902, 7
      %v1904 = vsub.s32 0, %v1903
      %v1905 = vrot.slane %v1900, %v1904
      %v1911 = vunpack.c.l.b16 %v1896
      %v1912 = vunpack.c.l.b16 %v1897
      %v1913 = vunpack.c.l.b16 %v1898
      %v1914 = vunpack.c.l.b16 %v1899
      %v1915 = vpack.c.b16 %v1912, %v1911
      %v1916 = vpack.c.b16 %v1914, %v1913
      %vm1919 = vcmask 261120
      %v1921 = vsel %vm1919, %v1895, 0
      %1923 = vmatprep.subr.bf16.mxu0 0
      %1924 = vmatpush1.bf16.msra.mxu0 0
      %1925 = vmatprep.subr.bf16.mxu0 0
      %1926 = vmatpush1.bf16.msra.mxu0 0
      %1927 = vmatprep.subr.bf16.mxu0 0
      %1928 = vmatpush1.bf16.msra.mxu0 0
      %1929 = vmatprep.subr.bf16.mxu0 0
      %1930 = vmatpush1.bf16.msra.mxu0 0
      %1931 = vmatprep.subr.bf16.mxu0 0
      %1932 = vmatpush1.bf16.msra.mxu0 0
      %1933 = vmatprep.subr.bf16.mxu0 0
      %1934 = vmatpush1.bf16.msra.mxu0 0
      %1935 = vmatprep.subr.bf16.mxu0 0
      %1936 = vmatpush1.bf16.msra.mxu0 %v1916
      %1937 = vmatprep.subr.bf16.mxu0 0
      %1938 = vmatpush1.bf16.msra.mxu0 %v1915
      %1939 = vmatprep.subr.bf16.mxu0 0
      %1940 = vmatpush2.bf16.msra.mxu0 0
      %1941 = vmatprep.subr.bf16.mxu0 0
      %1942 = vmatpush2.bf16.msra.mxu0 0
      %1943 = vmatprep.subr.bf16.mxu0 0
      %1944 = vmatpush2.bf16.msra.mxu0 0
      %1945 = vmatprep.subr.bf16.mxu0 0
      %1946 = vmatpush2.bf16.msra.mxu0 0
      %1947 = vmatprep.subr.bf16.mxu0 0
      %1948 = vmatpush2.bf16.msra.mxu0 0
      %1949 = vmatprep.subr.bf16.mxu0 0
      %1950 = vmatpush2.bf16.msra.mxu0 0
      %1951 = vmatprep.subr.bf16.mxu0 0
      %1952 = vmatpush2.bf16.msra.mxu0 0
      %1953 = vmatprep.subr.bf16.mxu0 0
      %1954 = vmatpush2.bf16.msra.mxu0 0
      %1955 = vmatprep.mubr.bf16.mxu0 0
      %1956 = vmatmul.mubr.bf16.gmra.mxu0 %v1921
      %v1957 = vpop.f32.mrf.mxu0
      %v1958 = vadd.f32 %v1905, %v1957
      %v1959 = vpop.f32.mrf.mxu0
      %v1960 = vpop.f32.mrf.mxu0
      %v1961 = vpop.f32.mrf.mxu0
      %1962 = vdwg.mxu0
      %v1963 = vld [vmem:[%s317] sm:$0xff]
      %v1964 = vadd.f32 %v1963, %v1958
      %1965 = vst.msk [vmem:[%s339] sm:$0xff] %vm1919, %v1964
      %p1966 = scmp.lt.s32.totalorder %s21, 1
      %s1967 = scalar_select %p1966, %s21, 1
      %p1968 = scmp.lt.s32.totalorder %s22, 0
      %s1969 = scalar_select %p1968, %s22, 0
      %s1970 = sadd.s32 %s1969, %s1967
      %s1971 = smul.addr %s1970, 8
      %s1972 = scalar_lea.vmem %s6, %s1971
      // Predicated region
      $region60: #{transformer_forward.9} parent=43 // pred_check
        %p1973 = pneg %p199
      $region61: #{transformer_forward.9} parent=43 // pred_check_branch
        %1975 = sbr.rel (%p1973) target = $region63
      $region62: #{transformer_forward.9} parent=43 // pred_region
        _
      $region63: #{transformer_forward.9} parent=43 // pred_fallthru
        _
    $region44: #{transformer_forward.9} parent=5 // pred_fallthru
      _
    %p1976 = scmp.le.s32.totalorder 2, %s12
    // Predicated region
    $region64: #{transformer_forward.9} parent=5 // pred_check
      %p1977 = pneg %p1976
    $region65: #{transformer_forward.9} parent=5 // pred_check_branch
      %1979 = sbr.rel (%p1977) target = $region67
    $region66: #{transformer_forward.9} parent=5 // pred_region
      %s1980 = ssub.s32 %s12, 2
      // Predicated region
      $region68: #{transformer_forward.9} parent=66 // pred_check
        %p1981 = pneg %p205
      $region69: #{transformer_forward.9} parent=66 // pred_check_branch
        %1983 = sbr.rel (%p1981) target = $region71
      $region70: #{transformer_forward.9} parent=66 // pred_region
        %p1984 = scmp.lt.s32.totalorder %s23, 1
        %s1985 = scalar_select %p1984, %s23, 1
        %p1986 = scmp.lt.s32.totalorder %s24, 0
        %s1987 = scalar_select %p1986, %s24, 0
        %s1988 = sadd.s32 %s1987, %s1985
        %s1989 = smul.addr %s1988, 8
        %s1990 = scalar_lea.vmem %s6, %s1989
      $region71: #{transformer_forward.9} parent=66 // pred_fallthru
        _
    $region67: #{transformer_forward.9} parent=5 // pred_fallthru
      _
  $region6: #{transformer_forward.9} parent=0 // loop_footer
    %s16 = sadd.s32 1, %s12
  $region7: #{transformer_forward.9} parent=0 // loop_footer_branch
    %11 = sbr.rel target = $region3
  $region8: #{transformer_forward.9} parent=0 // loop_exit
    _

</llo_original>
